<compile_context>
chip_gen: v7x
topology: tpu7x:2x2x1
jax: 0.10.0
libtpu: 0.0.40
codegen_flags: <defaults>
</compile_context>

<pallas_src>
import numpy as np
import jax
import jax.numpy as jnp
from jax.experimental import pallas as pl
from jax.experimental.pallas import tpu as pltpu

HIDDEN = 512


def _silu_f32(x):
    # SiLU(x) = x * sigmoid(x) = x / (1 + exp(-x)).
    # exp and the approximate reciprocal both route to the EUP slot (which has
    # slack), instead of a VPU divide sequence.  Inputs/outputs are f32.
    return x * pl.reciprocal(1.0 + jnp.exp(-x), approx=True)


def _critic_kernel(s_ref, a_ref,
                   w1_ref, b1_ref, w2_ref, b2_ref,
                   w3_ref, b3_ref,
                   w4a_ref, w4s_ref, b4_ref,
                   w5_ref, b5_ref,
                   o_ref):
    f32 = jnp.float32
    bf16 = jnp.bfloat16

    s = s_ref[...].astype(bf16)            # (TB, S)
    a = a_ref[...].astype(bf16)            # (TB, A)

    # base_state: Linear -> SiLU -> Linear -> SiLU   (bf16 operands, f32 accum)
    h = jnp.dot(s, w1_ref[...], preferred_element_type=f32) + b1_ref[...]
    h = _silu_f32(h)
    xs = jnp.dot(h.astype(bf16), w2_ref[...], preferred_element_type=f32) + b2_ref[...]
    xs = _silu_f32(xs)

    # base_act: Linear -> SiLU
    xa = jnp.dot(a, w3_ref[...], preferred_element_type=f32) + b3_ref[...]
    xa = _silu_f32(xa)

    # net[0..1]: SiLU(Linear(cat([xa, xs], dim=1))); concat folded into split w4.
    h2 = (jnp.dot(xa.astype(bf16), w4a_ref[...], preferred_element_type=f32)
          + jnp.dot(xs.astype(bf16), w4s_ref[...], preferred_element_type=f32)
          + b4_ref[...])
    h2 = _silu_f32(h2)

    # net[2]: Linear(512 -> 1) as a VPU multiply + XLU row-reduction.
    # w5 is laid out (1, H) f32; avoids a (512, 1) MXU push / padded VMEM tile.
    q = jnp.sum(h2 * w5_ref[...], axis=-1, keepdims=True) + b5_ref[...]
    o_ref[...] = q.astype(o_ref.dtype)     # (TB, 1)


def _round_up(x, m):
    return (x + m - 1) // m * m


def _choose_tb(batch, block_b):
    """Batch tile: multiple of 8 sublanes, up to block_b (default 256, fills the
    v6e/v7x MXU).  If the whole batch would be a single 256-multiple tile, split
    it into two 128-multiples so ("parallel",) can shard over v7x's 2 TCs."""
    assert block_b % 8 == 0, "block_b must be a multiple of 8"
    if batch <= block_b:
        tb = _round_up(batch, 8)
        if tb >= 256 and tb % 256 == 0:
            tb //= 2
        return tb
    return block_b


def _build_call(TB, B_pad, S, A, out_dtype, single_buffer_weights):
    const = lambda i: (0, 0)       # weights/biases: resident across grid steps
    batch = lambda i: (i, 0)       # batch-blocked arrays
    H = HIDDEN

    if single_buffer_weights:
        # Constant-index blocks never change; one VMEM buffer is enough.
        wspec = lambda shp: pl.BlockSpec(shp, const, pipeline_mode=pl.Buffered(1))
    else:
        wspec = lambda shp: pl.BlockSpec(shp, const)

    return pl.pallas_call(
        _critic_kernel,
        out_shape=jax.ShapeDtypeStruct((B_pad, 1), out_dtype),
        grid_spec=pltpu.PrefetchScalarGridSpec(
            num_scalar_prefetch=0,
            grid=(B_pad // TB,),
            in_specs=[
                pl.BlockSpec((TB, S), batch),   # s block
                pl.BlockSpec((TB, A), batch),   # a block
                wspec((S, H)),                  # w1  (bf16)
                wspec((1, H)),                  # b1  (f32)
                wspec((H, H)),                  # w2  (bf16)
                wspec((1, H)),                  # b2
                wspec((A, H)),                  # w3  (bf16)
                wspec((1, H)),                  # b3
                wspec((H, H)),                  # w4a (bf16, acts half)
                wspec((H, H)),                  # w4s (bf16, state half)
                wspec((1, H)),                  # b4
                wspec((1, H)),                  # w5  (f32, row layout)
                wspec((1, 1)),                  # b5
            ],
            out_specs=pl.BlockSpec((TB, 1), batch),
        ),
        compiler_params=pltpu.CompilerParams(
            dimension_semantics=("parallel",),   # shard batch blocks over v7x's 2 TCs
        ),
    )


def critic_forward(s, a, params, *, block_b=256):
    """s: [B, state_size], a: [B, action_size] -> q: [B, 1]."""
    B, S = s.shape
    Ba, A = a.shape
    assert Ba == B
    H = HIDDEN
    f32, bf16 = jnp.float32, jnp.bfloat16

    # Big weights in bf16 (halve the dominant weight DMA, bf16-native MXU);
    # biases and the tiny head stay f32 (SiLU / accumulation stay f32 in-kernel).
    w1 = params["w1"].astype(bf16); b1 = params["b1"].astype(f32)
    w2 = params["w2"].astype(bf16); b2 = params["b2"].astype(f32)
    w3 = params["w3"].astype(bf16); b3 = params["b3"].astype(f32)
    b4 = params["b4"].astype(f32)
    # cat([xa, xs], dim=1) @ w4  ==  xa @ w4[:H] + xs @ w4[H:]
    w4a = params["w4"][:H, :].astype(bf16)
    w4s = params["w4"][H:, :].astype(bf16)
    w5 = params["w5"].astype(f32).reshape(1, H)    # (H,1) column -> (1,H) row
    b5 = params["b5"].astype(f32).reshape(1, 1)

    TB = _choose_tb(B, block_b)
    B_pad = _round_up(B, TB)
    if B_pad != B:
        s = jnp.pad(s, ((0, B_pad - B), (0, 0)))
        a = jnp.pad(a, ((0, B_pad - B), (0, 0)))

    args = (s, a, w1, b1, w2, b2, w3, b3, w4a, w4s, b4, w5, b5)
    try:
        out = _build_call(TB, B_pad, S, A, s.dtype, single_buffer_weights=True)(*args)
    except Exception:
        # pl.Buffered(1) not supported by this build -> default double-buffered specs
        # (previously validated configuration).
        out = _build_call(TB, B_pad, S, A, s.dtype, single_buffer_weights=False)(*args)
    return out[:B]


def init_params(key, state_size, action_size, hidden=HIDDEN):
    ks = jax.random.split(key, 10)

    def lin(kw, kb, fan_in, fan_out):
        scale = np.float32(1.0 / np.sqrt(fan_in))
        w = jax.random.normal(kw, (fan_in, fan_out), jnp.float32) * scale
        b = 0.1 * jax.random.normal(kb, (1, fan_out), jnp.float32)
        return w, b

    w1, b1 = lin(ks[0], ks[1], state_size, hidden)
    w2, b2 = lin(ks[2], ks[3], hidden, hidden)
    w3, b3 = lin(ks[4], ks[5], action_size, hidden)
    w4, b4 = lin(ks[6], ks[7], 2 * hidden, hidden)
    w5, b5 = lin(ks[8], ks[9], hidden, 1)
    return dict(w1=w1, b1=b1, w2=w2, b2=b2, w3=w3, b3=b3,
                w4=w4, b4=b4, w5=w5, b5=b5)


def _reference(s, a, params):
    """Full-f32 reference with exact SiLU (PyTorch module semantics)."""
    silu = lambda x: x / (1.0 + jnp.exp(-x))
    xs = silu(s @ params["w1"] + params["b1"])
    xs = silu(xs @ params["w2"] + params["b2"])
    xa = silu(a @ params["w3"] + params["b3"])
    x = jnp.concatenate([xa, xs], axis=1)
    h = silu(x @ params["w4"] + params["b4"])
    return h @ params["w5"] + params["b5"]


if __name__ == "__main__":
    B, STATE, ACTION = 4, 24, 6   # small batch / state / action sizes

    key = jax.random.PRNGKey(0)
    kp, ks, ka = jax.random.split(key, 3)
    params = init_params(kp, STATE, ACTION)
    s = jax.random.normal(ks, (B, STATE), dtype=jnp.float32)
    a = jax.random.normal(ka, (B, ACTION), dtype=jnp.float32)

    out = jax.block_until_ready(critic_forward(s, a, params))
    assert out.shape == (B, 1)

    ref = _reference(s, a, params)
    # bf16 weights + approx-reciprocal SiLU vs. f32 reference: a couple of e-3
    # absolute error expected; 2e-2 tolerance gives ample margin.
    np.testing.assert_allclose(np.asarray(out), np.asarray(ref),
                               rtol=2e-2, atol=2e-2)
    print("KERNEL_OK")
</pallas_src>

<mosaic_0001>
module attributes {stable_mosaic.version = 11 : i64} {
  func.func @_critic_kernel(%arg0: i32, %arg1: memref<8x24xf32, #tpu.memory_space<vmem>>, %arg2: memref<8x6xf32, #tpu.memory_space<vmem>>, %arg3: memref<24x512xbf16, #tpu.memory_space<vmem>>, %arg4: memref<1x512xf32, #tpu.memory_space<vmem>>, %arg5: memref<512x512xbf16, #tpu.memory_space<vmem>>, %arg6: memref<1x512xf32, #tpu.memory_space<vmem>>, %arg7: memref<6x512xbf16, #tpu.memory_space<vmem>>, %arg8: memref<1x512xf32, #tpu.memory_space<vmem>>, %arg9: memref<512x512xbf16, #tpu.memory_space<vmem>>, %arg10: memref<512x512xbf16, #tpu.memory_space<vmem>>, %arg11: memref<1x512xf32, #tpu.memory_space<vmem>>, %arg12: memref<1x512xf32, #tpu.memory_space<vmem>>, %arg13: memref<1x1xf32, #tpu.memory_space<vmem>>, %arg14: memref<8x1xf32, #tpu.memory_space<vmem>>) attributes {dimension_semantics = [#tpu.dimension_semantics<parallel>], iteration_bounds = array<i64: 1>, scalar_prefetch = 0 : i64, scratch_operands = 0 : i64, tpu.core_type = #tpu.core_type<tc>, window_params = [{transform_indices = @transform_0, window_bounds = array<i64: 8, 24>}, {transform_indices = @transform_1, window_bounds = array<i64: 8, 6>}, {pipeline_mode = #tpu.pipeline_mode<synchronous>, transform_indices = @transform_2, window_bounds = array<i64: 24, 512>}, {pipeline_mode = #tpu.pipeline_mode<synchronous>, transform_indices = @transform_3, window_bounds = array<i64: 1, 512>}, {pipeline_mode = #tpu.pipeline_mode<synchronous>, transform_indices = @transform_4, window_bounds = array<i64: 512, 512>}, {pipeline_mode = #tpu.pipeline_mode<synchronous>, transform_indices = @transform_5, window_bounds = array<i64: 1, 512>}, {pipeline_mode = #tpu.pipeline_mode<synchronous>, transform_indices = @transform_6, window_bounds = array<i64: 6, 512>}, {pipeline_mode = #tpu.pipeline_mode<synchronous>, transform_indices = @transform_7, window_bounds = array<i64: 1, 512>}, {pipeline_mode = #tpu.pipeline_mode<synchronous>, transform_indices = @transform_8, window_bounds = array<i64: 512, 512>}, {pipeline_mode = #tpu.pipeline_mode<synchronous>, transform_indices = @transform_9, window_bounds = array<i64: 512, 512>}, {pipeline_mode = #tpu.pipeline_mode<synchronous>, transform_indices = @transform_10, window_bounds = array<i64: 1, 512>}, {pipeline_mode = #tpu.pipeline_mode<synchronous>, transform_indices = @transform_11, window_bounds = array<i64: 1, 512>}, {pipeline_mode = #tpu.pipeline_mode<synchronous>, transform_indices = @transform_12, window_bounds = array<i64: 1, 1>}, {transform_indices = @transform_13, window_bounds = array<i64: 8, 1>}]} {
    %c0 = arith.constant 0 : index
    %c0_0 = arith.constant 0 : index
    %0 = vector.load %arg1[%c0, %c0_0] : memref<8x24xf32, #tpu.memory_space<vmem>>, vector<8x24xf32>
    %1 = arith.truncf %0 : vector<8x24xf32> to vector<8x24xbf16>
    %c0_1 = arith.constant 0 : index
    %c0_2 = arith.constant 0 : index
    %2 = vector.load %arg2[%c0_1, %c0_2] : memref<8x6xf32, #tpu.memory_space<vmem>>, vector<8x6xf32>
    %3 = arith.truncf %2 : vector<8x6xf32> to vector<8x6xbf16>
    %c0_3 = arith.constant 0 : index
    %c0_4 = arith.constant 0 : index
    %4 = vector.load %arg3[%c0_3, %c0_4] : memref<24x512xbf16, #tpu.memory_space<vmem>>, vector<24x512xbf16>
    %cst = arith.constant dense<0.000000e+00> : vector<8x512xf32>
    %5 = tpu.matmul %1, %4, %cst {dimension_numbers = #tpu.dot_dimension_numbers<[1], [0], [0], [1], [0, 0, 1, 1], [], []>} : vector<8x24xbf16>, vector<24x512xbf16>, vector<8x512xf32> -> vector<8x512xf32>
    %c0_5 = arith.constant 0 : index
    %c0_6 = arith.constant 0 : index
    %6 = vector.load %arg4[%c0_5, %c0_6] : memref<1x512xf32, #tpu.memory_space<vmem>>, vector<1x512xf32>
    %7 = vector.broadcast %6 : vector<1x512xf32> to vector<8x512xf32>
    %8 = arith.addf %5, %7 : vector<8x512xf32>
    %cst_7 = arith.constant 0.000000e+00 : f32
    %9 = vector.broadcast %cst_7 : f32 to vector<8x512xf32>
    %10 = arith.subf %9, %8 : vector<8x512xf32>
    %11 = math.exp %10 : vector<8x512xf32>
    %cst_8 = arith.constant 1.000000e+00 : f32
    %12 = vector.broadcast %cst_8 : f32 to vector<8x512xf32>
    %13 = arith.addf %12, %11 : vector<8x512xf32>
    %14 = tpu.reciprocal %13 {approx = true} : vector<8x512xf32> -> vector<8x512xf32>
    %15 = arith.mulf %8, %14 : vector<8x512xf32>
    %16 = arith.truncf %15 : vector<8x512xf32> to vector<8x512xbf16>
    %c0_9 = arith.constant 0 : index
    %c0_10 = arith.constant 0 : index
    %17 = vector.load %arg5[%c0_9, %c0_10] : memref<512x512xbf16, #tpu.memory_space<vmem>>, vector<512x512xbf16>
    %cst_11 = arith.constant dense<0.000000e+00> : vector<8x512xf32>
    %18 = tpu.matmul %16, %17, %cst_11 {dimension_numbers = #tpu.dot_dimension_numbers<[1], [0], [0], [1], [0, 0, 1, 1], [], []>} : vector<8x512xbf16>, vector<512x512xbf16>, vector<8x512xf32> -> vector<8x512xf32>
    %c0_12 = arith.constant 0 : index
    %c0_13 = arith.constant 0 : index
    %19 = vector.load %arg6[%c0_12, %c0_13] : memref<1x512xf32, #tpu.memory_space<vmem>>, vector<1x512xf32>
    %20 = vector.broadcast %19 : vector<1x512xf32> to vector<8x512xf32>
    %21 = arith.addf %18, %20 : vector<8x512xf32>
    %cst_14 = arith.constant 0.000000e+00 : f32
    %22 = vector.broadcast %cst_14 : f32 to vector<8x512xf32>
    %23 = arith.subf %22, %21 : vector<8x512xf32>
    %24 = math.exp %23 : vector<8x512xf32>
    %cst_15 = arith.constant 1.000000e+00 : f32
    %25 = vector.broadcast %cst_15 : f32 to vector<8x512xf32>
    %26 = arith.addf %25, %24 : vector<8x512xf32>
    %27 = tpu.reciprocal %26 {approx = true} : vector<8x512xf32> -> vector<8x512xf32>
    %28 = arith.mulf %21, %27 : vector<8x512xf32>
    %c0_16 = arith.constant 0 : index
    %c0_17 = arith.constant 0 : index
    %29 = vector.load %arg7[%c0_16, %c0_17] : memref<6x512xbf16, #tpu.memory_space<vmem>>, vector<6x512xbf16>
    %cst_18 = arith.constant dense<0.000000e+00> : vector<8x512xf32>
    %30 = tpu.matmul %3, %29, %cst_18 {dimension_numbers = #tpu.dot_dimension_numbers<[1], [0], [0], [1], [0, 0, 1, 1], [], []>} : vector<8x6xbf16>, vector<6x512xbf16>, vector<8x512xf32> -> vector<8x512xf32>
    %c0_19 = arith.constant 0 : index
    %c0_20 = arith.constant 0 : index
    %31 = vector.load %arg8[%c0_19, %c0_20] : memref<1x512xf32, #tpu.memory_space<vmem>>, vector<1x512xf32>
    %32 = vector.broadcast %31 : vector<1x512xf32> to vector<8x512xf32>
    %33 = arith.addf %30, %32 : vector<8x512xf32>
    %cst_21 = arith.constant 0.000000e+00 : f32
    %34 = vector.broadcast %cst_21 : f32 to vector<8x512xf32>
    %35 = arith.subf %34, %33 : vector<8x512xf32>
    %36 = math.exp %35 : vector<8x512xf32>
    %cst_22 = arith.constant 1.000000e+00 : f32
    %37 = vector.broadcast %cst_22 : f32 to vector<8x512xf32>
    %38 = arith.addf %37, %36 : vector<8x512xf32>
    %39 = tpu.reciprocal %38 {approx = true} : vector<8x512xf32> -> vector<8x512xf32>
    %40 = arith.mulf %33, %39 : vector<8x512xf32>
    %41 = arith.truncf %40 : vector<8x512xf32> to vector<8x512xbf16>
    %c0_23 = arith.constant 0 : index
    %c0_24 = arith.constant 0 : index
    %42 = vector.load %arg9[%c0_23, %c0_24] : memref<512x512xbf16, #tpu.memory_space<vmem>>, vector<512x512xbf16>
    %cst_25 = arith.constant dense<0.000000e+00> : vector<8x512xf32>
    %43 = tpu.matmul %41, %42, %cst_25 {dimension_numbers = #tpu.dot_dimension_numbers<[1], [0], [0], [1], [0, 0, 1, 1], [], []>} : vector<8x512xbf16>, vector<512x512xbf16>, vector<8x512xf32> -> vector<8x512xf32>
    %44 = arith.truncf %28 : vector<8x512xf32> to vector<8x512xbf16>
    %c0_26 = arith.constant 0 : index
    %c0_27 = arith.constant 0 : index
    %45 = vector.load %arg10[%c0_26, %c0_27] : memref<512x512xbf16, #tpu.memory_space<vmem>>, vector<512x512xbf16>
    %cst_28 = arith.constant dense<0.000000e+00> : vector<8x512xf32>
    %46 = tpu.matmul %44, %45, %cst_28 {dimension_numbers = #tpu.dot_dimension_numbers<[1], [0], [0], [1], [0, 0, 1, 1], [], []>} : vector<8x512xbf16>, vector<512x512xbf16>, vector<8x512xf32> -> vector<8x512xf32>
    %47 = arith.addf %43, %46 : vector<8x512xf32>
    %c0_29 = arith.constant 0 : index
    %c0_30 = arith.constant 0 : index
    %48 = vector.load %arg11[%c0_29, %c0_30] : memref<1x512xf32, #tpu.memory_space<vmem>>, vector<1x512xf32>
    %49 = vector.broadcast %48 : vector<1x512xf32> to vector<8x512xf32>
    %50 = arith.addf %47, %49 : vector<8x512xf32>
    %cst_31 = arith.constant 0.000000e+00 : f32
    %51 = vector.broadcast %cst_31 : f32 to vector<8x512xf32>
    %52 = arith.subf %51, %50 : vector<8x512xf32>
    %53 = math.exp %52 : vector<8x512xf32>
    %cst_32 = arith.constant 1.000000e+00 : f32
    %54 = vector.broadcast %cst_32 : f32 to vector<8x512xf32>
    %55 = arith.addf %54, %53 : vector<8x512xf32>
    %56 = tpu.reciprocal %55 {approx = true} : vector<8x512xf32> -> vector<8x512xf32>
    %57 = arith.mulf %50, %56 : vector<8x512xf32>
    %c0_33 = arith.constant 0 : index
    %c0_34 = arith.constant 0 : index
    %58 = vector.load %arg12[%c0_33, %c0_34] : memref<1x512xf32, #tpu.memory_space<vmem>>, vector<1x512xf32>
    %59 = vector.broadcast %58 : vector<1x512xf32> to vector<8x512xf32>
    %60 = arith.mulf %57, %59 : vector<8x512xf32>
    %cst_35 = arith.constant dense<0.000000e+00> : vector<8xf32>
    %61 = vector.multi_reduction <add>, %60, %cst_35 [1] : vector<8x512xf32> to vector<8xf32>
    %62 = vector.shape_cast %61 : vector<8xf32> to vector<8x1xf32>
    %c0_36 = arith.constant 0 : index
    %c0_37 = arith.constant 0 : index
    %63 = vector.load %arg13[%c0_36, %c0_37] : memref<1x1xf32, #tpu.memory_space<vmem>>, vector<1x1xf32>
    %64 = vector.broadcast %63 : vector<1x1xf32> to vector<8x1xf32>
    %65 = arith.addf %62, %64 : vector<8x1xf32>
    %c0_38 = arith.constant 0 : index
    %c0_39 = arith.constant 0 : index
    %66 = vector.load %arg14[%c0_38, %c0_39] : memref<8x1xf32, #tpu.memory_space<vmem>>, vector<8x1xf32>
    tpu.vector_store %arg14[%c0_38, %c0_39], %65 {strides = array<i32>} : memref<8x1xf32, #tpu.memory_space<vmem>>, vector<8x1xf32>,
    return
  }
  func.func @transform_0(%arg0: i32) -> (i32, i32) {
    %c0_i32 = arith.constant 0 : i32
    %c0_i32_0 = arith.constant 0 : i32
    return %arg0, %c0_i32 : i32, i32
  }
  func.func @transform_1(%arg0: i32) -> (i32, i32) {
    %c0_i32 = arith.constant 0 : i32
    %c0_i32_0 = arith.constant 0 : i32
    return %arg0, %c0_i32 : i32, i32
  }
  func.func @transform_2(%arg0: i32) -> (i32, i32) {
    %c0_i32 = arith.constant 0 : i32
    %c0_i32_0 = arith.constant 0 : i32
    %c0_i32_1 = arith.constant 0 : i32
    return %c0_i32, %c0_i32_0 : i32, i32
  }
  func.func @transform_3(%arg0: i32) -> (i32, i32) {
    %c0_i32 = arith.constant 0 : i32
    %c0_i32_0 = arith.constant 0 : i32
    %c0_i32_1 = arith.constant 0 : i32
    return %c0_i32, %c0_i32_0 : i32, i32
  }
  func.func @transform_4(%arg0: i32) -> (i32, i32) {
    %c0_i32 = arith.constant 0 : i32
    %c0_i32_0 = arith.constant 0 : i32
    %c0_i32_1 = arith.constant 0 : i32
    return %c0_i32, %c0_i32_0 : i32, i32
  }
  func.func @transform_5(%arg0: i32) -> (i32, i32) {
    %c0_i32 = arith.constant 0 : i32
    %c0_i32_0 = arith.constant 0 : i32
    %c0_i32_1 = arith.constant 0 : i32
    return %c0_i32, %c0_i32_0 : i32, i32
  }
  func.func @transform_6(%arg0: i32) -> (i32, i32) {
    %c0_i32 = arith.constant 0 : i32
    %c0_i32_0 = arith.constant 0 : i32
    %c0_i32_1 = arith.constant 0 : i32
    return %c0_i32, %c0_i32_0 : i32, i32
  }
  func.func @transform_7(%arg0: i32) -> (i32, i32) {
    %c0_i32 = arith.constant 0 : i32
    %c0_i32_0 = arith.constant 0 : i32
    %c0_i32_1 = arith.constant 0 : i32
    return %c0_i32, %c0_i32_0 : i32, i32
  }
  func.func @transform_8(%arg0: i32) -> (i32, i32) {
    %c0_i32 = arith.constant 0 : i32
    %c0_i32_0 = arith.constant 0 : i32
    %c0_i32_1 = arith.constant 0 : i32
    return %c0_i32, %c0_i32_0 : i32, i32
  }
  func.func @transform_9(%arg0: i32) -> (i32, i32) {
    %c0_i32 = arith.constant 0 : i32
    %c0_i32_0 = arith.constant 0 : i32
    %c0_i32_1 = arith.constant 0 : i32
    return %c0_i32, %c0_i32_0 : i32, i32
  }
  func.func @transform_10(%arg0: i32) -> (i32, i32) {
    %c0_i32 = arith.constant 0 : i32
    %c0_i32_0 = arith.constant 0 : i32
    %c0_i32_1 = arith.constant 0 : i32
    return %c0_i32, %c0_i32_0 : i32, i32
  }
  func.func @transform_11(%arg0: i32) -> (i32, i32) {
    %c0_i32 = arith.constant 0 : i32
    %c0_i32_0 = arith.constant 0 : i32
    %c0_i32_1 = arith.constant 0 : i32
    return %c0_i32, %c0_i32_0 : i32, i32
  }
  func.func @transform_12(%arg0: i32) -> (i32, i32) {
    %c0_i32 = arith.constant 0 : i32
    %c0_i32_0 = arith.constant 0 : i32
    %c0_i32_1 = arith.constant 0 : i32
    return %c0_i32, %c0_i32_0 : i32, i32
  }
  func.func @transform_13(%arg0: i32) -> (i32, i32) {
    %c0_i32 = arith.constant 0 : i32
    %c0_i32_0 = arith.constant 0 : i32
    return %arg0, %c0_i32 : i32, i32
  }
}

module attributes {stable_mosaic.version = 11 : i64} {
  func.func @_critic_kernel(%arg0: i32, %arg1: memref<8x24xf32, #tpu.memory_space<vmem>>, %arg2: memref<8x6xf32, #tpu.memory_space<vmem>>, %arg3: memref<24x512xbf16, #tpu.memory_space<vmem>>, %arg4: memref<1x512xf32, #tpu.memory_space<vmem>>, %arg5: memref<512x512xbf16, #tpu.memory_space<vmem>>, %arg6: memref<1x512xf32, #tpu.memory_space<vmem>>, %arg7: memref<6x512xbf16, #tpu.memory_space<vmem>>, %arg8: memref<1x512xf32, #tpu.memory_space<vmem>>, %arg9: memref<512x512xbf16, #tpu.memory_space<vmem>>, %arg10: memref<512x512xbf16, #tpu.memory_space<vmem>>, %arg11: memref<1x512xf32, #tpu.memory_space<vmem>>, %arg12: memref<1x512xf32, #tpu.memory_space<vmem>>, %arg13: memref<1x1xf32, #tpu.memory_space<vmem>>, %arg14: memref<8x1xf32, #tpu.memory_space<vmem>>) attributes {dimension_semantics = [#tpu.dimension_semantics<parallel>], iteration_bounds = array<i64: 1>, scalar_prefetch = 0 : i64, scratch_operands = 0 : i64, tpu.core_type = #tpu.core_type<tc>, window_params = [{transform_indices = @transform_0, window_bounds = array<i64: 8, 24>}, {transform_indices = @transform_1, window_bounds = array<i64: 8, 6>}, {pipeline_mode = #tpu.pipeline_mode<synchronous>, transform_indices = @transform_2, window_bounds = array<i64: 24, 512>}, {pipeline_mode = #tpu.pipeline_mode<synchronous>, transform_indices = @transform_3, window_bounds = array<i64: 1, 512>}, {pipeline_mode = #tpu.pipeline_mode<synchronous>, transform_indices = @transform_4, window_bounds = array<i64: 512, 512>}, {pipeline_mode = #tpu.pipeline_mode<synchronous>, transform_indices = @transform_5, window_bounds = array<i64: 1, 512>}, {pipeline_mode = #tpu.pipeline_mode<synchronous>, transform_indices = @transform_6, window_bounds = array<i64: 6, 512>}, {pipeline_mode = #tpu.pipeline_mode<synchronous>, transform_indices = @transform_7, window_bounds = array<i64: 1, 512>}, {pipeline_mode = #tpu.pipeline_mode<synchronous>, transform_indices = @transform_8, window_bounds = array<i64: 512, 512>}, {pipeline_mode = #tpu.pipeline_mode<synchronous>, transform_indices = @transform_9, window_bounds = array<i64: 512, 512>}, {pipeline_mode = #tpu.pipeline_mode<synchronous>, transform_indices = @transform_10, window_bounds = array<i64: 1, 512>}, {pipeline_mode = #tpu.pipeline_mode<synchronous>, transform_indices = @transform_11, window_bounds = array<i64: 1, 512>}, {pipeline_mode = #tpu.pipeline_mode<synchronous>, transform_indices = @transform_12, window_bounds = array<i64: 1, 1>}, {transform_indices = @transform_13, window_bounds = array<i64: 8, 1>}]} {
    %c0 = arith.constant 0 : index
    %c0_0 = arith.constant 0 : index
    %0 = vector.load %arg1[%c0, %c0_0] : memref<8x24xf32, #tpu.memory_space<vmem>>, vector<8x24xf32>
    %1 = arith.truncf %0 : vector<8x24xf32> to vector<8x24xbf16>
    %c0_1 = arith.constant 0 : index
    %c0_2 = arith.constant 0 : index
    %2 = vector.load %arg2[%c0_1, %c0_2] : memref<8x6xf32, #tpu.memory_space<vmem>>, vector<8x6xf32>
    %3 = arith.truncf %2 : vector<8x6xf32> to vector<8x6xbf16>
    %c0_3 = arith.constant 0 : index
    %c0_4 = arith.constant 0 : index
    %4 = vector.load %arg3[%c0_3, %c0_4] : memref<24x512xbf16, #tpu.memory_space<vmem>>, vector<24x512xbf16>
    %cst = arith.constant dense<0.000000e+00> : vector<8x512xf32>
    %5 = tpu.matmul %1, %4, %cst {dimension_numbers = #tpu.dot_dimension_numbers<[1], [0], [0], [1], [0, 0, 1, 1], [], []>} : vector<8x24xbf16>, vector<24x512xbf16>, vector<8x512xf32> -> vector<8x512xf32>
    %c0_5 = arith.constant 0 : index
    %c0_6 = arith.constant 0 : index
    %6 = vector.load %arg4[%c0_5, %c0_6] : memref<1x512xf32, #tpu.memory_space<vmem>>, vector<1x512xf32>
    %7 = vector.broadcast %6 : vector<1x512xf32> to vector<8x512xf32>
    %8 = arith.addf %5, %7 : vector<8x512xf32>
    %cst_7 = arith.constant 0.000000e+00 : f32
    %9 = vector.broadcast %cst_7 : f32 to vector<8x512xf32>
    %10 = arith.subf %9, %8 : vector<8x512xf32>
    %11 = math.exp %10 : vector<8x512xf32>
    %cst_8 = arith.constant 1.000000e+00 : f32
    %12 = vector.broadcast %cst_8 : f32 to vector<8x512xf32>
    %13 = arith.addf %12, %11 : vector<8x512xf32>
    %14 = tpu.reciprocal %13 {approx = true} : vector<8x512xf32> -> vector<8x512xf32>
    %15 = arith.mulf %8, %14 : vector<8x512xf32>
    %16 = arith.truncf %15 : vector<8x512xf32> to vector<8x512xbf16>
    %c0_9 = arith.constant 0 : index
    %c0_10 = arith.constant 0 : index
    %17 = vector.load %arg5[%c0_9, %c0_10] : memref<512x512xbf16, #tpu.memory_space<vmem>>, vector<512x512xbf16>
    %cst_11 = arith.constant dense<0.000000e+00> : vector<8x512xf32>
    %18 = tpu.matmul %16, %17, %cst_11 {dimension_numbers = #tpu.dot_dimension_numbers<[1], [0], [0], [1], [0, 0, 1, 1], [], []>} : vector<8x512xbf16>, vector<512x512xbf16>, vector<8x512xf32> -> vector<8x512xf32>
    %c0_12 = arith.constant 0 : index
    %c0_13 = arith.constant 0 : index
    %19 = vector.load %arg6[%c0_12, %c0_13] : memref<1x512xf32, #tpu.memory_space<vmem>>, vector<1x512xf32>
    %20 = vector.broadcast %19 : vector<1x512xf32> to vector<8x512xf32>
    %21 = arith.addf %18, %20 : vector<8x512xf32>
    %cst_14 = arith.constant 0.000000e+00 : f32
    %22 = vector.broadcast %cst_14 : f32 to vector<8x512xf32>
    %23 = arith.subf %22, %21 : vector<8x512xf32>
    %24 = math.exp %23 : vector<8x512xf32>
    %cst_15 = arith.constant 1.000000e+00 : f32
    %25 = vector.broadcast %cst_15 : f32 to vector<8x512xf32>
    %26 = arith.addf %25, %24 : vector<8x512xf32>
    %27 = tpu.reciprocal %26 {approx = true} : vector<8x512xf32> -> vector<8x512xf32>
    %28 = arith.mulf %21, %27 : vector<8x512xf32>
    %c0_16 = arith.constant 0 : index
    %c0_17 = arith.constant 0 : index
    %29 = vector.load %arg7[%c0_16, %c0_17] : memref<6x512xbf16, #tpu.memory_space<vmem>>, vector<6x512xbf16>
    %cst_18 = arith.constant dense<0.000000e+00> : vector<8x512xf32>
    %30 = tpu.matmul %3, %29, %cst_18 {dimension_numbers = #tpu.dot_dimension_numbers<[1], [0], [0], [1], [0, 0, 1, 1], [], []>} : vector<8x6xbf16>, vector<6x512xbf16>, vector<8x512xf32> -> vector<8x512xf32>
    %c0_19 = arith.constant 0 : index
    %c0_20 = arith.constant 0 : index
    %31 = vector.load %arg8[%c0_19, %c0_20] : memref<1x512xf32, #tpu.memory_space<vmem>>, vector<1x512xf32>
    %32 = vector.broadcast %31 : vector<1x512xf32> to vector<8x512xf32>
    %33 = arith.addf %30, %32 : vector<8x512xf32>
    %cst_21 = arith.constant 0.000000e+00 : f32
    %34 = vector.broadcast %cst_21 : f32 to vector<8x512xf32>
    %35 = arith.subf %34, %33 : vector<8x512xf32>
    %36 = math.exp %35 : vector<8x512xf32>
    %cst_22 = arith.constant 1.000000e+00 : f32
    %37 = vector.broadcast %cst_22 : f32 to vector<8x512xf32>
    %38 = arith.addf %37, %36 : vector<8x512xf32>
    %39 = tpu.reciprocal %38 {approx = true} : vector<8x512xf32> -> vector<8x512xf32>
    %40 = arith.mulf %33, %39 : vector<8x512xf32>
    %41 = arith.truncf %40 : vector<8x512xf32> to vector<8x512xbf16>
    %c0_23 = arith.constant 0 : index
    %c0_24 = arith.constant 0 : index
    %42 = vector.load %arg9[%c0_23, %c0_24] : memref<512x512xbf16, #tpu.memory_space<vmem>>, vector<512x512xbf16>
    %cst_25 = arith.constant dense<0.000000e+00> : vector<8x512xf32>
    %43 = tpu.matmul %41, %42, %cst_25 {dimension_numbers = #tpu.dot_dimension_numbers<[1], [0], [0], [1], [0, 0, 1, 1], [], []>} : vector<8x512xbf16>, vector<512x512xbf16>, vector<8x512xf32> -> vector<8x512xf32>
    %44 = arith.truncf %28 : vector<8x512xf32> to vector<8x512xbf16>
    %c0_26 = arith.constant 0 : index
    %c0_27 = arith.constant 0 : index
    %45 = vector.load %arg10[%c0_26, %c0_27] : memref<512x512xbf16, #tpu.memory_space<vmem>>, vector<512x512xbf16>
    %cst_28 = arith.constant dense<0.000000e+00> : vector<8x512xf32>
    %46 = tpu.matmul %44, %45, %cst_28 {dimension_numbers = #tpu.dot_dimension_numbers<[1], [0], [0], [1], [0, 0, 1, 1], [], []>} : vector<8x512xbf16>, vector<512x512xbf16>, vector<8x512xf32> -> vector<8x512xf32>
    %47 = arith.addf %43, %46 : vector<8x512xf32>
    %c0_29 = arith.constant 0 : index
    %c0_30 = arith.constant 0 : index
    %48 = vector.load %arg11[%c0_29, %c0_30] : memref<1x512xf32, #tpu.memory_space<vmem>>, vector<1x512xf32>
    %49 = vector.broadcast %48 : vector<1x512xf32> to vector<8x512xf32>
    %50 = arith.addf %47, %49 : vector<8x512xf32>
    %cst_31 = arith.constant 0.000000e+00 : f32
    %51 = vector.broadcast %cst_31 : f32 to vector<8x512xf32>
    %52 = arith.subf %51, %50 : vector<8x512xf32>
    %53 = math.exp %52 : vector<8x512xf32>
    %cst_32 = arith.constant 1.000000e+00 : f32
    %54 = vector.broadcast %cst_32 : f32 to vector<8x512xf32>
    %55 = arith.addf %54, %53 : vector<8x512xf32>
    %56 = tpu.reciprocal %55 {approx = true} : vector<8x512xf32> -> vector<8x512xf32>
    %57 = arith.mulf %50, %56 : vector<8x512xf32>
    %c0_33 = arith.constant 0 : index
    %c0_34 = arith.constant 0 : index
    %58 = vector.load %arg12[%c0_33, %c0_34] : memref<1x512xf32, #tpu.memory_space<vmem>>, vector<1x512xf32>
    %59 = vector.broadcast %58 : vector<1x512xf32> to vector<8x512xf32>
    %60 = arith.mulf %57, %59 : vector<8x512xf32>
    %cst_35 = arith.constant dense<0.000000e+00> : vector<8xf32>
    %61 = vector.multi_reduction <add>, %60, %cst_35 [1] : vector<8x512xf32> to vector<8xf32>
    %62 = vector.shape_cast %61 : vector<8xf32> to vector<8x1xf32>
    %c0_36 = arith.constant 0 : index
    %c0_37 = arith.constant 0 : index
    %63 = vector.load %arg13[%c0_36, %c0_37] : memref<1x1xf32, #tpu.memory_space<vmem>>, vector<1x1xf32>
    %64 = vector.broadcast %63 : vector<1x1xf32> to vector<8x1xf32>
    %65 = arith.addf %62, %64 : vector<8x1xf32>
    %c0_38 = arith.constant 0 : index
    %c0_39 = arith.constant 0 : index
    %66 = vector.load %arg14[%c0_38, %c0_39] : memref<8x1xf32, #tpu.memory_space<vmem>>, vector<8x1xf32>
    tpu.vector_store %arg14[%c0_38, %c0_39], %65 {strides = array<i32>} : memref<8x1xf32, #tpu.memory_space<vmem>>, vector<8x1xf32>,
    return
  }
  func.func @transform_0(%arg0: i32) -> (i32, i32) {
    %c0_i32 = arith.constant 0 : i32
    %c0_i32_0 = arith.constant 0 : i32
    return %arg0, %c0_i32 : i32, i32
  }
  func.func @transform_1(%arg0: i32) -> (i32, i32) {
    %c0_i32 = arith.constant 0 : i32
    %c0_i32_0 = arith.constant 0 : i32
    return %arg0, %c0_i32 : i32, i32
  }
  func.func @transform_2(%arg0: i32) -> (i32, i32) {
    %c0_i32 = arith.constant 0 : i32
    %c0_i32_0 = arith.constant 0 : i32
    %c0_i32_1 = arith.constant 0 : i32
    return %c0_i32, %c0_i32_0 : i32, i32
  }
  func.func @transform_3(%arg0: i32) -> (i32, i32) {
    %c0_i32 = arith.constant 0 : i32
    %c0_i32_0 = arith.constant 0 : i32
    %c0_i32_1 = arith.constant 0 : i32
    return %c0_i32, %c0_i32_0 : i32, i32
  }
  func.func @transform_4(%arg0: i32) -> (i32, i32) {
    %c0_i32 = arith.constant 0 : i32
    %c0_i32_0 = arith.constant 0 : i32
    %c0_i32_1 = arith.constant 0 : i32
    return %c0_i32, %c0_i32_0 : i32, i32
  }
  func.func @transform_5(%arg0: i32) -> (i32, i32) {
    %c0_i32 = arith.constant 0 : i32
    %c0_i32_0 = arith.constant 0 : i32
    %c0_i32_1 = arith.constant 0 : i32
    return %c0_i32, %c0_i32_0 : i32, i32
  }
  func.func @transform_6(%arg0: i32) -> (i32, i32) {
    %c0_i32 = arith.constant 0 : i32
    %c0_i32_0 = arith.constant 0 : i32
    %c0_i32_1 = arith.constant 0 : i32
    return %c0_i32, %c0_i32_0 : i32, i32
  }
  func.func @transform_7(%arg0: i32) -> (i32, i32) {
    %c0_i32 = arith.constant 0 : i32
    %c0_i32_0 = arith.constant 0 : i32
    %c0_i32_1 = arith.constant 0 : i32
    return %c0_i32, %c0_i32_0 : i32, i32
  }
  func.func @transform_8(%arg0: i32) -> (i32, i32) {
    %c0_i32 = arith.constant 0 : i32
    %c0_i32_0 = arith.constant 0 : i32
    %c0_i32_1 = arith.constant 0 : i32
    return %c0_i32, %c0_i32_0 : i32, i32
  }
  func.func @transform_9(%arg0: i32) -> (i32, i32) {
    %c0_i32 = arith.constant 0 : i32
    %c0_i32_0 = arith.constant 0 : i32
    %c0_i32_1 = arith.constant 0 : i32
    return %c0_i32, %c0_i32_0 : i32, i32
  }
  func.func @transform_10(%arg0: i32) -> (i32, i32) {
    %c0_i32 = arith.constant 0 : i32
    %c0_i32_0 = arith.constant 0 : i32
    %c0_i32_1 = arith.constant 0 : i32
    return %c0_i32, %c0_i32_0 : i32, i32
  }
  func.func @transform_11(%arg0: i32) -> (i32, i32) {
    %c0_i32 = arith.constant 0 : i32
    %c0_i32_0 = arith.constant 0 : i32
    %c0_i32_1 = arith.constant 0 : i32
    return %c0_i32, %c0_i32_0 : i32, i32
  }
  func.func @transform_12(%arg0: i32) -> (i32, i32) {
    %c0_i32 = arith.constant 0 : i32
    %c0_i32_0 = arith.constant 0 : i32
    %c0_i32_1 = arith.constant 0 : i32
    return %c0_i32, %c0_i32_0 : i32, i32
  }
  func.func @transform_13(%arg0: i32) -> (i32, i32) {
    %c0_i32 = arith.constant 0 : i32
    %c0_i32_0 = arith.constant 0 : i32
    return %arg0, %c0_i32 : i32, i32
  }
}

</mosaic_0001>

<llo_original>
// kernel: tpu_custom_call.1
$region0: #{tpu_custom_call.1}
  #allocation0 [shape = 'u32[]', space=smem, size = 0x4, offset = 0x4, fixed_abs, tag = 'smem constant byte address 0x4 - core index']
  #allocation1 [shape = 'u32[144,128]{1,0:T(1,128)}', space=vmem, size = 0x12000, scoped, tag = 'internal scratch']
  #allocation2 [shape = 'f32[1,1]{1,0:T(1,128)S(1)}', space=vmem, size = 0x200, scoped, tag = 'scoped memory for tpu_custom_call.1']
  %s0 = inlined_call_operand.hbm [shape: f32[8,24], index: 0, kind: input, shape index: {}]
  %s1 = inlined_call_operand.hbm [shape: f32[8,6], index: 1, kind: input, shape index: {}]
  %s2 = inlined_call_operand.hbm [shape: bf16[24,512], index: 2, kind: input, shape index: {}]
  %s3 = inlined_call_operand.vmem [shape: f32[1,512], index: 3, kind: input, shape index: {}]
  %s4 = inlined_call_operand.hbm [shape: bf16[512,512], index: 4, kind: input, shape index: {}]
  %s5 = inlined_call_operand.vmem [shape: f32[1,512], index: 5, kind: input, shape index: {}]
  %s6 = inlined_call_operand.vmem [shape: bf16[6,512], index: 6, kind: input, shape index: {}]
  %s7 = inlined_call_operand.vmem [shape: f32[1,512], index: 7, kind: input, shape index: {}]
  %s8 = inlined_call_operand.hbm [shape: bf16[512,512], index: 8, kind: input, shape index: {}]
  %s9 = inlined_call_operand.hbm [shape: bf16[512,512], index: 9, kind: input, shape index: {}]
  %s10 = inlined_call_operand.vmem [shape: f32[1,512], index: 10, kind: input, shape index: {}]
  %s11 = inlined_call_operand.vmem [shape: f32[1,512], index: 11, kind: input, shape index: {}]
  %s12 = inlined_call_operand.<no memory space> [shape: f32[1,1], index: 12, kind: input, shape index: {}]
  %s13 = inlined_call_operand.vmem [shape: f32[8,1], index: 13, kind: output, shape index: {}]
  %s14 = sld [smem:[#allocation0]]
  $region86: #{tpu_custom_call.1} parent=0
    _
  %s16 = ssub.s32 1, %s14
  %s17 = scalar_select 0, %s16, %s14
  %v18 = vstv %s12
  %19 = vst [vmem:[#allocation2] sm:$0x1] %v18
  $region1: #{tpu_custom_call.1} parent=0
    #allocation3 [shape = 'u8[4096]{0}', space=vmem, size = 0x1000, scoped, tag = 'input window, operand 0, single buffered']
    #allocation4 [shape = 's32[1]{0}', space=sflag, size = 0x4, scoped, tag = 'scoped memory for tpu_custom_call.1']
    #allocation5 [shape = 'u8[4096]{0}', space=vmem, size = 0x1000, scoped, tag = 'input window, operand 1, single buffered']
    #allocation6 [shape = 's32[1]{0}', space=sflag, size = 0x4, scoped, tag = 'scoped memory for tpu_custom_call.1']
    #allocation7 [shape = 'u8[24576]{0}', space=vmem, size = 0x6000, scoped, tag = 'input window, operand 2, single buffered']
    #allocation8 [shape = 'u8[524288]{0}', space=vmem, size = 0x80000, scoped, tag = 'input window, operand 4, single buffered']
    #allocation9 [shape = 's32[1]{0}', space=sflag, size = 0x4, scoped, tag = 'scoped memory for tpu_custom_call.1']
    #allocation10 [shape = 'u8[524288]{0}', space=vmem, size = 0x80000, scoped, tag = 'input window, operand 8, single buffered']
    #allocation11 [shape = 'u8[524288]{0}', space=vmem, size = 0x80000, scoped, tag = 'input window, operand 9, single buffered']
    #allocation12 [shape = 's32[1]{0}', space=sflag, size = 0x4, scoped, tag = 'scoped memory for tpu_custom_call.1']
    %20 = vsyncpa [#allocation4], 0
    %21 = vsyncpa [#allocation6], 0
    %22 = vsyncpa [#allocation9], 0
    %23 = vsyncpa [#allocation12], 0
    // Predicated region
    $region2: #{tpu_custom_call.1} parent=1 // pred_check
      _
    $region3: #{tpu_custom_call.1} parent=1 // pred_check_branch
      %25 = sbr.rel (0) target = $region5
    $region4: #{tpu_custom_call.1} parent=1 // pred_region
      %s27 = ssub.s32 128, 128
      %28 = vsyncadd [#allocation4], %s27
      %s30 = sshll.u32 [#allocation3], 4
      %s31 = int_to_ptr.vmem [resolvable:$true] %s30
      %33 = dma.hbm_to_vmem [thread:$0]  %s0, 128, %s31, [#allocation4]
    $region5: #{tpu_custom_call.1} parent=1 // pred_fallthru
      _
    // Predicated region
    $region6: #{tpu_custom_call.1} parent=1 // pred_check
      _
    $region7: #{tpu_custom_call.1} parent=1 // pred_check_branch
      %35 = sbr.rel (0) target = $region9
    $region8: #{tpu_custom_call.1} parent=1 // pred_region
      %s37 = ssub.s32 128, 128
      %38 = vsyncadd [#allocation6], %s37
      %s40 = sshll.u32 [#allocation5], 4
      %s41 = int_to_ptr.vmem [resolvable:$true] %s40
      %43 = dma.hbm_to_vmem [thread:$0]  %s1, 128, %s41, [#allocation6]
    $region9: #{tpu_custom_call.1} parent=1 // pred_fallthru
      _
    // Predicated region
    $region10: #{tpu_custom_call.1} parent=1 // pred_check
      _
    $region11: #{tpu_custom_call.1} parent=1 // pred_check_branch
      %45 = sbr.rel (0) target = $region13
    $region12: #{tpu_custom_call.1} parent=1 // pred_region
      %s47 = ssub.s32 768, 768
      %48 = vsyncadd [#allocation6], %s47
      %s49 = sshll.u32 [#allocation7], 4
      %s50 = int_to_ptr.vmem [resolvable:$true] %s49
      %55 = dma.hbm_to_vmem [thread:$0]  %s2, 768, %s50, [#allocation6], 256, 256, 16
    $region13: #{tpu_custom_call.1} parent=1 // pred_fallthru
      _
    // Predicated region
    $region14: #{tpu_custom_call.1} parent=1 // pred_check
      _
    $region15: #{tpu_custom_call.1} parent=1 // pred_check_branch
      %57 = sbr.rel (0) target = $region17
    $region16: #{tpu_custom_call.1} parent=1 // pred_region
      _
    $region17: #{tpu_custom_call.1} parent=1 // pred_fallthru
      _
    // Predicated region
    $region18: #{tpu_custom_call.1} parent=1 // pred_check
      _
    $region19: #{tpu_custom_call.1} parent=1 // pred_check_branch
      %59 = sbr.rel (0) target = $region21
    $region20: #{tpu_custom_call.1} parent=1 // pred_region
      %s61 = ssub.s32 16384, 16384
      %62 = vsyncadd [#allocation9], %s61
      %s63 = sshll.u32 [#allocation8], 4
      %s64 = int_to_ptr.vmem [resolvable:$true] %s63
      %69 = dma.hbm_to_vmem [thread:$0]  %s4, 16384, %s64, [#allocation9], 256, 256, 16
    $region21: #{tpu_custom_call.1} parent=1 // pred_fallthru
      _
    // Predicated region
    $region22: #{tpu_custom_call.1} parent=1 // pred_check
      _
    $region23: #{tpu_custom_call.1} parent=1 // pred_check_branch
      %71 = sbr.rel (0) target = $region25
    $region24: #{tpu_custom_call.1} parent=1 // pred_region
      _
    $region25: #{tpu_custom_call.1} parent=1 // pred_fallthru
      _
    // Predicated region
    $region26: #{tpu_custom_call.1} parent=1 // pred_check
      _
    $region27: #{tpu_custom_call.1} parent=1 // pred_check_branch
      %73 = sbr.rel (0) target = $region29
    $region28: #{tpu_custom_call.1} parent=1 // pred_region
      _
    $region29: #{tpu_custom_call.1} parent=1 // pred_fallthru
      _
    // Predicated region
    $region30: #{tpu_custom_call.1} parent=1 // pred_check
      _
    $region31: #{tpu_custom_call.1} parent=1 // pred_check_branch
      %75 = sbr.rel (0) target = $region33
    $region32: #{tpu_custom_call.1} parent=1 // pred_region
      _
    $region33: #{tpu_custom_call.1} parent=1 // pred_fallthru
      _
    // Predicated region
    $region34: #{tpu_custom_call.1} parent=1 // pred_check
      _
    $region35: #{tpu_custom_call.1} parent=1 // pred_check_branch
      %77 = sbr.rel (0) target = $region37
    $region36: #{tpu_custom_call.1} parent=1 // pred_region
      %s79 = ssub.s32 16384, 16384
      %80 = vsyncadd [#allocation9], %s79
      %s81 = sshll.u32 [#allocation10], 4
      %s82 = int_to_ptr.vmem [resolvable:$true] %s81
      %87 = dma.hbm_to_vmem [thread:$0]  %s8, 16384, %s82, [#allocation9], 256, 256, 16
    $region37: #{tpu_custom_call.1} parent=1 // pred_fallthru
      _
    // Predicated region
    $region38: #{tpu_custom_call.1} parent=1 // pred_check
      _
    $region39: #{tpu_custom_call.1} parent=1 // pred_check_branch
      %89 = sbr.rel (0) target = $region41
    $region40: #{tpu_custom_call.1} parent=1 // pred_region
      %s91 = ssub.s32 16384, 16384
      %92 = vsyncadd [#allocation12], %s91
      %s93 = sshll.u32 [#allocation11], 4
      %s94 = int_to_ptr.vmem [resolvable:$true] %s93
      %99 = dma.hbm_to_vmem [thread:$0]  %s9, 16384, %s94, [#allocation12], 256, 256, 16
    $region41: #{tpu_custom_call.1} parent=1 // pred_fallthru
      _
    // Predicated region
    $region42: #{tpu_custom_call.1} parent=1 // pred_check
      _
    $region43: #{tpu_custom_call.1} parent=1 // pred_check_branch
      %101 = sbr.rel (0) target = $region45
    $region44: #{tpu_custom_call.1} parent=1 // pred_region
      _
    $region45: #{tpu_custom_call.1} parent=1 // pred_fallthru
      _
    // Predicated region
    $region46: #{tpu_custom_call.1} parent=1 // pred_check
      _
    $region47: #{tpu_custom_call.1} parent=1 // pred_check_branch
      %103 = sbr.rel (0) target = $region49
    $region48: #{tpu_custom_call.1} parent=1 // pred_region
      _
    $region49: #{tpu_custom_call.1} parent=1 // pred_fallthru
      _
    // Predicated region
    $region50: #{tpu_custom_call.1} parent=1 // pred_check
      _
    $region51: #{tpu_custom_call.1} parent=1 // pred_check_branch
      %105 = sbr.rel (0) target = $region53
    $region52: #{tpu_custom_call.1} parent=1 // pred_region
      _
    $region53: #{tpu_custom_call.1} parent=1 // pred_fallthru
      _
    // Predicated region
    $region54: #{tpu_custom_call.1} parent=1 // pred_check
      _
    $region55: #{tpu_custom_call.1} parent=1 // pred_check_branch
      %107 = sbr.rel (0) target = $region57
    $region56: #{tpu_custom_call.1} parent=1 // pred_region
      %108 = dma.done [#allocation4], 128
    $region57: #{tpu_custom_call.1} parent=1 // pred_fallthru
      _
    // Predicated region
    $region58: #{tpu_custom_call.1} parent=1 // pred_check
      _
    $region59: #{tpu_custom_call.1} parent=1 // pred_check_branch
      %110 = sbr.rel (0) target = $region61
    $region60: #{tpu_custom_call.1} parent=1 // pred_region
      %111 = dma.done [#allocation6], 128
    $region61: #{tpu_custom_call.1} parent=1 // pred_fallthru
      _
    // Predicated region
    $region62: #{tpu_custom_call.1} parent=1 // pred_check
      _
    $region63: #{tpu_custom_call.1} parent=1 // pred_check_branch
      %113 = sbr.rel (0) target = $region65
    $region64: #{tpu_custom_call.1} parent=1 // pred_region
      %114 = dma.done [#allocation6], 768
    $region65: #{tpu_custom_call.1} parent=1 // pred_fallthru
      _
    // Predicated region
    $region66: #{tpu_custom_call.1} parent=1 // pred_check
      _
    $region67: #{tpu_custom_call.1} parent=1 // pred_check_branch
      %116 = sbr.rel (0) target = $region69
    $region68: #{tpu_custom_call.1} parent=1 // pred_region
      %117 = dma.done [#allocation9], 16384
    $region69: #{tpu_custom_call.1} parent=1 // pred_fallthru
      _
    // Predicated region
    $region70: #{tpu_custom_call.1} parent=1 // pred_check
      _
    $region71: #{tpu_custom_call.1} parent=1 // pred_check_branch
      %119 = sbr.rel (0) target = $region73
    $region72: #{tpu_custom_call.1} parent=1 // pred_region
      %120 = dma.done [#allocation9], 16384
    $region73: #{tpu_custom_call.1} parent=1 // pred_fallthru
      _
    // Predicated region
    $region74: #{tpu_custom_call.1} parent=1 // pred_check
      _
    $region75: #{tpu_custom_call.1} parent=1 // pred_check_branch
      %122 = sbr.rel (0) target = $region77
    $region76: #{tpu_custom_call.1} parent=1 // pred_region
      %123 = dma.done [#allocation12], 16384
    $region77: #{tpu_custom_call.1} parent=1 // pred_fallthru
      _
    %v125 = vld [vmem:[#allocation3] sm:$0xff]
    %v126 = vpack.c.bf16 %v125, %v125
    %v127 = vld [vmem:[#allocation5] sm:$0xff]
    %v128 = vpack.c.bf16 %v127, %v127
    %v129 = vld [vmem:[#allocation7] sm:$0xff]
    %v130 = vld [vmem:[#allocation7 + $0x8] sm:$0xff]
    %v131 = vld [vmem:[#allocation7 + $0x10] sm:$0xff]
    %v132 = vld [vmem:[#allocation7 + $0x18] sm:$0xff]
    %v133 = vld [vmem:[#allocation7 + $0x20] sm:$0xff]
    %v134 = vld [vmem:[#allocation7 + $0x28] sm:$0xff]
    %v135 = vld [vmem:[%s3] sm:$0xf]
    %v137 = vlaneseq
    %v138 = vshrl.u32 %v137, 7
    %v139 = vsub.s32 0, %v138
    %v140 = vrot.slane %v135, %v139
    %v141 = vlaneseq
    %v142 = vshrl.u32 %v141, 7
    %v143 = vsub.s32 1, %v142
    %v144 = vrot.slane %v135, %v143
    %v145 = vlaneseq
    %v146 = vshrl.u32 %v145, 7
    %v147 = vsub.s32 2, %v146
    %v148 = vrot.slane %v135, %v147
    %v149 = vlaneseq
    %v150 = vshrl.u32 %v149, 7
    %v151 = vsub.s32 3, %v150
    %v152 = vrot.slane %v135, %v151
    %v163 = vunpack.c.l.b16 %v129
    %v164 = vunpack.c.h.b16 %v129
    %v165 = vunpack.c.l.b16 %v130
    %v166 = vunpack.c.h.b16 %v130
    %v167 = vunpack.c.l.b16 %v131
    %v168 = vunpack.c.h.b16 %v131
    %v169 = vunpack.c.l.b16 %v132
    %v170 = vunpack.c.h.b16 %v132
    %v171 = vunpack.c.l.b16 %v133
    %v172 = vunpack.c.h.b16 %v133
    %v173 = vunpack.c.l.b16 %v134
    %v174 = vunpack.c.h.b16 %v134
    %v175 = vpack.c.b16 %v167, %v163
    %v176 = vpack.c.b16 %v168, %v164
    %v177 = vpack.c.b16 %v169, %v165
    %v178 = vpack.c.b16 %v170, %v166
    %v179 = vpack.c.b16 %v171, %v171
    %v180 = vpack.c.b16 %v172, %v172
    %v181 = vpack.c.b16 %v173, %v173
    %v182 = vpack.c.b16 %v174, %v174
    %vm187 = vcmask 195584
    %v189 = vsel %vm187, %v126, 0
    %vm191 = vcmask 1043456
    %v193 = vsel %vm191, %v179, 0
    %v196 = vsel %vm191, %v180, 0
    %v199 = vsel %vm191, %v181, 0
    %v202 = vsel %vm191, %v182, 0
    %204 = vmatprep.subr.bf16.mxu0 %v176
    %205 = vmatpush1.bf16.msra.mxu0 %v175
    %206 = vmatprep.subr.bf16.mxu0 %v196
    %207 = vmatpush1.bf16.msra.mxu0 %v193
    %208 = vmatprep.subr.bf16.mxu0 0
    %209 = vmatpush1.bf16.msra.mxu0 0
    %210 = vmatprep.subr.bf16.mxu0 0
    %211 = vmatpush1.bf16.msra.mxu0 0
    %212 = vmatprep.subr.bf16.mxu0 0
    %213 = vmatpush1.bf16.msra.mxu0 0
    %214 = vmatprep.subr.bf16.mxu0 0
    %215 = vmatpush1.bf16.msra.mxu0 0
    %216 = vmatprep.subr.bf16.mxu0 0
    %217 = vmatpush1.bf16.msra.mxu0 0
    %218 = vmatprep.subr.bf16.mxu0 0
    %219 = vmatpush1.bf16.msra.mxu0 0
    %220 = vmatprep.subr.bf16.mxu0 0
    %221 = vmatpush1.bf16.msra.mxu0 0
    %222 = vmatprep.subr.bf16.mxu0 0
    %223 = vmatpush1.bf16.msra.mxu0 0
    %224 = vmatprep.subr.bf16.mxu0 0
    %225 = vmatpush1.bf16.msra.mxu0 0
    %226 = vmatprep.subr.bf16.mxu0 0
    %227 = vmatpush1.bf16.msra.mxu0 0
    %228 = vmatprep.subr.bf16.mxu0 0
    %229 = vmatpush1.bf16.msra.mxu0 0
    %230 = vmatprep.subr.bf16.mxu0 0
    %231 = vmatpush1.bf16.msra.mxu0 0
    %232 = vmatprep.subr.bf16.mxu0 0
    %233 = vmatpush1.bf16.msra.mxu0 0
    %234 = vmatprep.subr.bf16.mxu0 0
    %235 = vmatpush1.bf16.msra.mxu0 0
    %236 = vmatprep.mubr.bf16.mxu0 0
    %237 = vmatmul.mubr.bf16.gmra.mrb[0].mxu0 %v189
    %v238 = vpop.f32.mrb[0].mxu0
    %v239 = vadd.f32 %v140, %v238
    %v240 = vpop.f32.mrb[0].mxu0
    %v241 = vadd.f32 %v144, %v240
    %v242 = vpop.f32.mrb[0].mxu0
    %v243 = vpop.f32.mrb[0].mxu0
    %244 = vdwg.mxu0
    %245 = vmatprep.subr.bf16.mxu0 %v178
    %246 = vmatpush1.bf16.msra.mxu0 %v177
    %247 = vmatprep.subr.bf16.mxu0 %v202
    %248 = vmatpush1.bf16.msra.mxu0 %v199
    %249 = vmatprep.subr.bf16.mxu0 0
    %250 = vmatpush1.bf16.msra.mxu0 0
    %251 = vmatprep.subr.bf16.mxu0 0
    %252 = vmatpush1.bf16.msra.mxu0 0
    %253 = vmatprep.subr.bf16.mxu0 0
    %254 = vmatpush1.bf16.msra.mxu0 0
    %255 = vmatprep.subr.bf16.mxu0 0
    %256 = vmatpush1.bf16.msra.mxu0 0
    %257 = vmatprep.subr.bf16.mxu0 0
    %258 = vmatpush1.bf16.msra.mxu0 0
    %259 = vmatprep.subr.bf16.mxu0 0
    %260 = vmatpush1.bf16.msra.mxu0 0
    %261 = vmatprep.subr.bf16.mxu0 0
    %262 = vmatpush1.bf16.msra.mxu0 0
    %263 = vmatprep.subr.bf16.mxu0 0
    %264 = vmatpush1.bf16.msra.mxu0 0
    %265 = vmatprep.subr.bf16.mxu0 0
    %266 = vmatpush1.bf16.msra.mxu0 0
    %267 = vmatprep.subr.bf16.mxu0 0
    %268 = vmatpush1.bf16.msra.mxu0 0
    %269 = vmatprep.subr.bf16.mxu0 0
    %270 = vmatpush1.bf16.msra.mxu0 0
    %271 = vmatprep.subr.bf16.mxu0 0
    %272 = vmatpush1.bf16.msra.mxu0 0
    %273 = vmatprep.subr.bf16.mxu0 0
    %274 = vmatpush1.bf16.msra.mxu0 0
    %275 = vmatprep.subr.bf16.mxu0 0
    %276 = vmatpush1.bf16.msra.mxu0 0
    %277 = vmatprep.mubr.bf16.mxu0 0
    %278 = vmatmul.mubr.bf16.gmra.mrb[0].mxu0 %v189
    %v279 = vpop.f32.mrb[0].mxu0
    %v280 = vadd.f32 %v148, %v279
    %v281 = vpop.f32.mrb[0].mxu0
    %v282 = vadd.f32 %v152, %v281
    %v283 = vpop.f32.mrb[0].mxu0
    %v284 = vpop.f32.mrb[0].mxu0
    %285 = vdwg.mxu0
    %v286 = vsub.f32 0.0, %v239
    %v287 = vsub.f32 0.0, %v241
    %v288 = vsub.f32 0.0, %v280
    %v289 = vsub.f32 0.0, %v282
    %v290 = vmul.f32 %v286, 1.442695
    %v291 = vpow.pop %v290
    %v292 = vmul.f32 %v287, 1.442695
    %v293 = vpow.pop %v292
    %v294 = vmul.f32 %v288, 1.442695
    %v295 = vpow.pop %v294
    %v296 = vmul.f32 %v289, 1.442695
    %v297 = vpow.pop %v296
    %v298 = vadd.f32 %v291, 1.0
    %v299 = vadd.f32 %v293, 1.0
    %v300 = vadd.f32 %v295, 1.0
    %v301 = vadd.f32 %v297, 1.0
    %v302 = vrcp.pop %v298
    %v303 = vrcp.pop %v299
    %v304 = vrcp.pop %v300
    %v305 = vrcp.pop %v301
    %v306 = vmul.f32 %v239, %v302
    %v307 = vmul.f32 %v241, %v303
    %v308 = vmul.f32 %v280, %v304
    %v309 = vmul.f32 %v282, %v305
    %v310 = vpack.c.bf16 %v306, %v306
    %v311 = vpack.c.bf16 %v307, %v307
    %v312 = vpack.c.bf16 %v308, %v308
    %v313 = vpack.c.bf16 %v309, %v309
    %v314 = vld [vmem:[#allocation8] sm:$0xff]
    %v315 = vld [vmem:[#allocation8 + $0x8] sm:$0xff]
    %v316 = vld [vmem:[#allocation8 + $0x10] sm:$0xff]
    %v317 = vld [vmem:[#allocation8 + $0x18] sm:$0xff]
    %v318 = vld [vmem:[#allocation8 + $0x20] sm:$0xff]
    %v319 = vld [vmem:[#allocation8 + $0x28] sm:$0xff]
    %v320 = vld [vmem:[#allocation8 + $0x30] sm:$0xff]
    %v321 = vld [vmem:[#allocation8 + $0x38] sm:$0xff]
    %v322 = vld [vmem:[#allocation8 + $0x40] sm:$0xff]
    %v323 = vld [vmem:[#allocation8 + $0x48] sm:$0xff]
    %v324 = vld [vmem:[#allocation8 + $0x50] sm:$0xff]
    %v325 = vld [vmem:[#allocation8 + $0x58] sm:$0xff]
    %v326 = vld [vmem:[#allocation8 + $0x60] sm:$0xff]
    %v327 = vld [vmem:[#allocation8 + $0x68] sm:$0xff]
    %v328 = vld [vmem:[#allocation8 + $0x70] sm:$0xff]
    %v329 = vld [vmem:[#allocation8 + $0x78] sm:$0xff]
    %v330 = vld [vmem:[#allocation8 + $0x80] sm:$0xff]
    %v331 = vld [vmem:[#allocation8 + $0x88] sm:$0xff]
    %v332 = vld [vmem:[#allocation8 + $0x90] sm:$0xff]
    %v333 = vld [vmem:[#allocation8 + $0x98] sm:$0xff]
    %v334 = vld [vmem:[#allocation8 + $0xa0] sm:$0xff]
    %v335 = vld [vmem:[#allocation8 + $0xa8] sm:$0xff]
    %v336 = vld [vmem:[#allocation8 + $0xb0] sm:$0xff]
    %v337 = vld [vmem:[#allocation8 + $0xb8] sm:$0xff]
    %v338 = vld [vmem:[#allocation8 + $0xc0] sm:$0xff]
    %v339 = vld [vmem:[#allocation8 + $0xc8] sm:$0xff]
    %v340 = vld [vmem:[#allocation8 + $0xd0] sm:$0xff]
    %v341 = vld [vmem:[#allocation8 + $0xd8] sm:$0xff]
    %v342 = vld [vmem:[#allocation8 + $0xe0] sm:$0xff]
    %v343 = vld [vmem:[#allocation8 + $0xe8] sm:$0xff]
    %v344 = vld [vmem:[#allocation8 + $0xf0] sm:$0xff]
    %v345 = vld [vmem:[#allocation8 + $0xf8] sm:$0xff]
    %v346 = vld [vmem:[#allocation8 + $0x100] sm:$0xff]
    %v347 = vld [vmem:[#allocation8 + $0x108] sm:$0xff]
    %v348 = vld [vmem:[#allocation8 + $0x110] sm:$0xff]
    %v349 = vld [vmem:[#allocation8 + $0x118] sm:$0xff]
    %v350 = vld [vmem:[#allocation8 + $0x120] sm:$0xff]
    %v351 = vld [vmem:[#allocation8 + $0x128] sm:$0xff]
    %v352 = vld [vmem:[#allocation8 + $0x130] sm:$0xff]
    %v353 = vld [vmem:[#allocation8 + $0x138] sm:$0xff]
    %v354 = vld [vmem:[#allocation8 + $0x140] sm:$0xff]
    %v355 = vld [vmem:[#allocation8 + $0x148] sm:$0xff]
    %v356 = vld [vmem:[#allocation8 + $0x150] sm:$0xff]
    %v357 = vld [vmem:[#allocation8 + $0x158] sm:$0xff]
    %v358 = vld [vmem:[#allocation8 + $0x160] sm:$0xff]
    %v359 = vld [vmem:[#allocation8 + $0x168] sm:$0xff]
    %v360 = vld [vmem:[#allocation8 + $0x170] sm:$0xff]
    %v361 = vld [vmem:[#allocation8 + $0x178] sm:$0xff]
    %v362 = vld [vmem:[#allocation8 + $0x180] sm:$0xff]
    %v363 = vld [vmem:[#allocation8 + $0x188] sm:$0xff]
    %v364 = vld [vmem:[#allocation8 + $0x190] sm:$0xff]
    %v365 = vld [vmem:[#allocation8 + $0x198] sm:$0xff]
    %v366 = vld [vmem:[#allocation8 + $0x1a0] sm:$0xff]
    %v367 = vld [vmem:[#allocation8 + $0x1a8] sm:$0xff]
    %v368 = vld [vmem:[#allocation8 + $0x1b0] sm:$0xff]
    %v369 = vld [vmem:[#allocation8 + $0x1b8] sm:$0xff]
    %v370 = vld [vmem:[#allocation8 + $0x1c0] sm:$0xff]
    %v371 = vld [vmem:[#allocation8 + $0x1c8] sm:$0xff]
    %v372 = vld [vmem:[#allocation8 + $0x1d0] sm:$0xff]
    %v373 = vld [vmem:[#allocation8 + $0x1d8] sm:$0xff]
    %v374 = vld [vmem:[#allocation8 + $0x1e0] sm:$0xff]
    %v375 = vld [vmem:[#allocation8 + $0x1e8] sm:$0xff]
    %v376 = vld [vmem:[#allocation8 + $0x1f0] sm:$0xff]
    %v377 = vld [vmem:[#allocation8 + $0x1f8] sm:$0xff]
    %v378 = vld [vmem:[#allocation8 + $0x200] sm:$0xff]
    %v379 = vld [vmem:[#allocation8 + $0x208] sm:$0xff]
    %v380 = vld [vmem:[#allocation8 + $0x210] sm:$0xff]
    %v381 = vld [vmem:[#allocation8 + $0x218] sm:$0xff]
    %v382 = vld [vmem:[#allocation8 + $0x220] sm:$0xff]
    %v383 = vld [vmem:[#allocation8 + $0x228] sm:$0xff]
    %v384 = vld [vmem:[#allocation8 + $0x230] sm:$0xff]
    %v385 = vld [vmem:[#allocation8 + $0x238] sm:$0xff]
    %v386 = vld [vmem:[#allocation8 + $0x240] sm:$0xff]
    %v387 = vld [vmem:[#allocation8 + $0x248] sm:$0xff]
    %v388 = vld [vmem:[#allocation8 + $0x250] sm:$0xff]
    %v389 = vld [vmem:[#allocation8 + $0x258] sm:$0xff]
    %v390 = vld [vmem:[#allocation8 + $0x260] sm:$0xff]
    %v391 = vld [vmem:[#allocation8 + $0x268] sm:$0xff]
    %v392 = vld [vmem:[#allocation8 + $0x270] sm:$0xff]
    %v393 = vld [vmem:[#allocation8 + $0x278] sm:$0xff]
    %v394 = vld [vmem:[#allocation8 + $0x280] sm:$0xff]
    %v395 = vld [vmem:[#allocation8 + $0x288] sm:$0xff]
    %v396 = vld [vmem:[#allocation8 + $0x290] sm:$0xff]
    %v397 = vld [vmem:[#allocation8 + $0x298] sm:$0xff]
    %v398 = vld [vmem:[#allocation8 + $0x2a0] sm:$0xff]
    %v399 = vld [vmem:[#allocation8 + $0x2a8] sm:$0xff]
    %v400 = vld [vmem:[#allocation8 + $0x2b0] sm:$0xff]
    %v401 = vld [vmem:[#allocation8 + $0x2b8] sm:$0xff]
    %v402 = vld [vmem:[#allocation8 + $0x2c0] sm:$0xff]
    %v403 = vld [vmem:[#allocation8 + $0x2c8] sm:$0xff]
    %v404 = vld [vmem:[#allocation8 + $0x2d0] sm:$0xff]
    %v405 = vld [vmem:[#allocation8 + $0x2d8] sm:$0xff]
    %v406 = vld [vmem:[#allocation8 + $0x2e0] sm:$0xff]
    %v407 = vld [vmem:[#allocation8 + $0x2e8] sm:$0xff]
    %v408 = vld [vmem:[#allocation8 + $0x2f0] sm:$0xff]
    %v409 = vld [vmem:[#allocation8 + $0x2f8] sm:$0xff]
    %v410 = vld [vmem:[#allocation8 + $0x300] sm:$0xff]
    %v411 = vld [vmem:[#allocation8 + $0x308] sm:$0xff]
    %v412 = vld [vmem:[#allocation8 + $0x310] sm:$0xff]
    %v413 = vld [vmem:[#allocation8 + $0x318] sm:$0xff]
    %v414 = vld [vmem:[#allocation8 + $0x320] sm:$0xff]
    %v415 = vld [vmem:[#allocation8 + $0x328] sm:$0xff]
    %v416 = vld [vmem:[#allocation8 + $0x330] sm:$0xff]
    %v417 = vld [vmem:[#allocation8 + $0x338] sm:$0xff]
    %v418 = vld [vmem:[#allocation8 + $0x340] sm:$0xff]
    %v419 = vld [vmem:[#allocation8 + $0x348] sm:$0xff]
    %v420 = vld [vmem:[#allocation8 + $0x350] sm:$0xff]
    %v421 = vld [vmem:[#allocation8 + $0x358] sm:$0xff]
    %v422 = vld [vmem:[#allocation8 + $0x360] sm:$0xff]
    %v423 = vld [vmem:[#allocation8 + $0x368] sm:$0xff]
    %v424 = vld [vmem:[#allocation8 + $0x370] sm:$0xff]
    %v425 = vld [vmem:[#allocation8 + $0x378] sm:$0xff]
    %v426 = vld [vmem:[#allocation8 + $0x380] sm:$0xff]
    %v427 = vld [vmem:[#allocation8 + $0x388] sm:$0xff]
    %v428 = vld [vmem:[#allocation8 + $0x390] sm:$0xff]
    %v429 = vld [vmem:[#allocation8 + $0x398] sm:$0xff]
    %v430 = vld [vmem:[#allocation8 + $0x3a0] sm:$0xff]
    %v431 = vld [vmem:[#allocation8 + $0x3a8] sm:$0xff]
    %v432 = vld [vmem:[#allocation8 + $0x3b0] sm:$0xff]
    %v433 = vld [vmem:[#allocation8 + $0x3b8] sm:$0xff]
    %v434 = vld [vmem:[#allocation8 + $0x3c0] sm:$0xff]
    %v435 = vld [vmem:[#allocation8 + $0x3c8] sm:$0xff]
    %v436 = vld [vmem:[#allocation8 + $0x3d0] sm:$0xff]
    %v437 = vld [vmem:[#allocation8 + $0x3d8] sm:$0xff]
    %v438 = vld [vmem:[#allocation8 + $0x3e0] sm:$0xff]
    %v439 = vld [vmem:[#allocation8 + $0x3e8] sm:$0xff]
    %v440 = vld [vmem:[#allocation8 + $0x3f0] sm:$0xff]
    %v441 = vld [vmem:[#allocation8 + $0x3f8] sm:$0xff]
    %v442 = vld [vmem:[%s5] sm:$0xf]
    %v444 = vlaneseq
    %v445 = vshrl.u32 %v444, 7
    %v446 = vsub.s32 0, %v445
    %v447 = vrot.slane %v442, %v446
    %v448 = vlaneseq
    %v449 = vshrl.u32 %v448, 7
    %v450 = vsub.s32 1, %v449
    %v451 = vrot.slane %v442, %v450
    %v452 = vlaneseq
    %v453 = vshrl.u32 %v452, 7
    %v454 = vsub.s32 2, %v453
    %v455 = vrot.slane %v442, %v454
    %v456 = vlaneseq
    %v457 = vshrl.u32 %v456, 7
    %v458 = vsub.s32 3, %v457
    %v459 = vrot.slane %v442, %v458
    %v592 = vunpack.c.l.b16 %v314
    %v593 = vunpack.c.h.b16 %v314
    %v594 = vunpack.c.l.b16 %v315
    %v595 = vunpack.c.h.b16 %v315
    %v596 = vunpack.c.l.b16 %v316
    %v597 = vunpack.c.h.b16 %v316
    %v598 = vunpack.c.l.b16 %v317
    %v599 = vunpack.c.h.b16 %v317
    %v600 = vunpack.c.l.b16 %v318
    %v601 = vunpack.c.h.b16 %v318
    %v602 = vunpack.c.l.b16 %v319
    %v603 = vunpack.c.h.b16 %v319
    %v604 = vunpack.c.l.b16 %v320
    %v605 = vunpack.c.h.b16 %v320
    %v606 = vunpack.c.l.b16 %v321
    %v607 = vunpack.c.h.b16 %v321
    %v608 = vunpack.c.l.b16 %v322
    %v609 = vunpack.c.h.b16 %v322
    %v610 = vunpack.c.l.b16 %v323
    %v611 = vunpack.c.h.b16 %v323
    %v612 = vunpack.c.l.b16 %v324
    %v613 = vunpack.c.h.b16 %v324
    %v614 = vunpack.c.l.b16 %v325
    %v615 = vunpack.c.h.b16 %v325
    %v616 = vunpack.c.l.b16 %v326
    %v617 = vunpack.c.h.b16 %v326
    %v618 = vunpack.c.l.b16 %v327
    %v619 = vunpack.c.h.b16 %v327
    %v620 = vunpack.c.l.b16 %v328
    %v621 = vunpack.c.h.b16 %v328
    %v622 = vunpack.c.l.b16 %v329
    %v623 = vunpack.c.h.b16 %v329
    %v624 = vunpack.c.l.b16 %v330
    %v625 = vunpack.c.h.b16 %v330
    %v626 = vunpack.c.l.b16 %v331
    %v627 = vunpack.c.h.b16 %v331
    %v628 = vunpack.c.l.b16 %v332
    %v629 = vunpack.c.h.b16 %v332
    %v630 = vunpack.c.l.b16 %v333
    %v631 = vunpack.c.h.b16 %v333
    %v632 = vunpack.c.l.b16 %v334
    %v633 = vunpack.c.h.b16 %v334
    %v634 = vunpack.c.l.b16 %v335
    %v635 = vunpack.c.h.b16 %v335
    %v636 = vunpack.c.l.b16 %v336
    %v637 = vunpack.c.h.b16 %v336
    %v638 = vunpack.c.l.b16 %v337
    %v639 = vunpack.c.h.b16 %v337
    %v640 = vunpack.c.l.b16 %v338
    %v641 = vunpack.c.h.b16 %v338
    %v642 = vunpack.c.l.b16 %v339
    %v643 = vunpack.c.h.b16 %v339
    %v644 = vunpack.c.l.b16 %v340
    %v645 = vunpack.c.h.b16 %v340
    %v646 = vunpack.c.l.b16 %v341
    %v647 = vunpack.c.h.b16 %v341
    %v648 = vunpack.c.l.b16 %v342
    %v649 = vunpack.c.h.b16 %v342
    %v650 = vunpack.c.l.b16 %v343
    %v651 = vunpack.c.h.b16 %v343
    %v652 = vunpack.c.l.b16 %v344
    %v653 = vunpack.c.h.b16 %v344
    %v654 = vunpack.c.l.b16 %v345
    %v655 = vunpack.c.h.b16 %v345
    %v656 = vunpack.c.l.b16 %v346
    %v657 = vunpack.c.h.b16 %v346
    %v658 = vunpack.c.l.b16 %v347
    %v659 = vunpack.c.h.b16 %v347
    %v660 = vunpack.c.l.b16 %v348
    %v661 = vunpack.c.h.b16 %v348
    %v662 = vunpack.c.l.b16 %v349
    %v663 = vunpack.c.h.b16 %v349
    %v664 = vunpack.c.l.b16 %v350
    %v665 = vunpack.c.h.b16 %v350
    %v666 = vunpack.c.l.b16 %v351
    %v667 = vunpack.c.h.b16 %v351
    %v668 = vunpack.c.l.b16 %v352
    %v669 = vunpack.c.h.b16 %v352
    %v670 = vunpack.c.l.b16 %v353
    %v671 = vunpack.c.h.b16 %v353
    %v672 = vunpack.c.l.b16 %v354
    %v673 = vunpack.c.h.b16 %v354
    %v674 = vunpack.c.l.b16 %v355
    %v675 = vunpack.c.h.b16 %v355
    %v676 = vunpack.c.l.b16 %v356
    %v677 = vunpack.c.h.b16 %v356
    %v678 = vunpack.c.l.b16 %v357
    %v679 = vunpack.c.h.b16 %v357
    %v680 = vunpack.c.l.b16 %v358
    %v681 = vunpack.c.h.b16 %v358
    %v682 = vunpack.c.l.b16 %v359
    %v683 = vunpack.c.h.b16 %v359
    %v684 = vunpack.c.l.b16 %v360
    %v685 = vunpack.c.h.b16 %v360
    %v686 = vunpack.c.l.b16 %v361
    %v687 = vunpack.c.h.b16 %v361
    %v688 = vunpack.c.l.b16 %v362
    %v689 = vunpack.c.h.b16 %v362
    %v690 = vunpack.c.l.b16 %v363
    %v691 = vunpack.c.h.b16 %v363
    %v692 = vunpack.c.l.b16 %v364
    %v693 = vunpack.c.h.b16 %v364
    %v694 = vunpack.c.l.b16 %v365
    %v695 = vunpack.c.h.b16 %v365
    %v696 = vunpack.c.l.b16 %v366
    %v697 = vunpack.c.h.b16 %v366
    %v698 = vunpack.c.l.b16 %v367
    %v699 = vunpack.c.h.b16 %v367
    %v700 = vunpack.c.l.b16 %v368
    %v701 = vunpack.c.h.b16 %v368
    %v702 = vunpack.c.l.b16 %v369
    %v703 = vunpack.c.h.b16 %v369
    %v704 = vunpack.c.l.b16 %v370
    %v705 = vunpack.c.h.b16 %v370
    %v706 = vunpack.c.l.b16 %v371
    %v707 = vunpack.c.h.b16 %v371
    %v708 = vunpack.c.l.b16 %v372
    %v709 = vunpack.c.h.b16 %v372
    %v710 = vunpack.c.l.b16 %v373
    %v711 = vunpack.c.h.b16 %v373
    %v712 = vunpack.c.l.b16 %v374
    %v713 = vunpack.c.h.b16 %v374
    %v714 = vunpack.c.l.b16 %v375
    %v715 = vunpack.c.h.b16 %v375
    %v716 = vunpack.c.l.b16 %v376
    %v717 = vunpack.c.h.b16 %v376
    %v718 = vunpack.c.l.b16 %v377
    %v719 = vunpack.c.h.b16 %v377
    %v720 = vunpack.c.l.b16 %v378
    %v721 = vunpack.c.h.b16 %v378
    %v722 = vunpack.c.l.b16 %v379
    %v723 = vunpack.c.h.b16 %v379
    %v724 = vunpack.c.l.b16 %v380
    %v725 = vunpack.c.h.b16 %v380
    %v726 = vunpack.c.l.b16 %v381
    %v727 = vunpack.c.h.b16 %v381
    %v728 = vunpack.c.l.b16 %v382
    %v729 = vunpack.c.h.b16 %v382
    %v730 = vunpack.c.l.b16 %v383
    %v731 = vunpack.c.h.b16 %v383
    %v732 = vunpack.c.l.b16 %v384
    %v733 = vunpack.c.h.b16 %v384
    %v734 = vunpack.c.l.b16 %v385
    %v735 = vunpack.c.h.b16 %v385
    %v736 = vunpack.c.l.b16 %v386
    %v737 = vunpack.c.h.b16 %v386
    %v738 = vunpack.c.l.b16 %v387
    %v739 = vunpack.c.h.b16 %v387
    %v740 = vunpack.c.l.b16 %v388
    %v741 = vunpack.c.h.b16 %v388
    %v742 = vunpack.c.l.b16 %v389
    %v743 = vunpack.c.h.b16 %v389
    %v744 = vunpack.c.l.b16 %v390
    %v745 = vunpack.c.h.b16 %v390
    %v746 = vunpack.c.l.b16 %v391
    %v747 = vunpack.c.h.b16 %v391
    %v748 = vunpack.c.l.b16 %v392
    %v749 = vunpack.c.h.b16 %v392
    %v750 = vunpack.c.l.b16 %v393
    %v751 = vunpack.c.h.b16 %v393
    %v752 = vunpack.c.l.b16 %v394
    %v753 = vunpack.c.h.b16 %v394
    %v754 = vunpack.c.l.b16 %v395
    %v755 = vunpack.c.h.b16 %v395
    %v756 = vunpack.c.l.b16 %v396
    %v757 = vunpack.c.h.b16 %v396
    %v758 = vunpack.c.l.b16 %v397
    %v759 = vunpack.c.h.b16 %v397
    %v760 = vunpack.c.l.b16 %v398
    %v761 = vunpack.c.h.b16 %v398
    %v762 = vunpack.c.l.b16 %v399
    %v763 = vunpack.c.h.b16 %v399
    %v764 = vunpack.c.l.b16 %v400
    %v765 = vunpack.c.h.b16 %v400
    %v766 = vunpack.c.l.b16 %v401
    %v767 = vunpack.c.h.b16 %v401
    %v768 = vunpack.c.l.b16 %v402
    %v769 = vunpack.c.h.b16 %v402
    %v770 = vunpack.c.l.b16 %v403
    %v771 = vunpack.c.h.b16 %v403
    %v772 = vunpack.c.l.b16 %v404
    %v773 = vunpack.c.h.b16 %v404
    %v774 = vunpack.c.l.b16 %v405
    %v775 = vunpack.c.h.b16 %v405
    %v776 = vunpack.c.l.b16 %v406
    %v777 = vunpack.c.h.b16 %v406
    %v778 = vunpack.c.l.b16 %v407
    %v779 = vunpack.c.h.b16 %v407
    %v780 = vunpack.c.l.b16 %v408
    %v781 = vunpack.c.h.b16 %v408
    %v782 = vunpack.c.l.b16 %v409
    %v783 = vunpack.c.h.b16 %v409
    %v784 = vunpack.c.l.b16 %v410
    %v785 = vunpack.c.h.b16 %v410
    %v786 = vunpack.c.l.b16 %v411
    %v787 = vunpack.c.h.b16 %v411
    %v788 = vunpack.c.l.b16 %v412
    %v789 = vunpack.c.h.b16 %v412
    %v790 = vunpack.c.l.b16 %v413
    %v791 = vunpack.c.h.b16 %v413
    %v792 = vunpack.c.l.b16 %v414
    %v793 = vunpack.c.h.b16 %v414
    %v794 = vunpack.c.l.b16 %v415
    %v795 = vunpack.c.h.b16 %v415
    %v796 = vunpack.c.l.b16 %v416
    %v797 = vunpack.c.h.b16 %v416
    %v798 = vunpack.c.l.b16 %v417
    %v799 = vunpack.c.h.b16 %v417
    %v800 = vunpack.c.l.b16 %v418
    %v801 = vunpack.c.h.b16 %v418
    %v802 = vunpack.c.l.b16 %v419
    %v803 = vunpack.c.h.b16 %v419
    %v804 = vunpack.c.l.b16 %v420
    %v805 = vunpack.c.h.b16 %v420
    %v806 = vunpack.c.l.b16 %v421
    %v807 = vunpack.c.h.b16 %v421
    %v808 = vunpack.c.l.b16 %v422
    %v809 = vunpack.c.h.b16 %v422
    %v810 = vunpack.c.l.b16 %v423
    %v811 = vunpack.c.h.b16 %v423
    %v812 = vunpack.c.l.b16 %v424
    %v813 = vunpack.c.h.b16 %v424
    %v814 = vunpack.c.l.b16 %v425
    %v815 = vunpack.c.h.b16 %v425
    %v816 = vunpack.c.l.b16 %v426
    %v817 = vunpack.c.h.b16 %v426
    %v818 = vunpack.c.l.b16 %v427
    %v819 = vunpack.c.h.b16 %v427
    %v820 = vunpack.c.l.b16 %v428
    %v821 = vunpack.c.h.b16 %v428
    %v822 = vunpack.c.l.b16 %v429
    %v823 = vunpack.c.h.b16 %v429
    %v824 = vunpack.c.l.b16 %v430
    %v825 = vunpack.c.h.b16 %v430
    %v826 = vunpack.c.l.b16 %v431
    %v827 = vunpack.c.h.b16 %v431
    %v828 = vunpack.c.l.b16 %v432
    %v829 = vunpack.c.h.b16 %v432
    %v830 = vunpack.c.l.b16 %v433
    %v831 = vunpack.c.h.b16 %v433
    %v832 = vunpack.c.l.b16 %v434
    %v833 = vunpack.c.h.b16 %v434
    %v834 = vunpack.c.l.b16 %v435
    %v835 = vunpack.c.h.b16 %v435
    %v836 = vunpack.c.l.b16 %v436
    %v837 = vunpack.c.h.b16 %v436
    %v838 = vunpack.c.l.b16 %v437
    %v839 = vunpack.c.h.b16 %v437
    %v840 = vunpack.c.l.b16 %v438
    %v841 = vunpack.c.h.b16 %v438
    %v842 = vunpack.c.l.b16 %v439
    %v843 = vunpack.c.h.b16 %v439
    %v844 = vunpack.c.l.b16 %v440
    %v845 = vunpack.c.h.b16 %v440
    %v846 = vunpack.c.l.b16 %v441
    %v847 = vunpack.c.h.b16 %v441
    %v848 = vpack.c.b16 %v596, %v592
    %v849 = vpack.c.b16 %v597, %v593
    %v850 = vpack.c.b16 %v598, %v594
    %v851 = vpack.c.b16 %v599, %v595
    %v852 = vpack.c.b16 %v604, %v600
    %v853 = vpack.c.b16 %v605, %v601
    %v854 = vpack.c.b16 %v606, %v602
    %v855 = vpack.c.b16 %v607, %v603
    %v856 = vpack.c.b16 %v612, %v608
    %v857 = vpack.c.b16 %v613, %v609
    %v858 = vpack.c.b16 %v614, %v610
    %v859 = vpack.c.b16 %v615, %v611
    %v860 = vpack.c.b16 %v620, %v616
    %v861 = vpack.c.b16 %v621, %v617
    %v862 = vpack.c.b16 %v622, %v618
    %v863 = vpack.c.b16 %v623, %v619
    %v864 = vpack.c.b16 %v628, %v624
    %v865 = vpack.c.b16 %v629, %v625
    %v866 = vpack.c.b16 %v630, %v626
    %v867 = vpack.c.b16 %v631, %v627
    %v868 = vpack.c.b16 %v636, %v632
    %v869 = vpack.c.b16 %v637, %v633
    %v870 = vpack.c.b16 %v638, %v634
    %v871 = vpack.c.b16 %v639, %v635
    %v872 = vpack.c.b16 %v644, %v640
    %v873 = vpack.c.b16 %v645, %v641
    %v874 = vpack.c.b16 %v646, %v642
    %v875 = vpack.c.b16 %v647, %v643
    %v876 = vpack.c.b16 %v652, %v648
    %v877 = vpack.c.b16 %v653, %v649
    %v878 = vpack.c.b16 %v654, %v650
    %v879 = vpack.c.b16 %v655, %v651
    %v880 = vpack.c.b16 %v660, %v656
    %v881 = vpack.c.b16 %v661, %v657
    %v882 = vpack.c.b16 %v662, %v658
    %v883 = vpack.c.b16 %v663, %v659
    %v884 = vpack.c.b16 %v668, %v664
    %v885 = vpack.c.b16 %v669, %v665
    %v886 = vpack.c.b16 %v670, %v666
    %v887 = vpack.c.b16 %v671, %v667
    %v888 = vpack.c.b16 %v676, %v672
    %v889 = vpack.c.b16 %v677, %v673
    %v890 = vpack.c.b16 %v678, %v674
    %v891 = vpack.c.b16 %v679, %v675
    %v892 = vpack.c.b16 %v684, %v680
    %v893 = vpack.c.b16 %v685, %v681
    %v894 = vpack.c.b16 %v686, %v682
    %v895 = vpack.c.b16 %v687, %v683
    %v896 = vpack.c.b16 %v692, %v688
    %v897 = vpack.c.b16 %v693, %v689
    %v898 = vpack.c.b16 %v694, %v690
    %v899 = vpack.c.b16 %v695, %v691
    %v900 = vpack.c.b16 %v700, %v696
    %v901 = vpack.c.b16 %v701, %v697
    %v902 = vpack.c.b16 %v702, %v698
    %v903 = vpack.c.b16 %v703, %v699
    %v904 = vpack.c.b16 %v708, %v704
    %v905 = vpack.c.b16 %v709, %v705
    %v906 = vpack.c.b16 %v710, %v706
    %v907 = vpack.c.b16 %v711, %v707
    %v908 = vpack.c.b16 %v716, %v712
    %v909 = vpack.c.b16 %v717, %v713
    %v910 = vpack.c.b16 %v718, %v714
    %v911 = vpack.c.b16 %v719, %v715
    %v912 = vpack.c.b16 %v724, %v720
    %v913 = vpack.c.b16 %v725, %v721
    %v914 = vpack.c.b16 %v726, %v722
    %v915 = vpack.c.b16 %v727, %v723
    %v916 = vpack.c.b16 %v732, %v728
    %v917 = vpack.c.b16 %v733, %v729
    %v918 = vpack.c.b16 %v734, %v730
    %v919 = vpack.c.b16 %v735, %v731
    %v920 = vpack.c.b16 %v740, %v736
    %v921 = vpack.c.b16 %v741, %v737
    %v922 = vpack.c.b16 %v742, %v738
    %v923 = vpack.c.b16 %v743, %v739
    %v924 = vpack.c.b16 %v748, %v744
    %v925 = vpack.c.b16 %v749, %v745
    %v926 = vpack.c.b16 %v750, %v746
    %v927 = vpack.c.b16 %v751, %v747
    %v928 = vpack.c.b16 %v756, %v752
    %v929 = vpack.c.b16 %v757, %v753
    %v930 = vpack.c.b16 %v758, %v754
    %v931 = vpack.c.b16 %v759, %v755
    %v932 = vpack.c.b16 %v764, %v760
    %v933 = vpack.c.b16 %v765, %v761
    %v934 = vpack.c.b16 %v766, %v762
    %v935 = vpack.c.b16 %v767, %v763
    %v936 = vpack.c.b16 %v772, %v768
    %v937 = vpack.c.b16 %v773, %v769
    %v938 = vpack.c.b16 %v774, %v770
    %v939 = vpack.c.b16 %v775, %v771
    %v940 = vpack.c.b16 %v780, %v776
    %v941 = vpack.c.b16 %v781, %v777
    %v942 = vpack.c.b16 %v782, %v778
    %v943 = vpack.c.b16 %v783, %v779
    %v944 = vpack.c.b16 %v788, %v784
    %v945 = vpack.c.b16 %v789, %v785
    %v946 = vpack.c.b16 %v790, %v786
    %v947 = vpack.c.b16 %v791, %v787
    %v948 = vpack.c.b16 %v796, %v792
    %v949 = vpack.c.b16 %v797, %v793
    %v950 = vpack.c.b16 %v798, %v794
    %v951 = vpack.c.b16 %v799, %v795
    %v952 = vpack.c.b16 %v804, %v800
    %v953 = vpack.c.b16 %v805, %v801
    %v954 = vpack.c.b16 %v806, %v802
    %v955 = vpack.c.b16 %v807, %v803
    %v956 = vpack.c.b16 %v812, %v808
    %v957 = vpack.c.b16 %v813, %v809
    %v958 = vpack.c.b16 %v814, %v810
    %v959 = vpack.c.b16 %v815, %v811
    %v960 = vpack.c.b16 %v820, %v816
    %v961 = vpack.c.b16 %v821, %v817
    %v962 = vpack.c.b16 %v822, %v818
    %v963 = vpack.c.b16 %v823, %v819
    %v964 = vpack.c.b16 %v828, %v824
    %v965 = vpack.c.b16 %v829, %v825
    %v966 = vpack.c.b16 %v830, %v826
    %v967 = vpack.c.b16 %v831, %v827
    %v968 = vpack.c.b16 %v836, %v832
    %v969 = vpack.c.b16 %v837, %v833
    %v970 = vpack.c.b16 %v838, %v834
    %v971 = vpack.c.b16 %v839, %v835
    %v972 = vpack.c.b16 %v844, %v840
    %v973 = vpack.c.b16 %v845, %v841
    %v974 = vpack.c.b16 %v846, %v842
    %v975 = vpack.c.b16 %v847, %v843
    %1104 = vmatprep.subr.bf16.mxu0 %v849
    %1105 = vmatpush1.bf16.msra.mxu0 %v848
    %1106 = vmatprep.subr.bf16.mxu0 %v853
    %1107 = vmatpush1.bf16.msra.mxu0 %v852
    %1108 = vmatprep.subr.bf16.mxu0 %v857
    %1109 = vmatpush1.bf16.msra.mxu0 %v856
    %1110 = vmatprep.subr.bf16.mxu0 %v861
    %1111 = vmatpush1.bf16.msra.mxu0 %v860
    %1112 = vmatprep.subr.bf16.mxu0 %v865
    %1113 = vmatpush1.bf16.msra.mxu0 %v864
    %1114 = vmatprep.subr.bf16.mxu0 %v869
    %1115 = vmatpush1.bf16.msra.mxu0 %v868
    %1116 = vmatprep.subr.bf16.mxu0 %v873
    %1117 = vmatpush1.bf16.msra.mxu0 %v872
    %1118 = vmatprep.subr.bf16.mxu0 %v877
    %1119 = vmatpush1.bf16.msra.mxu0 %v876
    %1120 = vmatprep.subr.bf16.mxu0 %v881
    %1121 = vmatpush1.bf16.msra.mxu0 %v880
    %1122 = vmatprep.subr.bf16.mxu0 %v885
    %1123 = vmatpush1.bf16.msra.mxu0 %v884
    %1124 = vmatprep.subr.bf16.mxu0 %v889
    %1125 = vmatpush1.bf16.msra.mxu0 %v888
    %1126 = vmatprep.subr.bf16.mxu0 %v893
    %1127 = vmatpush1.bf16.msra.mxu0 %v892
    %1128 = vmatprep.subr.bf16.mxu0 %v897
    %1129 = vmatpush1.bf16.msra.mxu0 %v896
    %1130 = vmatprep.subr.bf16.mxu0 %v901
    %1131 = vmatpush1.bf16.msra.mxu0 %v900
    %1132 = vmatprep.subr.bf16.mxu0 %v905
    %1133 = vmatpush1.bf16.msra.mxu0 %v904
    %1134 = vmatprep.subr.bf16.mxu0 %v909
    %1135 = vmatpush1.bf16.msra.mxu0 %v908
    %1136 = vmatprep.mubr.bf16.mxu0 %v311
    %1137 = vmatmul.mubr.bf16.gmra.mrb[0].mxu0 %v310
    %v1138 = vpop.f32.mrb[0].mxu0
    %v1139 = vadd.f32 %v447, %v1138
    %v1140 = vpop.f32.mrb[0].mxu0
    %v1141 = vadd.f32 %v451, %v1140
    %v1142 = vpop.f32.mrb[0].mxu0
    %v1143 = vpop.f32.mrb[0].mxu0
    %1144 = vdwg.mxu0
    %1145 = vmatprep.subr.bf16.mxu0 %v913
    %1146 = vmatpush1.bf16.msra.mxu0 %v912
    %1147 = vmatprep.subr.bf16.mxu0 %v917
    %1148 = vmatpush1.bf16.msra.mxu0 %v916
    %1149 = vmatprep.subr.bf16.mxu0 %v921
    %1150 = vmatpush1.bf16.msra.mxu0 %v920
    %1151 = vmatprep.subr.bf16.mxu0 %v925
    %1152 = vmatpush1.bf16.msra.mxu0 %v924
    %1153 = vmatprep.subr.bf16.mxu0 %v929
    %1154 = vmatpush1.bf16.msra.mxu0 %v928
    %1155 = vmatprep.subr.bf16.mxu0 %v933
    %1156 = vmatpush1.bf16.msra.mxu0 %v932
    %1157 = vmatprep.subr.bf16.mxu0 %v937
    %1158 = vmatpush1.bf16.msra.mxu0 %v936
    %1159 = vmatprep.subr.bf16.mxu0 %v941
    %1160 = vmatpush1.bf16.msra.mxu0 %v940
    %1161 = vmatprep.subr.bf16.mxu0 %v945
    %1162 = vmatpush1.bf16.msra.mxu0 %v944
    %1163 = vmatprep.subr.bf16.mxu0 %v949
    %1164 = vmatpush1.bf16.msra.mxu0 %v948
    %1165 = vmatprep.subr.bf16.mxu0 %v953
    %1166 = vmatpush1.bf16.msra.mxu0 %v952
    %1167 = vmatprep.subr.bf16.mxu0 %v957
    %1168 = vmatpush1.bf16.msra.mxu0 %v956
    %1169 = vmatprep.subr.bf16.mxu0 %v961
    %1170 = vmatpush1.bf16.msra.mxu0 %v960
    %1171 = vmatprep.subr.bf16.mxu0 %v965
    %1172 = vmatpush1.bf16.msra.mxu0 %v964
    %1173 = vmatprep.subr.bf16.mxu0 %v969
    %1174 = vmatpush1.bf16.msra.mxu0 %v968
    %1175 = vmatprep.subr.bf16.mxu0 %v973
    %1176 = vmatpush1.bf16.msra.mxu0 %v972
    %1177 = vmatprep.mubr.bf16.mxu0 %v313
    %1178 = vmatmul.mubr.bf16.gmra.mrb[0].mxu0 %v312
    %v1179 = vpop.f32.mrb[0].mxu0
    %v1180 = vadd.f32 %v1139, %v1179
    %v1181 = vpop.f32.mrb[0].mxu0
    %v1182 = vadd.f32 %v1141, %v1181
    %v1183 = vpop.f32.mrb[0].mxu0
    %v1184 = vpop.f32.mrb[0].mxu0
    %1185 = vdwg.mxu0
    %1186 = vmatprep.subr.bf16.mxu0 %v851
    %1187 = vmatpush1.bf16.msra.mxu0 %v850
    %1188 = vmatprep.subr.bf16.mxu0 %v855
    %1189 = vmatpush1.bf16.msra.mxu0 %v854
    %1190 = vmatprep.subr.bf16.mxu0 %v859
    %1191 = vmatpush1.bf16.msra.mxu0 %v858
    %1192 = vmatprep.subr.bf16.mxu0 %v863
    %1193 = vmatpush1.bf16.msra.mxu0 %v862
    %1194 = vmatprep.subr.bf16.mxu0 %v867
    %1195 = vmatpush1.bf16.msra.mxu0 %v866
    %1196 = vmatprep.subr.bf16.mxu0 %v871
    %1197 = vmatpush1.bf16.msra.mxu0 %v870
    %1198 = vmatprep.subr.bf16.mxu0 %v875
    %1199 = vmatpush1.bf16.msra.mxu0 %v874
    %1200 = vmatprep.subr.bf16.mxu0 %v879
    %1201 = vmatpush1.bf16.msra.mxu0 %v878
    %1202 = vmatprep.subr.bf16.mxu0 %v883
    %1203 = vmatpush1.bf16.msra.mxu0 %v882
    %1204 = vmatprep.subr.bf16.mxu0 %v887
    %1205 = vmatpush1.bf16.msra.mxu0 %v886
    %1206 = vmatprep.subr.bf16.mxu0 %v891
    %1207 = vmatpush1.bf16.msra.mxu0 %v890
    %1208 = vmatprep.subr.bf16.mxu0 %v895
    %1209 = vmatpush1.bf16.msra.mxu0 %v894
    %1210 = vmatprep.subr.bf16.mxu0 %v899
    %1211 = vmatpush1.bf16.msra.mxu0 %v898
    %1212 = vmatprep.subr.bf16.mxu0 %v903
    %1213 = vmatpush1.bf16.msra.mxu0 %v902
    %1214 = vmatprep.subr.bf16.mxu0 %v907
    %1215 = vmatpush1.bf16.msra.mxu0 %v906
    %1216 = vmatprep.subr.bf16.mxu0 %v911
    %1217 = vmatpush1.bf16.msra.mxu0 %v910
    %1218 = vmatprep.mubr.bf16.mxu0 %v311
    %1219 = vmatmul.mubr.bf16.gmra.mrb[0].mxu0 %v310
    %v1220 = vpop.f32.mrb[0].mxu0
    %v1221 = vadd.f32 %v455, %v1220
    %v1222 = vpop.f32.mrb[0].mxu0
    %v1223 = vadd.f32 %v459, %v1222
    %v1224 = vpop.f32.mrb[0].mxu0
    %v1225 = vpop.f32.mrb[0].mxu0
    %1226 = vdwg.mxu0
    %1227 = vmatprep.subr.bf16.mxu0 %v915
    %1228 = vmatpush1.bf16.msra.mxu0 %v914
    %1229 = vmatprep.subr.bf16.mxu0 %v919
    %1230 = vmatpush1.bf16.msra.mxu0 %v918
    %1231 = vmatprep.subr.bf16.mxu0 %v923
    %1232 = vmatpush1.bf16.msra.mxu0 %v922
    %1233 = vmatprep.subr.bf16.mxu0 %v927
    %1234 = vmatpush1.bf16.msra.mxu0 %v926
    %1235 = vmatprep.subr.bf16.mxu0 %v931
    %1236 = vmatpush1.bf16.msra.mxu0 %v930
    %1237 = vmatprep.subr.bf16.mxu0 %v935
    %1238 = vmatpush1.bf16.msra.mxu0 %v934
    %1239 = vmatprep.subr.bf16.mxu0 %v939
    %1240 = vmatpush1.bf16.msra.mxu0 %v938
    %1241 = vmatprep.subr.bf16.mxu0 %v943
    %1242 = vmatpush1.bf16.msra.mxu0 %v942
    %1243 = vmatprep.subr.bf16.mxu0 %v947
    %1244 = vmatpush1.bf16.msra.mxu0 %v946
    %1245 = vmatprep.subr.bf16.mxu0 %v951
    %1246 = vmatpush1.bf16.msra.mxu0 %v950
    %1247 = vmatprep.subr.bf16.mxu0 %v955
    %1248 = vmatpush1.bf16.msra.mxu0 %v954
    %1249 = vmatprep.subr.bf16.mxu0 %v959
    %1250 = vmatpush1.bf16.msra.mxu0 %v958
    %1251 = vmatprep.subr.bf16.mxu0 %v963
    %1252 = vmatpush1.bf16.msra.mxu0 %v962
    %1253 = vmatprep.subr.bf16.mxu0 %v967
    %1254 = vmatpush1.bf16.msra.mxu0 %v966
    %1255 = vmatprep.subr.bf16.mxu0 %v971
    %1256 = vmatpush1.bf16.msra.mxu0 %v970
    %1257 = vmatprep.subr.bf16.mxu0 %v975
    %1258 = vmatpush1.bf16.msra.mxu0 %v974
    %1259 = vmatprep.mubr.bf16.mxu0 %v313
    %1260 = vmatmul.mubr.bf16.gmra.mrb[0].mxu0 %v312
    %v1261 = vpop.f32.mrb[0].mxu0
    %v1262 = vadd.f32 %v1221, %v1261
    %v1263 = vpop.f32.mrb[0].mxu0
    %v1264 = vadd.f32 %v1223, %v1263
    %v1265 = vpop.f32.mrb[0].mxu0
    %v1266 = vpop.f32.mrb[0].mxu0
    %1267 = vdwg.mxu0
    %v1268 = vsub.f32 0.0, %v1180
    %v1269 = vsub.f32 0.0, %v1182
    %v1270 = vsub.f32 0.0, %v1262
    %v1271 = vsub.f32 0.0, %v1264
    %v1272 = vmul.f32 %v1268, 1.442695
    %v1273 = vpow.pop %v1272
    %v1274 = vmul.f32 %v1269, 1.442695
    %v1275 = vpow.pop %v1274
    %v1276 = vmul.f32 %v1270, 1.442695
    %v1277 = vpow.pop %v1276
    %v1278 = vmul.f32 %v1271, 1.442695
    %v1279 = vpow.pop %v1278
    %v1280 = vadd.f32 %v1273, 1.0
    %v1281 = vadd.f32 %v1275, 1.0
    %v1282 = vadd.f32 %v1277, 1.0
    %v1283 = vadd.f32 %v1279, 1.0
    %v1284 = vrcp.pop %v1280
    %v1285 = vrcp.pop %v1281
    %v1286 = vrcp.pop %v1282
    %v1287 = vrcp.pop %v1283
    %v1288 = vmul.f32 %v1180, %v1284
    %v1289 = vmul.f32 %v1182, %v1285
    %v1290 = vmul.f32 %v1262, %v1286
    %v1291 = vmul.f32 %v1264, %v1287
    %v1292 = vld [vmem:[%s6] sm:$0x77]
    %v1293 = vld [vmem:[%s6 + $0x8] sm:$0x77]
    %v1294 = vld [vmem:[%s7] sm:$0xf]
    %v1296 = vlaneseq
    %v1297 = vshrl.u32 %v1296, 7
    %v1298 = vsub.s32 0, %v1297
    %v1299 = vrot.slane %v1294, %v1298
    %v1300 = vlaneseq
    %v1301 = vshrl.u32 %v1300, 7
    %v1302 = vsub.s32 1, %v1301
    %v1303 = vrot.slane %v1294, %v1302
    %v1304 = vlaneseq
    %v1305 = vshrl.u32 %v1304, 7
    %v1306 = vsub.s32 2, %v1305
    %v1307 = vrot.slane %v1294, %v1306
    %v1308 = vlaneseq
    %v1309 = vshrl.u32 %v1308, 7
    %v1310 = vsub.s32 3, %v1309
    %v1311 = vrot.slane %v1294, %v1310
    %v1318 = vunpack.c.l.b16 %v1292
    %v1319 = vunpack.c.h.b16 %v1292
    %v1320 = vunpack.c.l.b16 %v1293
    %v1321 = vunpack.c.h.b16 %v1293
    %v1322 = vpack.c.b16 %v1318, %v1318
    %v1323 = vpack.c.b16 %v1319, %v1319
    %v1324 = vpack.c.b16 %v1320, %v1320
    %v1325 = vpack.c.b16 %v1321, %v1321
    %vm1326 = vcmask 48128
    %v1328 = vsel %vm1326, %v128, 0
    %vm1330 = vcmask 1042432
    %v1332 = vsel %vm1330, %v1322, 0
    %v1335 = vsel %vm1330, %v1323, 0
    %v1338 = vsel %vm1330, %v1324, 0
    %v1341 = vsel %vm1330, %v1325, 0
    %1343 = vmatprep.subr.bf16.mxu0 %v1335
    %1344 = vmatpush1.bf16.msra.mxu0 %v1332
    %1345 = vmatprep.subr.bf16.mxu0 0
    %1346 = vmatpush1.bf16.msra.mxu0 0
    %1347 = vmatprep.subr.bf16.mxu0 0
    %1348 = vmatpush1.bf16.msra.mxu0 0
    %1349 = vmatprep.subr.bf16.mxu0 0
    %1350 = vmatpush1.bf16.msra.mxu0 0
    %1351 = vmatprep.subr.bf16.mxu0 0
    %1352 = vmatpush1.bf16.msra.mxu0 0
    %1353 = vmatprep.subr.bf16.mxu0 0
    %1354 = vmatpush1.bf16.msra.mxu0 0
    %1355 = vmatprep.subr.bf16.mxu0 0
    %1356 = vmatpush1.bf16.msra.mxu0 0
    %1357 = vmatprep.subr.bf16.mxu0 0
    %1358 = vmatpush1.bf16.msra.mxu0 0
    %1359 = vmatprep.subr.bf16.mxu0 0
    %1360 = vmatpush1.bf16.msra.mxu0 0
    %1361 = vmatprep.subr.bf16.mxu0 0
    %1362 = vmatpush1.bf16.msra.mxu0 0
    %1363 = vmatprep.subr.bf16.mxu0 0
    %1364 = vmatpush1.bf16.msra.mxu0 0
    %1365 = vmatprep.subr.bf16.mxu0 0
    %1366 = vmatpush1.bf16.msra.mxu0 0
    %1367 = vmatprep.subr.bf16.mxu0 0
    %1368 = vmatpush1.bf16.msra.mxu0 0
    %1369 = vmatprep.subr.bf16.mxu0 0
    %1370 = vmatpush1.bf16.msra.mxu0 0
    %1371 = vmatprep.subr.bf16.mxu0 0
    %1372 = vmatpush1.bf16.msra.mxu0 0
    %1373 = vmatprep.subr.bf16.mxu0 0
    %1374 = vmatpush1.bf16.msra.mxu0 0
    %1375 = vmatprep.mubr.bf16.mxu0 0
    %1376 = vmatmul.mubr.bf16.gmra.mrb[0].mxu0 %v1328
    %v1377 = vpop.f32.mrb[0].mxu0
    %v1378 = vadd.f32 %v1299, %v1377
    %v1379 = vpop.f32.mrb[0].mxu0
    %v1380 = vadd.f32 %v1303, %v1379
    %v1381 = vpop.f32.mrb[0].mxu0
    %v1382 = vpop.f32.mrb[0].mxu0
    %1383 = vdwg.mxu0
    %1384 = vmatprep.subr.bf16.mxu0 %v1341
    %1385 = vmatpush1.bf16.msra.mxu0 %v1338
    %1386 = vmatprep.subr.bf16.mxu0 0
    %1387 = vmatpush1.bf16.msra.mxu0 0
    %1388 = vmatprep.subr.bf16.mxu0 0
    %1389 = vmatpush1.bf16.msra.mxu0 0
    %1390 = vmatprep.subr.bf16.mxu0 0
    %1391 = vmatpush1.bf16.msra.mxu0 0
    %1392 = vmatprep.subr.bf16.mxu0 0
    %1393 = vmatpush1.bf16.msra.mxu0 0
    %1394 = vmatprep.subr.bf16.mxu0 0
    %1395 = vmatpush1.bf16.msra.mxu0 0
    %1396 = vmatprep.subr.bf16.mxu0 0
    %1397 = vmatpush1.bf16.msra.mxu0 0
    %1398 = vmatprep.subr.bf16.mxu0 0
    %1399 = vmatpush1.bf16.msra.mxu0 0
    %1400 = vmatprep.subr.bf16.mxu0 0
    %1401 = vmatpush1.bf16.msra.mxu0 0
    %1402 = vmatprep.subr.bf16.mxu0 0
    %1403 = vmatpush1.bf16.msra.mxu0 0
    %1404 = vmatprep.subr.bf16.mxu0 0
    %1405 = vmatpush1.bf16.msra.mxu0 0
    %1406 = vmatprep.subr.bf16.mxu0 0
    %1407 = vmatpush1.bf16.msra.mxu0 0
    %1408 = vmatprep.subr.bf16.mxu0 0
    %1409 = vmatpush1.bf16.msra.mxu0 0
    %1410 = vmatprep.subr.bf16.mxu0 0
    %1411 = vmatpush1.bf16.msra.mxu0 0
    %1412 = vmatprep.subr.bf16.mxu0 0
    %1413 = vmatpush1.bf16.msra.mxu0 0
    %1414 = vmatprep.subr.bf16.mxu0 0
    %1415 = vmatpush1.bf16.msra.mxu0 0
    %1416 = vmatprep.mubr.bf16.mxu0 0
    %1417 = vmatmul.mubr.bf16.gmra.mrb[0].mxu0 %v1328
    %v1418 = vpop.f32.mrb[0].mxu0
    %v1419 = vadd.f32 %v1307, %v1418
    %v1420 = vpop.f32.mrb[0].mxu0
    %v1421 = vadd.f32 %v1311, %v1420
    %v1422 = vpop.f32.mrb[0].mxu0
    %v1423 = vpop.f32.mrb[0].mxu0
    %1424 = vdwg.mxu0
    %v1425 = vsub.f32 0.0, %v1378
    %v1426 = vsub.f32 0.0, %v1380
    %v1427 = vsub.f32 0.0, %v1419
    %v1428 = vsub.f32 0.0, %v1421
    %v1429 = vmul.f32 %v1425, 1.442695
    %v1430 = vpow.pop %v1429
    %v1431 = vmul.f32 %v1426, 1.442695
    %v1432 = vpow.pop %v1431
    %v1433 = vmul.f32 %v1427, 1.442695
    %v1434 = vpow.pop %v1433
    %v1435 = vmul.f32 %v1428, 1.442695
    %v1436 = vpow.pop %v1435
    %v1437 = vadd.f32 %v1430, 1.0
    %v1438 = vadd.f32 %v1432, 1.0
    %v1439 = vadd.f32 %v1434, 1.0
    %v1440 = vadd.f32 %v1436, 1.0
    %v1441 = vrcp.pop %v1437
    %v1442 = vrcp.pop %v1438
    %v1443 = vrcp.pop %v1439
    %v1444 = vrcp.pop %v1440
    %v1445 = vmul.f32 %v1378, %v1441
    %v1446 = vmul.f32 %v1380, %v1442
    %v1447 = vmul.f32 %v1419, %v1443
    %v1448 = vmul.f32 %v1421, %v1444
    %v1449 = vpack.c.bf16 %v1445, %v1445
    %v1450 = vpack.c.bf16 %v1446, %v1446
    %v1451 = vpack.c.bf16 %v1447, %v1447
    %v1452 = vpack.c.bf16 %v1448, %v1448
    %v1453 = vld [vmem:[#allocation10] sm:$0xff]
    %v1454 = vld [vmem:[#allocation10 + $0x8] sm:$0xff]
    %v1455 = vld [vmem:[#allocation10 + $0x10] sm:$0xff]
    %v1456 = vld [vmem:[#allocation10 + $0x18] sm:$0xff]
    %v1457 = vld [vmem:[#allocation10 + $0x20] sm:$0xff]
    %v1458 = vld [vmem:[#allocation10 + $0x28] sm:$0xff]
    %v1459 = vld [vmem:[#allocation10 + $0x30] sm:$0xff]
    %v1460 = vld [vmem:[#allocation10 + $0x38] sm:$0xff]
    %v1461 = vld [vmem:[#allocation10 + $0x40] sm:$0xff]
    %v1462 = vld [vmem:[#allocation10 + $0x48] sm:$0xff]
    %v1463 = vld [vmem:[#allocation10 + $0x50] sm:$0xff]
    %v1464 = vld [vmem:[#allocation10 + $0x58] sm:$0xff]
    %v1465 = vld [vmem:[#allocation10 + $0x60] sm:$0xff]
    %v1466 = vld [vmem:[#allocation10 + $0x68] sm:$0xff]
    %v1467 = vld [vmem:[#allocation10 + $0x70] sm:$0xff]
    %v1468 = vld [vmem:[#allocation10 + $0x78] sm:$0xff]
    %v1469 = vld [vmem:[#allocation10 + $0x80] sm:$0xff]
    %v1470 = vld [vmem:[#allocation10 + $0x88] sm:$0xff]
    %v1471 = vld [vmem:[#allocation10 + $0x90] sm:$0xff]
    %v1472 = vld [vmem:[#allocation10 + $0x98] sm:$0xff]
    %v1473 = vld [vmem:[#allocation10 + $0xa0] sm:$0xff]
    %v1474 = vld [vmem:[#allocation10 + $0xa8] sm:$0xff]
    %v1475 = vld [vmem:[#allocation10 + $0xb0] sm:$0xff]
    %v1476 = vld [vmem:[#allocation10 + $0xb8] sm:$0xff]
    %v1477 = vld [vmem:[#allocation10 + $0xc0] sm:$0xff]
    %v1478 = vld [vmem:[#allocation10 + $0xc8] sm:$0xff]
    %v1479 = vld [vmem:[#allocation10 + $0xd0] sm:$0xff]
    %v1480 = vld [vmem:[#allocation10 + $0xd8] sm:$0xff]
    %v1481 = vld [vmem:[#allocation10 + $0xe0] sm:$0xff]
    %v1482 = vld [vmem:[#allocation10 + $0xe8] sm:$0xff]
    %v1483 = vld [vmem:[#allocation10 + $0xf0] sm:$0xff]
    %v1484 = vld [vmem:[#allocation10 + $0xf8] sm:$0xff]
    %v1485 = vld [vmem:[#allocation10 + $0x100] sm:$0xff]
    %v1486 = vld [vmem:[#allocation10 + $0x108] sm:$0xff]
    %v1487 = vld [vmem:[#allocation10 + $0x110] sm:$0xff]
    %v1488 = vld [vmem:[#allocation10 + $0x118] sm:$0xff]
    %v1489 = vld [vmem:[#allocation10 + $0x120] sm:$0xff]
    %v1490 = vld [vmem:[#allocation10 + $0x128] sm:$0xff]
    %v1491 = vld [vmem:[#allocation10 + $0x130] sm:$0xff]
    %v1492 = vld [vmem:[#allocation10 + $0x138] sm:$0xff]
    %v1493 = vld [vmem:[#allocation10 + $0x140] sm:$0xff]
    %v1494 = vld [vmem:[#allocation10 + $0x148] sm:$0xff]
    %v1495 = vld [vmem:[#allocation10 + $0x150] sm:$0xff]
    %v1496 = vld [vmem:[#allocation10 + $0x158] sm:$0xff]
    %v1497 = vld [vmem:[#allocation10 + $0x160] sm:$0xff]
    %v1498 = vld [vmem:[#allocation10 + $0x168] sm:$0xff]
    %v1499 = vld [vmem:[#allocation10 + $0x170] sm:$0xff]
    %v1500 = vld [vmem:[#allocation10 + $0x178] sm:$0xff]
    %v1501 = vld [vmem:[#allocation10 + $0x180] sm:$0xff]
    %v1502 = vld [vmem:[#allocation10 + $0x188] sm:$0xff]
    %v1503 = vld [vmem:[#allocation10 + $0x190] sm:$0xff]
    %v1504 = vld [vmem:[#allocation10 + $0x198] sm:$0xff]
    %v1505 = vld [vmem:[#allocation10 + $0x1a0] sm:$0xff]
    %v1506 = vld [vmem:[#allocation10 + $0x1a8] sm:$0xff]
    %v1507 = vld [vmem:[#allocation10 + $0x1b0] sm:$0xff]
    %v1508 = vld [vmem:[#allocation10 + $0x1b8] sm:$0xff]
    %v1509 = vld [vmem:[#allocation10 + $0x1c0] sm:$0xff]
    %v1510 = vld [vmem:[#allocation10 + $0x1c8] sm:$0xff]
    %v1511 = vld [vmem:[#allocation10 + $0x1d0] sm:$0xff]
    %v1512 = vld [vmem:[#allocation10 + $0x1d8] sm:$0xff]
    %v1513 = vld [vmem:[#allocation10 + $0x1e0] sm:$0xff]
    %v1514 = vld [vmem:[#allocation10 + $0x1e8] sm:$0xff]
    %v1515 = vld [vmem:[#allocation10 + $0x1f0] sm:$0xff]
    %v1516 = vld [vmem:[#allocation10 + $0x1f8] sm:$0xff]
    %v1517 = vld [vmem:[#allocation10 + $0x200] sm:$0xff]
    %v1518 = vld [vmem:[#allocation10 + $0x208] sm:$0xff]
    %v1519 = vld [vmem:[#allocation10 + $0x210] sm:$0xff]
    %v1520 = vld [vmem:[#allocation10 + $0x218] sm:$0xff]
    %v1521 = vld [vmem:[#allocation10 + $0x220] sm:$0xff]
    %v1522 = vld [vmem:[#allocation10 + $0x228] sm:$0xff]
    %v1523 = vld [vmem:[#allocation10 + $0x230] sm:$0xff]
    %v1524 = vld [vmem:[#allocation10 + $0x238] sm:$0xff]
    %v1525 = vld [vmem:[#allocation10 + $0x240] sm:$0xff]
    %v1526 = vld [vmem:[#allocation10 + $0x248] sm:$0xff]
    %v1527 = vld [vmem:[#allocation10 + $0x250] sm:$0xff]
    %v1528 = vld [vmem:[#allocation10 + $0x258] sm:$0xff]
    %v1529 = vld [vmem:[#allocation10 + $0x260] sm:$0xff]
    %v1530 = vld [vmem:[#allocation10 + $0x268] sm:$0xff]
    %v1531 = vld [vmem:[#allocation10 + $0x270] sm:$0xff]
    %v1532 = vld [vmem:[#allocation10 + $0x278] sm:$0xff]
    %v1533 = vld [vmem:[#allocation10 + $0x280] sm:$0xff]
    %v1534 = vld [vmem:[#allocation10 + $0x288] sm:$0xff]
    %v1535 = vld [vmem:[#allocation10 + $0x290] sm:$0xff]
    %v1536 = vld [vmem:[#allocation10 + $0x298] sm:$0xff]
    %v1537 = vld [vmem:[#allocation10 + $0x2a0] sm:$0xff]
    %v1538 = vld [vmem:[#allocation10 + $0x2a8] sm:$0xff]
    %v1539 = vld [vmem:[#allocation10 + $0x2b0] sm:$0xff]
    %v1540 = vld [vmem:[#allocation10 + $0x2b8] sm:$0xff]
    %v1541 = vld [vmem:[#allocation10 + $0x2c0] sm:$0xff]
    %v1542 = vld [vmem:[#allocation10 + $0x2c8] sm:$0xff]
    %v1543 = vld [vmem:[#allocation10 + $0x2d0] sm:$0xff]
    %v1544 = vld [vmem:[#allocation10 + $0x2d8] sm:$0xff]
    %v1545 = vld [vmem:[#allocation10 + $0x2e0] sm:$0xff]
    %v1546 = vld [vmem:[#allocation10 + $0x2e8] sm:$0xff]
    %v1547 = vld [vmem:[#allocation10 + $0x2f0] sm:$0xff]
    %v1548 = vld [vmem:[#allocation10 + $0x2f8] sm:$0xff]
    %v1549 = vld [vmem:[#allocation10 + $0x300] sm:$0xff]
    %v1550 = vld [vmem:[#allocation10 + $0x308] sm:$0xff]
    %v1551 = vld [vmem:[#allocation10 + $0x310] sm:$0xff]
    %v1552 = vld [vmem:[#allocation10 + $0x318] sm:$0xff]
    %v1553 = vld [vmem:[#allocation10 + $0x320] sm:$0xff]
    %v1554 = vld [vmem:[#allocation10 + $0x328] sm:$0xff]
    %v1555 = vld [vmem:[#allocation10 + $0x330] sm:$0xff]
    %v1556 = vld [vmem:[#allocation10 + $0x338] sm:$0xff]
    %v1557 = vld [vmem:[#allocation10 + $0x340] sm:$0xff]
    %v1558 = vld [vmem:[#allocation10 + $0x348] sm:$0xff]
    %v1559 = vld [vmem:[#allocation10 + $0x350] sm:$0xff]
    %v1560 = vld [vmem:[#allocation10 + $0x358] sm:$0xff]
    %v1561 = vld [vmem:[#allocation10 + $0x360] sm:$0xff]
    %v1562 = vld [vmem:[#allocation10 + $0x368] sm:$0xff]
    %v1563 = vld [vmem:[#allocation10 + $0x370] sm:$0xff]
    %v1564 = vld [vmem:[#allocation10 + $0x378] sm:$0xff]
    %v1565 = vld [vmem:[#allocation10 + $0x380] sm:$0xff]
    %v1566 = vld [vmem:[#allocation10 + $0x388] sm:$0xff]
    %v1567 = vld [vmem:[#allocation10 + $0x390] sm:$0xff]
    %v1568 = vld [vmem:[#allocation10 + $0x398] sm:$0xff]
    %v1569 = vld [vmem:[#allocation10 + $0x3a0] sm:$0xff]
    %v1570 = vld [vmem:[#allocation10 + $0x3a8] sm:$0xff]
    %v1571 = vld [vmem:[#allocation10 + $0x3b0] sm:$0xff]
    %v1572 = vld [vmem:[#allocation10 + $0x3b8] sm:$0xff]
    %v1573 = vld [vmem:[#allocation10 + $0x3c0] sm:$0xff]
    %v1574 = vld [vmem:[#allocation10 + $0x3c8] sm:$0xff]
    %v1575 = vld [vmem:[#allocation10 + $0x3d0] sm:$0xff]
    %v1576 = vld [vmem:[#allocation10 + $0x3d8] sm:$0xff]
    %v1577 = vld [vmem:[#allocation10 + $0x3e0] sm:$0xff]
    %v1578 = vld [vmem:[#allocation10 + $0x3e8] sm:$0xff]
    %v1579 = vld [vmem:[#allocation10 + $0x3f0] sm:$0xff]
    %v1580 = vld [vmem:[#allocation10 + $0x3f8] sm:$0xff]
    %v1581 = vpack.c.bf16 %v1288, %v1288
    %v1582 = vpack.c.bf16 %v1289, %v1289
    %v1583 = vpack.c.bf16 %v1290, %v1290
    %v1584 = vpack.c.bf16 %v1291, %v1291
    %v1585 = vld [vmem:[#allocation11] sm:$0xff]
    %v1586 = vld [vmem:[#allocation11 + $0x8] sm:$0xff]
    %v1587 = vld [vmem:[#allocation11 + $0x10] sm:$0xff]
    %v1588 = vld [vmem:[#allocation11 + $0x18] sm:$0xff]
    %v1589 = vld [vmem:[#allocation11 + $0x20] sm:$0xff]
    %v1590 = vld [vmem:[#allocation11 + $0x28] sm:$0xff]
    %v1591 = vld [vmem:[#allocation11 + $0x30] sm:$0xff]
    %v1592 = vld [vmem:[#allocation11 + $0x38] sm:$0xff]
    %v1593 = vld [vmem:[#allocation11 + $0x40] sm:$0xff]
    %v1594 = vld [vmem:[#allocation11 + $0x48] sm:$0xff]
    %v1595 = vld [vmem:[#allocation11 + $0x50] sm:$0xff]
    %v1596 = vld [vmem:[#allocation11 + $0x58] sm:$0xff]
    %v1597 = vld [vmem:[#allocation11 + $0x60] sm:$0xff]
    %v1598 = vld [vmem:[#allocation11 + $0x68] sm:$0xff]
    %v1599 = vld [vmem:[#allocation11 + $0x70] sm:$0xff]
    %v1600 = vld [vmem:[#allocation11 + $0x78] sm:$0xff]
    %v1601 = vld [vmem:[#allocation11 + $0x80] sm:$0xff]
    %v1602 = vld [vmem:[#allocation11 + $0x88] sm:$0xff]
    %v1603 = vld [vmem:[#allocation11 + $0x90] sm:$0xff]
    %v1604 = vld [vmem:[#allocation11 + $0x98] sm:$0xff]
    %v1605 = vld [vmem:[#allocation11 + $0xa0] sm:$0xff]
    %v1606 = vld [vmem:[#allocation11 + $0xa8] sm:$0xff]
    %v1607 = vld [vmem:[#allocation11 + $0xb0] sm:$0xff]
    %v1608 = vld [vmem:[#allocation11 + $0xb8] sm:$0xff]
    %v1609 = vld [vmem:[#allocation11 + $0xc0] sm:$0xff]
    %v1610 = vld [vmem:[#allocation11 + $0xc8] sm:$0xff]
    %v1611 = vld [vmem:[#allocation11 + $0xd0] sm:$0xff]
    %v1612 = vld [vmem:[#allocation11 + $0xd8] sm:$0xff]
    %v1613 = vld [vmem:[#allocation11 + $0xe0] sm:$0xff]
    %v1614 = vld [vmem:[#allocation11 + $0xe8] sm:$0xff]
    %v1615 = vld [vmem:[#allocation11 + $0xf0] sm:$0xff]
    %v1616 = vld [vmem:[#allocation11 + $0xf8] sm:$0xff]
    %v1617 = vld [vmem:[#allocation11 + $0x100] sm:$0xff]
    %v1618 = vld [vmem:[#allocation11 + $0x108] sm:$0xff]
    %v1619 = vld [vmem:[#allocation11 + $0x110] sm:$0xff]
    %v1620 = vld [vmem:[#allocation11 + $0x118] sm:$0xff]
    %v1621 = vld [vmem:[#allocation11 + $0x120] sm:$0xff]
    %v1622 = vld [vmem:[#allocation11 + $0x128] sm:$0xff]
    %v1623 = vld [vmem:[#allocation11 + $0x130] sm:$0xff]
    %v1624 = vld [vmem:[#allocation11 + $0x138] sm:$0xff]
    %v1625 = vld [vmem:[#allocation11 + $0x140] sm:$0xff]
    %v1626 = vld [vmem:[#allocation11 + $0x148] sm:$0xff]
    %v1627 = vld [vmem:[#allocation11 + $0x150] sm:$0xff]
    %v1628 = vld [vmem:[#allocation11 + $0x158] sm:$0xff]
    %v1629 = vld [vmem:[#allocation11 + $0x160] sm:$0xff]
    %v1630 = vld [vmem:[#allocation11 + $0x168] sm:$0xff]
    %v1631 = vld [vmem:[#allocation11 + $0x170] sm:$0xff]
    %v1632 = vld [vmem:[#allocation11 + $0x178] sm:$0xff]
    %v1633 = vld [vmem:[#allocation11 + $0x180] sm:$0xff]
    %v1634 = vld [vmem:[#allocation11 + $0x188] sm:$0xff]
    %v1635 = vld [vmem:[#allocation11 + $0x190] sm:$0xff]
    %v1636 = vld [vmem:[#allocation11 + $0x198] sm:$0xff]
    %v1637 = vld [vmem:[#allocation11 + $0x1a0] sm:$0xff]
    %v1638 = vld [vmem:[#allocation11 + $0x1a8] sm:$0xff]
    %v1639 = vld [vmem:[#allocation11 + $0x1b0] sm:$0xff]
    %v1640 = vld [vmem:[#allocation11 + $0x1b8] sm:$0xff]
    %v1641 = vld [vmem:[#allocation11 + $0x1c0] sm:$0xff]
    %v1642 = vld [vmem:[#allocation11 + $0x1c8] sm:$0xff]
    %v1643 = vld [vmem:[#allocation11 + $0x1d0] sm:$0xff]
    %v1644 = vld [vmem:[#allocation11 + $0x1d8] sm:$0xff]
    %v1645 = vld [vmem:[#allocation11 + $0x1e0] sm:$0xff]
    %v1646 = vld [vmem:[#allocation11 + $0x1e8] sm:$0xff]
    %v1647 = vld [vmem:[#allocation11 + $0x1f0] sm:$0xff]
    %v1648 = vld [vmem:[#allocation11 + $0x1f8] sm:$0xff]
    %v1649 = vld [vmem:[#allocation11 + $0x200] sm:$0xff]
    %v1650 = vld [vmem:[#allocation11 + $0x208] sm:$0xff]
    %v1651 = vld [vmem:[#allocation11 + $0x210] sm:$0xff]
    %v1652 = vld [vmem:[#allocation11 + $0x218] sm:$0xff]
    %v1653 = vld [vmem:[#allocation11 + $0x220] sm:$0xff]
    %v1654 = vld [vmem:[#allocation11 + $0x228] sm:$0xff]
    %v1655 = vld [vmem:[#allocation11 + $0x230] sm:$0xff]
    %v1656 = vld [vmem:[#allocation11 + $0x238] sm:$0xff]
    %v1657 = vld [vmem:[#allocation11 + $0x240] sm:$0xff]
    %v1658 = vld [vmem:[#allocation11 + $0x248] sm:$0xff]
    %v1659 = vld [vmem:[#allocation11 + $0x250] sm:$0xff]
    %v1660 = vld [vmem:[#allocation11 + $0x258] sm:$0xff]
    %v1661 = vld [vmem:[#allocation11 + $0x260] sm:$0xff]
    %v1662 = vld [vmem:[#allocation11 + $0x268] sm:$0xff]
    %v1663 = vld [vmem:[#allocation11 + $0x270] sm:$0xff]
    %v1664 = vld [vmem:[#allocation11 + $0x278] sm:$0xff]
    %v1665 = vld [vmem:[#allocation11 + $0x280] sm:$0xff]
    %v1666 = vld [vmem:[#allocation11 + $0x288] sm:$0xff]
    %v1667 = vld [vmem:[#allocation11 + $0x290] sm:$0xff]
    %v1668 = vld [vmem:[#allocation11 + $0x298] sm:$0xff]
    %v1669 = vld [vmem:[#allocation11 + $0x2a0] sm:$0xff]
    %v1670 = vld [vmem:[#allocation11 + $0x2a8] sm:$0xff]
    %v1671 = vld [vmem:[#allocation11 + $0x2b0] sm:$0xff]
    %v1672 = vld [vmem:[#allocation11 + $0x2b8] sm:$0xff]
    %v1673 = vld [vmem:[#allocation11 + $0x2c0] sm:$0xff]
    %v1674 = vld [vmem:[#allocation11 + $0x2c8] sm:$0xff]
    %v1675 = vld [vmem:[#allocation11 + $0x2d0] sm:$0xff]
    %v1676 = vld [vmem:[#allocation11 + $0x2d8] sm:$0xff]
    %v1677 = vld [vmem:[#allocation11 + $0x2e0] sm:$0xff]
    %v1678 = vld [vmem:[#allocation11 + $0x2e8] sm:$0xff]
    %v1679 = vld [vmem:[#allocation11 + $0x2f0] sm:$0xff]
    %v1680 = vld [vmem:[#allocation11 + $0x2f8] sm:$0xff]
    %v1681 = vld [vmem:[#allocation11 + $0x300] sm:$0xff]
    %v1682 = vld [vmem:[#allocation11 + $0x308] sm:$0xff]
    %v1683 = vld [vmem:[#allocation11 + $0x310] sm:$0xff]
    %v1684 = vld [vmem:[#allocation11 + $0x318] sm:$0xff]
    %v1685 = vld [vmem:[#allocation11 + $0x320] sm:$0xff]
    %v1686 = vld [vmem:[#allocation11 + $0x328] sm:$0xff]
    %v1687 = vld [vmem:[#allocation11 + $0x330] sm:$0xff]
    %v1688 = vld [vmem:[#allocation11 + $0x338] sm:$0xff]
    %v1689 = vld [vmem:[#allocation11 + $0x340] sm:$0xff]
    %v1690 = vld [vmem:[#allocation11 + $0x348] sm:$0xff]
    %v1691 = vld [vmem:[#allocation11 + $0x350] sm:$0xff]
    %v1692 = vld [vmem:[#allocation11 + $0x358] sm:$0xff]
    %v1693 = vld [vmem:[#allocation11 + $0x360] sm:$0xff]
    %v1694 = vld [vmem:[#allocation11 + $0x368] sm:$0xff]
    %v1695 = vld [vmem:[#allocation11 + $0x370] sm:$0xff]
    %v1696 = vld [vmem:[#allocation11 + $0x378] sm:$0xff]
    %v1697 = vld [vmem:[#allocation11 + $0x380] sm:$0xff]
    %v1698 = vld [vmem:[#allocation11 + $0x388] sm:$0xff]
    %v1699 = vld [vmem:[#allocation11 + $0x390] sm:$0xff]
    %v1700 = vld [vmem:[#allocation11 + $0x398] sm:$0xff]
    %v1701 = vld [vmem:[#allocation11 + $0x3a0] sm:$0xff]
    %v1702 = vld [vmem:[#allocation11 + $0x3a8] sm:$0xff]
    %v1703 = vld [vmem:[#allocation11 + $0x3b0] sm:$0xff]
    %v1704 = vld [vmem:[#allocation11 + $0x3b8] sm:$0xff]
    %v1705 = vld [vmem:[#allocation11 + $0x3c0] sm:$0xff]
    %v1706 = vld [vmem:[#allocation11 + $0x3c8] sm:$0xff]
    %v1707 = vld [vmem:[#allocation11 + $0x3d0] sm:$0xff]
    %v1708 = vld [vmem:[#allocation11 + $0x3d8] sm:$0xff]
    %v1709 = vld [vmem:[#allocation11 + $0x3e0] sm:$0xff]
    %v1710 = vld [vmem:[#allocation11 + $0x3e8] sm:$0xff]
    %v1711 = vld [vmem:[#allocation11 + $0x3f0] sm:$0xff]
    %v1712 = vld [vmem:[#allocation11 + $0x3f8] sm:$0xff]
    %v1841 = vunpack.c.l.b16 %v1585
    %v1842 = vunpack.c.h.b16 %v1585
    %v1843 = vunpack.c.l.b16 %v1586
    %v1844 = vunpack.c.h.b16 %v1586
    %v1845 = vunpack.c.l.b16 %v1587
    %v1846 = vunpack.c.h.b16 %v1587
    %v1847 = vunpack.c.l.b16 %v1588
    %v1848 = vunpack.c.h.b16 %v1588
    %v1849 = vunpack.c.l.b16 %v1589
    %v1850 = vunpack.c.h.b16 %v1589
    %v1851 = vunpack.c.l.b16 %v1590
    %v1852 = vunpack.c.h.b16 %v1590
    %v1853 = vunpack.c.l.b16 %v1591
    %v1854 = vunpack.c.h.b16 %v1591
    %v1855 = vunpack.c.l.b16 %v1592
    %v1856 = vunpack.c.h.b16 %v1592
    %v1857 = vunpack.c.l.b16 %v1593
    %v1858 = vunpack.c.h.b16 %v1593
    %v1859 = vunpack.c.l.b16 %v1594
    %v1860 = vunpack.c.h.b16 %v1594
    %v1861 = vunpack.c.l.b16 %v1595
    %v1862 = vunpack.c.h.b16 %v1595
    %v1863 = vunpack.c.l.b16 %v1596
    %v1864 = vunpack.c.h.b16 %v1596
    %v1865 = vunpack.c.l.b16 %v1597
    %v1866 = vunpack.c.h.b16 %v1597
    %v1867 = vunpack.c.l.b16 %v1598
    %v1868 = vunpack.c.h.b16 %v1598
    %v1869 = vunpack.c.l.b16 %v1599
    %v1870 = vunpack.c.h.b16 %v1599
    %v1871 = vunpack.c.l.b16 %v1600
    %v1872 = vunpack.c.h.b16 %v1600
    %v1873 = vunpack.c.l.b16 %v1601
    %v1874 = vunpack.c.h.b16 %v1601
    %v1875 = vunpack.c.l.b16 %v1602
    %v1876 = vunpack.c.h.b16 %v1602
    %v1877 = vunpack.c.l.b16 %v1603
    %v1878 = vunpack.c.h.b16 %v1603
    %v1879 = vunpack.c.l.b16 %v1604
    %v1880 = vunpack.c.h.b16 %v1604
    %v1881 = vunpack.c.l.b16 %v1605
    %v1882 = vunpack.c.h.b16 %v1605
    %v1883 = vunpack.c.l.b16 %v1606
    %v1884 = vunpack.c.h.b16 %v1606
    %v1885 = vunpack.c.l.b16 %v1607
    %v1886 = vunpack.c.h.b16 %v1607
    %v1887 = vunpack.c.l.b16 %v1608
    %v1888 = vunpack.c.h.b16 %v1608
    %v1889 = vunpack.c.l.b16 %v1609
    %v1890 = vunpack.c.h.b16 %v1609
    %v1891 = vunpack.c.l.b16 %v1610
    %v1892 = vunpack.c.h.b16 %v1610
    %v1893 = vunpack.c.l.b16 %v1611
    %v1894 = vunpack.c.h.b16 %v1611
    %v1895 = vunpack.c.l.b16 %v1612
    %v1896 = vunpack.c.h.b16 %v1612
    %v1897 = vunpack.c.l.b16 %v1613
    %v1898 = vunpack.c.h.b16 %v1613
    %v1899 = vunpack.c.l.b16 %v1614
    %v1900 = vunpack.c.h.b16 %v1614
    %v1901 = vunpack.c.l.b16 %v1615
    %v1902 = vunpack.c.h.b16 %v1615
    %v1903 = vunpack.c.l.b16 %v1616
    %v1904 = vunpack.c.h.b16 %v1616
    %v1905 = vunpack.c.l.b16 %v1617
    %v1906 = vunpack.c.h.b16 %v1617
    %v1907 = vunpack.c.l.b16 %v1618
    %v1908 = vunpack.c.h.b16 %v1618
    %v1909 = vunpack.c.l.b16 %v1619
    %v1910 = vunpack.c.h.b16 %v1619
    %v1911 = vunpack.c.l.b16 %v1620
    %v1912 = vunpack.c.h.b16 %v1620
    %v1913 = vunpack.c.l.b16 %v1621
    %v1914 = vunpack.c.h.b16 %v1621
    %v1915 = vunpack.c.l.b16 %v1622
    %v1916 = vunpack.c.h.b16 %v1622
    %v1917 = vunpack.c.l.b16 %v1623
    %v1918 = vunpack.c.h.b16 %v1623
    %v1919 = vunpack.c.l.b16 %v1624
    %v1920 = vunpack.c.h.b16 %v1624
    %v1921 = vunpack.c.l.b16 %v1625
    %v1922 = vunpack.c.h.b16 %v1625
    %v1923 = vunpack.c.l.b16 %v1626
    %v1924 = vunpack.c.h.b16 %v1626
    %v1925 = vunpack.c.l.b16 %v1627
    %v1926 = vunpack.c.h.b16 %v1627
    %v1927 = vunpack.c.l.b16 %v1628
    %v1928 = vunpack.c.h.b16 %v1628
    %v1929 = vunpack.c.l.b16 %v1629
    %v1930 = vunpack.c.h.b16 %v1629
    %v1931 = vunpack.c.l.b16 %v1630
    %v1932 = vunpack.c.h.b16 %v1630
    %v1933 = vunpack.c.l.b16 %v1631
    %v1934 = vunpack.c.h.b16 %v1631
    %v1935 = vunpack.c.l.b16 %v1632
    %v1936 = vunpack.c.h.b16 %v1632
    %v1937 = vunpack.c.l.b16 %v1633
    %v1938 = vunpack.c.h.b16 %v1633
    %v1939 = vunpack.c.l.b16 %v1634
    %v1940 = vunpack.c.h.b16 %v1634
    %v1941 = vunpack.c.l.b16 %v1635
    %v1942 = vunpack.c.h.b16 %v1635
    %v1943 = vunpack.c.l.b16 %v1636
    %v1944 = vunpack.c.h.b16 %v1636
    %v1945 = vunpack.c.l.b16 %v1637
    %v1946 = vunpack.c.h.b16 %v1637
    %v1947 = vunpack.c.l.b16 %v1638
    %v1948 = vunpack.c.h.b16 %v1638
    %v1949 = vunpack.c.l.b16 %v1639
    %v1950 = vunpack.c.h.b16 %v1639
    %v1951 = vunpack.c.l.b16 %v1640
    %v1952 = vunpack.c.h.b16 %v1640
    %v1953 = vunpack.c.l.b16 %v1641
    %v1954 = vunpack.c.h.b16 %v1641
    %v1955 = vunpack.c.l.b16 %v1642
    %v1956 = vunpack.c.h.b16 %v1642
    %v1957 = vunpack.c.l.b16 %v1643
    %v1958 = vunpack.c.h.b16 %v1643
    %v1959 = vunpack.c.l.b16 %v1644
    %v1960 = vunpack.c.h.b16 %v1644
    %v1961 = vunpack.c.l.b16 %v1645
    %v1962 = vunpack.c.h.b16 %v1645
    %v1963 = vunpack.c.l.b16 %v1646
    %v1964 = vunpack.c.h.b16 %v1646
    %v1965 = vunpack.c.l.b16 %v1647
    %v1966 = vunpack.c.h.b16 %v1647
    %v1967 = vunpack.c.l.b16 %v1648
    %v1968 = vunpack.c.h.b16 %v1648
    %v1969 = vunpack.c.l.b16 %v1649
    %v1970 = vunpack.c.h.b16 %v1649
    %v1971 = vunpack.c.l.b16 %v1650
    %v1972 = vunpack.c.h.b16 %v1650
    %v1973 = vunpack.c.l.b16 %v1651
    %v1974 = vunpack.c.h.b16 %v1651
    %v1975 = vunpack.c.l.b16 %v1652
    %v1976 = vunpack.c.h.b16 %v1652
    %v1977 = vunpack.c.l.b16 %v1653
    %v1978 = vunpack.c.h.b16 %v1653
    %v1979 = vunpack.c.l.b16 %v1654
    %v1980 = vunpack.c.h.b16 %v1654
    %v1981 = vunpack.c.l.b16 %v1655
    %v1982 = vunpack.c.h.b16 %v1655
    %v1983 = vunpack.c.l.b16 %v1656
    %v1984 = vunpack.c.h.b16 %v1656
    %v1985 = vunpack.c.l.b16 %v1657
    %v1986 = vunpack.c.h.b16 %v1657
    %v1987 = vunpack.c.l.b16 %v1658
    %v1988 = vunpack.c.h.b16 %v1658
    %v1989 = vunpack.c.l.b16 %v1659
    %v1990 = vunpack.c.h.b16 %v1659
    %v1991 = vunpack.c.l.b16 %v1660
    %v1992 = vunpack.c.h.b16 %v1660
    %v1993 = vunpack.c.l.b16 %v1661
    %v1994 = vunpack.c.h.b16 %v1661
    %v1995 = vunpack.c.l.b16 %v1662
    %v1996 = vunpack.c.h.b16 %v1662
    %v1997 = vunpack.c.l.b16 %v1663
    %v1998 = vunpack.c.h.b16 %v1663
    %v1999 = vunpack.c.l.b16 %v1664
    %v2000 = vunpack.c.h.b16 %v1664
    %v2001 = vunpack.c.l.b16 %v1665
    %v2002 = vunpack.c.h.b16 %v1665
    %v2003 = vunpack.c.l.b16 %v1666
    %v2004 = vunpack.c.h.b16 %v1666
    %v2005 = vunpack.c.l.b16 %v1667
    %v2006 = vunpack.c.h.b16 %v1667
    %v2007 = vunpack.c.l.b16 %v1668
    %v2008 = vunpack.c.h.b16 %v1668
    %v2009 = vunpack.c.l.b16 %v1669
    %v2010 = vunpack.c.h.b16 %v1669
    %v2011 = vunpack.c.l.b16 %v1670
    %v2012 = vunpack.c.h.b16 %v1670
    %v2013 = vunpack.c.l.b16 %v1671
    %v2014 = vunpack.c.h.b16 %v1671
    %v2015 = vunpack.c.l.b16 %v1672
    %v2016 = vunpack.c.h.b16 %v1672
    %v2017 = vunpack.c.l.b16 %v1673
    %v2018 = vunpack.c.h.b16 %v1673
    %v2019 = vunpack.c.l.b16 %v1674
    %v2020 = vunpack.c.h.b16 %v1674
    %v2021 = vunpack.c.l.b16 %v1675
    %v2022 = vunpack.c.h.b16 %v1675
    %v2023 = vunpack.c.l.b16 %v1676
    %v2024 = vunpack.c.h.b16 %v1676
    %v2025 = vunpack.c.l.b16 %v1677
    %v2026 = vunpack.c.h.b16 %v1677
    %v2027 = vunpack.c.l.b16 %v1678
    %v2028 = vunpack.c.h.b16 %v1678
    %v2029 = vunpack.c.l.b16 %v1679
    %v2030 = vunpack.c.h.b16 %v1679
    %v2031 = vunpack.c.l.b16 %v1680
    %v2032 = vunpack.c.h.b16 %v1680
    %v2033 = vunpack.c.l.b16 %v1681
    %v2034 = vunpack.c.h.b16 %v1681
    %v2035 = vunpack.c.l.b16 %v1682
    %v2036 = vunpack.c.h.b16 %v1682
    %v2037 = vunpack.c.l.b16 %v1683
    %v2038 = vunpack.c.h.b16 %v1683
    %v2039 = vunpack.c.l.b16 %v1684
    %v2040 = vunpack.c.h.b16 %v1684
    %v2041 = vunpack.c.l.b16 %v1685
    %v2042 = vunpack.c.h.b16 %v1685
    %v2043 = vunpack.c.l.b16 %v1686
    %v2044 = vunpack.c.h.b16 %v1686
    %v2045 = vunpack.c.l.b16 %v1687
    %v2046 = vunpack.c.h.b16 %v1687
    %v2047 = vunpack.c.l.b16 %v1688
    %v2048 = vunpack.c.h.b16 %v1688
    %v2049 = vunpack.c.l.b16 %v1689
    %v2050 = vunpack.c.h.b16 %v1689
    %v2051 = vunpack.c.l.b16 %v1690
    %v2052 = vunpack.c.h.b16 %v1690
    %v2053 = vunpack.c.l.b16 %v1691
    %v2054 = vunpack.c.h.b16 %v1691
    %v2055 = vunpack.c.l.b16 %v1692
    %v2056 = vunpack.c.h.b16 %v1692
    %v2057 = vunpack.c.l.b16 %v1693
    %v2058 = vunpack.c.h.b16 %v1693
    %v2059 = vunpack.c.l.b16 %v1694
    %v2060 = vunpack.c.h.b16 %v1694
    %v2061 = vunpack.c.l.b16 %v1695
    %v2062 = vunpack.c.h.b16 %v1695
    %v2063 = vunpack.c.l.b16 %v1696
    %v2064 = vunpack.c.h.b16 %v1696
    %v2065 = vunpack.c.l.b16 %v1697
    %v2066 = vunpack.c.h.b16 %v1697
    %v2067 = vunpack.c.l.b16 %v1698
    %v2068 = vunpack.c.h.b16 %v1698
    %v2069 = vunpack.c.l.b16 %v1699
    %v2070 = vunpack.c.h.b16 %v1699
    %v2071 = vunpack.c.l.b16 %v1700
    %v2072 = vunpack.c.h.b16 %v1700
    %v2073 = vunpack.c.l.b16 %v1701
    %v2074 = vunpack.c.h.b16 %v1701
    %v2075 = vunpack.c.l.b16 %v1702
    %v2076 = vunpack.c.h.b16 %v1702
    %v2077 = vunpack.c.l.b16 %v1703
    %v2078 = vunpack.c.h.b16 %v1703
    %v2079 = vunpack.c.l.b16 %v1704
    %v2080 = vunpack.c.h.b16 %v1704
    %v2081 = vunpack.c.l.b16 %v1705
    %v2082 = vunpack.c.h.b16 %v1705
    %v2083 = vunpack.c.l.b16 %v1706
    %v2084 = vunpack.c.h.b16 %v1706
    %v2085 = vunpack.c.l.b16 %v1707
    %v2086 = vunpack.c.h.b16 %v1707
    %v2087 = vunpack.c.l.b16 %v1708
    %v2088 = vunpack.c.h.b16 %v1708
    %v2089 = vunpack.c.l.b16 %v1709
    %v2090 = vunpack.c.h.b16 %v1709
    %v2091 = vunpack.c.l.b16 %v1710
    %v2092 = vunpack.c.h.b16 %v1710
    %v2093 = vunpack.c.l.b16 %v1711
    %v2094 = vunpack.c.h.b16 %v1711
    %v2095 = vunpack.c.l.b16 %v1712
    %v2096 = vunpack.c.h.b16 %v1712
    %v2097 = vpack.c.b16 %v1845, %v1841
    %v2098 = vpack.c.b16 %v1846, %v1842
    %v2099 = vpack.c.b16 %v1847, %v1843
    %v2100 = vpack.c.b16 %v1848, %v1844
    %v2101 = vpack.c.b16 %v1853, %v1849
    %v2102 = vpack.c.b16 %v1854, %v1850
    %v2103 = vpack.c.b16 %v1855, %v1851
    %v2104 = vpack.c.b16 %v1856, %v1852
    %v2105 = vpack.c.b16 %v1861, %v1857
    %v2106 = vpack.c.b16 %v1862, %v1858
    %v2107 = vpack.c.b16 %v1863, %v1859
    %v2108 = vpack.c.b16 %v1864, %v1860
    %v2109 = vpack.c.b16 %v1869, %v1865
    %v2110 = vpack.c.b16 %v1870, %v1866
    %v2111 = vpack.c.b16 %v1871, %v1867
    %v2112 = vpack.c.b16 %v1872, %v1868
    %v2113 = vpack.c.b16 %v1877, %v1873
    %v2114 = vpack.c.b16 %v1878, %v1874
    %v2115 = vpack.c.b16 %v1879, %v1875
    %v2116 = vpack.c.b16 %v1880, %v1876
    %v2117 = vpack.c.b16 %v1885, %v1881
    %v2118 = vpack.c.b16 %v1886, %v1882
    %v2119 = vpack.c.b16 %v1887, %v1883
    %v2120 = vpack.c.b16 %v1888, %v1884
    %v2121 = vpack.c.b16 %v1893, %v1889
    %v2122 = vpack.c.b16 %v1894, %v1890
    %v2123 = vpack.c.b16 %v1895, %v1891
    %v2124 = vpack.c.b16 %v1896, %v1892
    %v2125 = vpack.c.b16 %v1901, %v1897
    %v2126 = vpack.c.b16 %v1902, %v1898
    %v2127 = vpack.c.b16 %v1903, %v1899
    %v2128 = vpack.c.b16 %v1904, %v1900
    %v2129 = vpack.c.b16 %v1909, %v1905
    %v2130 = vpack.c.b16 %v1910, %v1906
    %v2131 = vpack.c.b16 %v1911, %v1907
    %v2132 = vpack.c.b16 %v1912, %v1908
    %v2133 = vpack.c.b16 %v1917, %v1913
    %v2134 = vpack.c.b16 %v1918, %v1914
    %v2135 = vpack.c.b16 %v1919, %v1915
    %v2136 = vpack.c.b16 %v1920, %v1916
    %v2137 = vpack.c.b16 %v1925, %v1921
    %v2138 = vpack.c.b16 %v1926, %v1922
    %v2139 = vpack.c.b16 %v1927, %v1923
    %v2140 = vpack.c.b16 %v1928, %v1924
    %v2141 = vpack.c.b16 %v1933, %v1929
    %v2142 = vpack.c.b16 %v1934, %v1930
    %v2143 = vpack.c.b16 %v1935, %v1931
    %v2144 = vpack.c.b16 %v1936, %v1932
    %v2145 = vpack.c.b16 %v1941, %v1937
    %v2146 = vpack.c.b16 %v1942, %v1938
    %v2147 = vpack.c.b16 %v1943, %v1939
    %v2148 = vpack.c.b16 %v1944, %v1940
    %v2149 = vpack.c.b16 %v1949, %v1945
    %v2150 = vpack.c.b16 %v1950, %v1946
    %v2151 = vpack.c.b16 %v1951, %v1947
    %v2152 = vpack.c.b16 %v1952, %v1948
    %v2153 = vpack.c.b16 %v1957, %v1953
    %v2154 = vpack.c.b16 %v1958, %v1954
    %v2155 = vpack.c.b16 %v1959, %v1955
    %v2156 = vpack.c.b16 %v1960, %v1956
    %v2157 = vpack.c.b16 %v1965, %v1961
    %v2158 = vpack.c.b16 %v1966, %v1962
    %v2159 = vpack.c.b16 %v1967, %v1963
    %v2160 = vpack.c.b16 %v1968, %v1964
    %v2161 = vpack.c.b16 %v1973, %v1969
    %v2162 = vpack.c.b16 %v1974, %v1970
    %v2163 = vpack.c.b16 %v1975, %v1971
    %v2164 = vpack.c.b16 %v1976, %v1972
    %v2165 = vpack.c.b16 %v1981, %v1977
    %v2166 = vpack.c.b16 %v1982, %v1978
    %v2167 = vpack.c.b16 %v1983, %v1979
    %v2168 = vpack.c.b16 %v1984, %v1980
    %v2169 = vpack.c.b16 %v1989, %v1985
    %v2170 = vpack.c.b16 %v1990, %v1986
    %v2171 = vpack.c.b16 %v1991, %v1987
    %v2172 = vpack.c.b16 %v1992, %v1988
    %v2173 = vpack.c.b16 %v1997, %v1993
    %v2174 = vpack.c.b16 %v1998, %v1994
    %v2175 = vpack.c.b16 %v1999, %v1995
    %v2176 = vpack.c.b16 %v2000, %v1996
    %v2177 = vpack.c.b16 %v2005, %v2001
    %v2178 = vpack.c.b16 %v2006, %v2002
    %v2179 = vpack.c.b16 %v2007, %v2003
    %v2180 = vpack.c.b16 %v2008, %v2004
    %v2181 = vpack.c.b16 %v2013, %v2009
    %v2182 = vpack.c.b16 %v2014, %v2010
    %v2183 = vpack.c.b16 %v2015, %v2011
    %v2184 = vpack.c.b16 %v2016, %v2012
    %v2185 = vpack.c.b16 %v2021, %v2017
    %v2186 = vpack.c.b16 %v2022, %v2018
    %v2187 = vpack.c.b16 %v2023, %v2019
    %v2188 = vpack.c.b16 %v2024, %v2020
    %v2189 = vpack.c.b16 %v2029, %v2025
    %v2190 = vpack.c.b16 %v2030, %v2026
    %v2191 = vpack.c.b16 %v2031, %v2027
    %v2192 = vpack.c.b16 %v2032, %v2028
    %v2193 = vpack.c.b16 %v2037, %v2033
    %v2194 = vpack.c.b16 %v2038, %v2034
    %v2195 = vpack.c.b16 %v2039, %v2035
    %v2196 = vpack.c.b16 %v2040, %v2036
    %v2197 = vpack.c.b16 %v2045, %v2041
    %v2198 = vpack.c.b16 %v2046, %v2042
    %v2199 = vpack.c.b16 %v2047, %v2043
    %v2200 = vpack.c.b16 %v2048, %v2044
    %v2201 = vpack.c.b16 %v2053, %v2049
    %v2202 = vpack.c.b16 %v2054, %v2050
    %v2203 = vpack.c.b16 %v2055, %v2051
    %v2204 = vpack.c.b16 %v2056, %v2052
    %v2205 = vpack.c.b16 %v2061, %v2057
    %v2206 = vpack.c.b16 %v2062, %v2058
    %v2207 = vpack.c.b16 %v2063, %v2059
    %v2208 = vpack.c.b16 %v2064, %v2060
    %v2209 = vpack.c.b16 %v2069, %v2065
    %v2210 = vpack.c.b16 %v2070, %v2066
    %v2211 = vpack.c.b16 %v2071, %v2067
    %v2212 = vpack.c.b16 %v2072, %v2068
    %v2213 = vpack.c.b16 %v2077, %v2073
    %v2214 = vpack.c.b16 %v2078, %v2074
    %v2215 = vpack.c.b16 %v2079, %v2075
    %v2216 = vpack.c.b16 %v2080, %v2076
    %v2217 = vpack.c.b16 %v2085, %v2081
    %v2218 = vpack.c.b16 %v2086, %v2082
    %v2219 = vpack.c.b16 %v2087, %v2083
    %v2220 = vpack.c.b16 %v2088, %v2084
    %v2221 = vpack.c.b16 %v2093, %v2089
    %v2222 = vpack.c.b16 %v2094, %v2090
    %v2223 = vpack.c.b16 %v2095, %v2091
    %v2224 = vpack.c.b16 %v2096, %v2092
    %2353 = vmatprep.subr.bf16.mxu0 %v2098
    %2354 = vmatpush1.bf16.msra.mxu0 %v2097
    %2355 = vmatprep.subr.bf16.mxu0 %v2102
    %2356 = vmatpush1.bf16.msra.mxu0 %v2101
    %2357 = vmatprep.subr.bf16.mxu0 %v2106
    %2358 = vmatpush1.bf16.msra.mxu0 %v2105
    %2359 = vmatprep.subr.bf16.mxu0 %v2110
    %2360 = vmatpush1.bf16.msra.mxu0 %v2109
    %2361 = vmatprep.subr.bf16.mxu0 %v2114
    %2362 = vmatpush1.bf16.msra.mxu0 %v2113
    %2363 = vmatprep.subr.bf16.mxu0 %v2118
    %2364 = vmatpush1.bf16.msra.mxu0 %v2117
    %2365 = vmatprep.subr.bf16.mxu0 %v2122
    %2366 = vmatpush1.bf16.msra.mxu0 %v2121
    %2367 = vmatprep.subr.bf16.mxu0 %v2126
    %2368 = vmatpush1.bf16.msra.mxu0 %v2125
    %2369 = vmatprep.subr.bf16.mxu0 %v2130
    %2370 = vmatpush1.bf16.msra.mxu0 %v2129
    %2371 = vmatprep.subr.bf16.mxu0 %v2134
    %2372 = vmatpush1.bf16.msra.mxu0 %v2133
    %2373 = vmatprep.subr.bf16.mxu0 %v2138
    %2374 = vmatpush1.bf16.msra.mxu0 %v2137
    %2375 = vmatprep.subr.bf16.mxu0 %v2142
    %2376 = vmatpush1.bf16.msra.mxu0 %v2141
    %2377 = vmatprep.subr.bf16.mxu0 %v2146
    %2378 = vmatpush1.bf16.msra.mxu0 %v2145
    %2379 = vmatprep.subr.bf16.mxu0 %v2150
    %2380 = vmatpush1.bf16.msra.mxu0 %v2149
    %2381 = vmatprep.subr.bf16.mxu0 %v2154
    %2382 = vmatpush1.bf16.msra.mxu0 %v2153
    %2383 = vmatprep.subr.bf16.mxu0 %v2158
    %2384 = vmatpush1.bf16.msra.mxu0 %v2157
    %2385 = vmatprep.mubr.bf16.mxu0 %v1582
    %2386 = vmatmul.mubr.bf16.gmra.mrb[0].mxu0 %v1581
    %v2387 = vpop.f32.mrb[0].mxu0
    %v2388 = vadd.f32 0.0, %v2387
    %v2389 = vpop.f32.mrb[0].mxu0
    %v2390 = vadd.f32 0.0, %v2389
    %v2391 = vpop.f32.mrb[0].mxu0
    %v2392 = vpop.f32.mrb[0].mxu0
    %2393 = vdwg.mxu0
    %2394 = vmatprep.subr.bf16.mxu0 %v2162
    %2395 = vmatpush1.bf16.msra.mxu0 %v2161
    %2396 = vmatprep.subr.bf16.mxu0 %v2166
    %2397 = vmatpush1.bf16.msra.mxu0 %v2165
    %2398 = vmatprep.subr.bf16.mxu0 %v2170
    %2399 = vmatpush1.bf16.msra.mxu0 %v2169
    %2400 = vmatprep.subr.bf16.mxu0 %v2174
    %2401 = vmatpush1.bf16.msra.mxu0 %v2173
    %2402 = vmatprep.subr.bf16.mxu0 %v2178
    %2403 = vmatpush1.bf16.msra.mxu0 %v2177
    %2404 = vmatprep.subr.bf16.mxu0 %v2182
    %2405 = vmatpush1.bf16.msra.mxu0 %v2181
    %2406 = vmatprep.subr.bf16.mxu0 %v2186
    %2407 = vmatpush1.bf16.msra.mxu0 %v2185
    %2408 = vmatprep.subr.bf16.mxu0 %v2190
    %2409 = vmatpush1.bf16.msra.mxu0 %v2189
    %2410 = vmatprep.subr.bf16.mxu0 %v2194
    %2411 = vmatpush1.bf16.msra.mxu0 %v2193
    %2412 = vmatprep.subr.bf16.mxu0 %v2198
    %2413 = vmatpush1.bf16.msra.mxu0 %v2197
    %2414 = vmatprep.subr.bf16.mxu0 %v2202
    %2415 = vmatpush1.bf16.msra.mxu0 %v2201
    %2416 = vmatprep.subr.bf16.mxu0 %v2206
    %2417 = vmatpush1.bf16.msra.mxu0 %v2205
    %2418 = vmatprep.subr.bf16.mxu0 %v2210
    %2419 = vmatpush1.bf16.msra.mxu0 %v2209
    %2420 = vmatprep.subr.bf16.mxu0 %v2214
    %2421 = vmatpush1.bf16.msra.mxu0 %v2213
    %2422 = vmatprep.subr.bf16.mxu0 %v2218
    %2423 = vmatpush1.bf16.msra.mxu0 %v2217
    %2424 = vmatprep.subr.bf16.mxu0 %v2222
    %2425 = vmatpush1.bf16.msra.mxu0 %v2221
    %2426 = vmatprep.mubr.bf16.mxu0 %v1584
    %2427 = vmatmul.mubr.bf16.gmra.mrb[0].mxu0 %v1583
    %v2428 = vpop.f32.mrb[0].mxu0
    %v2429 = vadd.f32 %v2388, %v2428
    %v2430 = vpop.f32.mrb[0].mxu0
    %v2431 = vadd.f32 %v2390, %v2430
    %v2432 = vpop.f32.mrb[0].mxu0
    %v2433 = vpop.f32.mrb[0].mxu0
    %2434 = vdwg.mxu0
    %2435 = vmatprep.subr.bf16.mxu0 %v2100
    %2436 = vmatpush1.bf16.msra.mxu0 %v2099
    %2437 = vmatprep.subr.bf16.mxu0 %v2104
    %2438 = vmatpush1.bf16.msra.mxu0 %v2103
    %2439 = vmatprep.subr.bf16.mxu0 %v2108
    %2440 = vmatpush1.bf16.msra.mxu0 %v2107
    %2441 = vmatprep.subr.bf16.mxu0 %v2112
    %2442 = vmatpush1.bf16.msra.mxu0 %v2111
    %2443 = vmatprep.subr.bf16.mxu0 %v2116
    %2444 = vmatpush1.bf16.msra.mxu0 %v2115
    %2445 = vmatprep.subr.bf16.mxu0 %v2120
    %2446 = vmatpush1.bf16.msra.mxu0 %v2119
    %2447 = vmatprep.subr.bf16.mxu0 %v2124
    %2448 = vmatpush1.bf16.msra.mxu0 %v2123
    %2449 = vmatprep.subr.bf16.mxu0 %v2128
    %2450 = vmatpush1.bf16.msra.mxu0 %v2127
    %2451 = vmatprep.subr.bf16.mxu0 %v2132
    %2452 = vmatpush1.bf16.msra.mxu0 %v2131
    %2453 = vmatprep.subr.bf16.mxu0 %v2136
    %2454 = vmatpush1.bf16.msra.mxu0 %v2135
    %2455 = vmatprep.subr.bf16.mxu0 %v2140
    %2456 = vmatpush1.bf16.msra.mxu0 %v2139
    %2457 = vmatprep.subr.bf16.mxu0 %v2144
    %2458 = vmatpush1.bf16.msra.mxu0 %v2143
    %2459 = vmatprep.subr.bf16.mxu0 %v2148
    %2460 = vmatpush1.bf16.msra.mxu0 %v2147
    %2461 = vmatprep.subr.bf16.mxu0 %v2152
    %2462 = vmatpush1.bf16.msra.mxu0 %v2151
    %2463 = vmatprep.subr.bf16.mxu0 %v2156
    %2464 = vmatpush1.bf16.msra.mxu0 %v2155
    %2465 = vmatprep.subr.bf16.mxu0 %v2160
    %2466 = vmatpush1.bf16.msra.mxu0 %v2159
    %2467 = vmatprep.mubr.bf16.mxu0 %v1582
    %2468 = vmatmul.mubr.bf16.gmra.mrb[0].mxu0 %v1581
    %v2469 = vpop.f32.mrb[0].mxu0
    %v2470 = vadd.f32 0.0, %v2469
    %v2471 = vpop.f32.mrb[0].mxu0
    %v2472 = vadd.f32 0.0, %v2471
    %v2473 = vpop.f32.mrb[0].mxu0
    %v2474 = vpop.f32.mrb[0].mxu0
    %2475 = vdwg.mxu0
    %2476 = vmatprep.subr.bf16.mxu0 %v2164
    %2477 = vmatpush1.bf16.msra.mxu0 %v2163
    %2478 = vmatprep.subr.bf16.mxu0 %v2168
    %2479 = vmatpush1.bf16.msra.mxu0 %v2167
    %2480 = vmatprep.subr.bf16.mxu0 %v2172
    %2481 = vmatpush1.bf16.msra.mxu0 %v2171
    %2482 = vmatprep.subr.bf16.mxu0 %v2176
    %2483 = vmatpush1.bf16.msra.mxu0 %v2175
    %2484 = vmatprep.subr.bf16.mxu0 %v2180
    %2485 = vmatpush1.bf16.msra.mxu0 %v2179
    %2486 = vmatprep.subr.bf16.mxu0 %v2184
    %2487 = vmatpush1.bf16.msra.mxu0 %v2183
    %2488 = vmatprep.subr.bf16.mxu0 %v2188
    %2489 = vmatpush1.bf16.msra.mxu0 %v2187
    %2490 = vmatprep.subr.bf16.mxu0 %v2192
    %2491 = vmatpush1.bf16.msra.mxu0 %v2191
    %2492 = vmatprep.subr.bf16.mxu0 %v2196
    %2493 = vmatpush1.bf16.msra.mxu0 %v2195
    %2494 = vmatprep.subr.bf16.mxu0 %v2200
    %2495 = vmatpush1.bf16.msra.mxu0 %v2199
    %2496 = vmatprep.subr.bf16.mxu0 %v2204
    %2497 = vmatpush1.bf16.msra.mxu0 %v2203
    %2498 = vmatprep.subr.bf16.mxu0 %v2208
    %2499 = vmatpush1.bf16.msra.mxu0 %v2207
    %2500 = vmatprep.subr.bf16.mxu0 %v2212
    %2501 = vmatpush1.bf16.msra.mxu0 %v2211
    %2502 = vmatprep.subr.bf16.mxu0 %v2216
    %2503 = vmatpush1.bf16.msra.mxu0 %v2215
    %2504 = vmatprep.subr.bf16.mxu0 %v2220
    %2505 = vmatpush1.bf16.msra.mxu0 %v2219
    %2506 = vmatprep.subr.bf16.mxu0 %v2224
    %2507 = vmatpush1.bf16.msra.mxu0 %v2223
    %2508 = vmatprep.mubr.bf16.mxu0 %v1584
    %2509 = vmatmul.mubr.bf16.gmra.mrb[0].mxu0 %v1583
    %v2510 = vpop.f32.mrb[0].mxu0
    %v2511 = vadd.f32 %v2470, %v2510
    %v2512 = vpop.f32.mrb[0].mxu0
    %v2513 = vadd.f32 %v2472, %v2512
    %v2514 = vpop.f32.mrb[0].mxu0
    %v2515 = vpop.f32.mrb[0].mxu0
    %2516 = vdwg.mxu0
    %v2645 = vunpack.c.l.b16 %v1453
    %v2646 = vunpack.c.h.b16 %v1453
    %v2647 = vunpack.c.l.b16 %v1454
    %v2648 = vunpack.c.h.b16 %v1454
    %v2649 = vunpack.c.l.b16 %v1455
    %v2650 = vunpack.c.h.b16 %v1455
    %v2651 = vunpack.c.l.b16 %v1456
    %v2652 = vunpack.c.h.b16 %v1456
    %v2653 = vunpack.c.l.b16 %v1457
    %v2654 = vunpack.c.h.b16 %v1457
    %v2655 = vunpack.c.l.b16 %v1458
    %v2656 = vunpack.c.h.b16 %v1458
    %v2657 = vunpack.c.l.b16 %v1459
    %v2658 = vunpack.c.h.b16 %v1459
    %v2659 = vunpack.c.l.b16 %v1460
    %v2660 = vunpack.c.h.b16 %v1460
    %v2661 = vunpack.c.l.b16 %v1461
    %v2662 = vunpack.c.h.b16 %v1461
    %v2663 = vunpack.c.l.b16 %v1462
    %v2664 = vunpack.c.h.b16 %v1462
    %v2665 = vunpack.c.l.b16 %v1463
    %v2666 = vunpack.c.h.b16 %v1463
    %v2667 = vunpack.c.l.b16 %v1464
    %v2668 = vunpack.c.h.b16 %v1464
    %v2669 = vunpack.c.l.b16 %v1465
    %v2670 = vunpack.c.h.b16 %v1465
    %v2671 = vunpack.c.l.b16 %v1466
    %v2672 = vunpack.c.h.b16 %v1466
    %v2673 = vunpack.c.l.b16 %v1467
    %v2674 = vunpack.c.h.b16 %v1467
    %v2675 = vunpack.c.l.b16 %v1468
    %v2676 = vunpack.c.h.b16 %v1468
    %v2677 = vunpack.c.l.b16 %v1469
    %v2678 = vunpack.c.h.b16 %v1469
    %v2679 = vunpack.c.l.b16 %v1470
    %v2680 = vunpack.c.h.b16 %v1470
    %v2681 = vunpack.c.l.b16 %v1471
    %v2682 = vunpack.c.h.b16 %v1471
    %v2683 = vunpack.c.l.b16 %v1472
    %v2684 = vunpack.c.h.b16 %v1472
    %v2685 = vunpack.c.l.b16 %v1473
    %v2686 = vunpack.c.h.b16 %v1473
    %v2687 = vunpack.c.l.b16 %v1474
    %v2688 = vunpack.c.h.b16 %v1474
    %v2689 = vunpack.c.l.b16 %v1475
    %v2690 = vunpack.c.h.b16 %v1475
    %v2691 = vunpack.c.l.b16 %v1476
    %v2692 = vunpack.c.h.b16 %v1476
    %v2693 = vunpack.c.l.b16 %v1477
    %v2694 = vunpack.c.h.b16 %v1477
    %v2695 = vunpack.c.l.b16 %v1478
    %v2696 = vunpack.c.h.b16 %v1478
    %v2697 = vunpack.c.l.b16 %v1479
    %v2698 = vunpack.c.h.b16 %v1479
    %v2699 = vunpack.c.l.b16 %v1480
    %v2700 = vunpack.c.h.b16 %v1480
    %v2701 = vunpack.c.l.b16 %v1481
    %v2702 = vunpack.c.h.b16 %v1481
    %v2703 = vunpack.c.l.b16 %v1482
    %v2704 = vunpack.c.h.b16 %v1482
    %v2705 = vunpack.c.l.b16 %v1483
    %v2706 = vunpack.c.h.b16 %v1483
    %v2707 = vunpack.c.l.b16 %v1484
    %v2708 = vunpack.c.h.b16 %v1484
    %v2709 = vunpack.c.l.b16 %v1485
    %v2710 = vunpack.c.h.b16 %v1485
    %v2711 = vunpack.c.l.b16 %v1486
    %v2712 = vunpack.c.h.b16 %v1486
    %v2713 = vunpack.c.l.b16 %v1487
    %v2714 = vunpack.c.h.b16 %v1487
    %v2715 = vunpack.c.l.b16 %v1488
    %v2716 = vunpack.c.h.b16 %v1488
    %v2717 = vunpack.c.l.b16 %v1489
    %v2718 = vunpack.c.h.b16 %v1489
    %v2719 = vunpack.c.l.b16 %v1490
    %v2720 = vunpack.c.h.b16 %v1490
    %v2721 = vunpack.c.l.b16 %v1491
    %v2722 = vunpack.c.h.b16 %v1491
    %v2723 = vunpack.c.l.b16 %v1492
    %v2724 = vunpack.c.h.b16 %v1492
    %v2725 = vunpack.c.l.b16 %v1493
    %v2726 = vunpack.c.h.b16 %v1493
    %v2727 = vunpack.c.l.b16 %v1494
    %v2728 = vunpack.c.h.b16 %v1494
    %v2729 = vunpack.c.l.b16 %v1495
    %v2730 = vunpack.c.h.b16 %v1495
    %v2731 = vunpack.c.l.b16 %v1496
    %v2732 = vunpack.c.h.b16 %v1496
    %v2733 = vunpack.c.l.b16 %v1497
    %v2734 = vunpack.c.h.b16 %v1497
    %v2735 = vunpack.c.l.b16 %v1498
    %v2736 = vunpack.c.h.b16 %v1498
    %v2737 = vunpack.c.l.b16 %v1499
    %v2738 = vunpack.c.h.b16 %v1499
    %v2739 = vunpack.c.l.b16 %v1500
    %v2740 = vunpack.c.h.b16 %v1500
    %v2741 = vunpack.c.l.b16 %v1501
    %v2742 = vunpack.c.h.b16 %v1501
    %v2743 = vunpack.c.l.b16 %v1502
    %v2744 = vunpack.c.h.b16 %v1502
    %v2745 = vunpack.c.l.b16 %v1503
    %v2746 = vunpack.c.h.b16 %v1503
    %v2747 = vunpack.c.l.b16 %v1504
    %v2748 = vunpack.c.h.b16 %v1504
    %v2749 = vunpack.c.l.b16 %v1505
    %v2750 = vunpack.c.h.b16 %v1505
    %v2751 = vunpack.c.l.b16 %v1506
    %v2752 = vunpack.c.h.b16 %v1506
    %v2753 = vunpack.c.l.b16 %v1507
    %v2754 = vunpack.c.h.b16 %v1507
    %v2755 = vunpack.c.l.b16 %v1508
    %v2756 = vunpack.c.h.b16 %v1508
    %v2757 = vunpack.c.l.b16 %v1509
    %v2758 = vunpack.c.h.b16 %v1509
    %v2759 = vunpack.c.l.b16 %v1510
    %v2760 = vunpack.c.h.b16 %v1510
    %v2761 = vunpack.c.l.b16 %v1511
    %v2762 = vunpack.c.h.b16 %v1511
    %v2763 = vunpack.c.l.b16 %v1512
    %v2764 = vunpack.c.h.b16 %v1512
    %v2765 = vunpack.c.l.b16 %v1513
    %v2766 = vunpack.c.h.b16 %v1513
    %v2767 = vunpack.c.l.b16 %v1514
    %v2768 = vunpack.c.h.b16 %v1514
    %v2769 = vunpack.c.l.b16 %v1515
    %v2770 = vunpack.c.h.b16 %v1515
    %v2771 = vunpack.c.l.b16 %v1516
    %v2772 = vunpack.c.h.b16 %v1516
    %v2773 = vunpack.c.l.b16 %v1517
    %v2774 = vunpack.c.h.b16 %v1517
    %v2775 = vunpack.c.l.b16 %v1518
    %v2776 = vunpack.c.h.b16 %v1518
    %v2777 = vunpack.c.l.b16 %v1519
    %v2778 = vunpack.c.h.b16 %v1519
    %v2779 = vunpack.c.l.b16 %v1520
    %v2780 = vunpack.c.h.b16 %v1520
    %v2781 = vunpack.c.l.b16 %v1521
    %v2782 = vunpack.c.h.b16 %v1521
    %v2783 = vunpack.c.l.b16 %v1522
    %v2784 = vunpack.c.h.b16 %v1522
    %v2785 = vunpack.c.l.b16 %v1523
    %v2786 = vunpack.c.h.b16 %v1523
    %v2787 = vunpack.c.l.b16 %v1524
    %v2788 = vunpack.c.h.b16 %v1524
    %v2789 = vunpack.c.l.b16 %v1525
    %v2790 = vunpack.c.h.b16 %v1525
    %v2791 = vunpack.c.l.b16 %v1526
    %v2792 = vunpack.c.h.b16 %v1526
    %v2793 = vunpack.c.l.b16 %v1527
    %v2794 = vunpack.c.h.b16 %v1527
    %v2795 = vunpack.c.l.b16 %v1528
    %v2796 = vunpack.c.h.b16 %v1528
    %v2797 = vunpack.c.l.b16 %v1529
    %v2798 = vunpack.c.h.b16 %v1529
    %v2799 = vunpack.c.l.b16 %v1530
    %v2800 = vunpack.c.h.b16 %v1530
    %v2801 = vunpack.c.l.b16 %v1531
    %v2802 = vunpack.c.h.b16 %v1531
    %v2803 = vunpack.c.l.b16 %v1532
    %v2804 = vunpack.c.h.b16 %v1532
    %v2805 = vunpack.c.l.b16 %v1533
    %v2806 = vunpack.c.h.b16 %v1533
    %v2807 = vunpack.c.l.b16 %v1534
    %v2808 = vunpack.c.h.b16 %v1534
    %v2809 = vunpack.c.l.b16 %v1535
    %v2810 = vunpack.c.h.b16 %v1535
    %v2811 = vunpack.c.l.b16 %v1536
    %v2812 = vunpack.c.h.b16 %v1536
    %v2813 = vunpack.c.l.b16 %v1537
    %v2814 = vunpack.c.h.b16 %v1537
    %v2815 = vunpack.c.l.b16 %v1538
    %v2816 = vunpack.c.h.b16 %v1538
    %v2817 = vunpack.c.l.b16 %v1539
    %v2818 = vunpack.c.h.b16 %v1539
    %v2819 = vunpack.c.l.b16 %v1540
    %v2820 = vunpack.c.h.b16 %v1540
    %v2821 = vunpack.c.l.b16 %v1541
    %v2822 = vunpack.c.h.b16 %v1541
    %v2823 = vunpack.c.l.b16 %v1542
    %v2824 = vunpack.c.h.b16 %v1542
    %v2825 = vunpack.c.l.b16 %v1543
    %v2826 = vunpack.c.h.b16 %v1543
    %v2827 = vunpack.c.l.b16 %v1544
    %v2828 = vunpack.c.h.b16 %v1544
    %v2829 = vunpack.c.l.b16 %v1545
    %v2830 = vunpack.c.h.b16 %v1545
    %v2831 = vunpack.c.l.b16 %v1546
    %v2832 = vunpack.c.h.b16 %v1546
    %v2833 = vunpack.c.l.b16 %v1547
    %v2834 = vunpack.c.h.b16 %v1547
    %v2835 = vunpack.c.l.b16 %v1548
    %v2836 = vunpack.c.h.b16 %v1548
    %v2837 = vunpack.c.l.b16 %v1549
    %v2838 = vunpack.c.h.b16 %v1549
    %v2839 = vunpack.c.l.b16 %v1550
    %v2840 = vunpack.c.h.b16 %v1550
    %v2841 = vunpack.c.l.b16 %v1551
    %v2842 = vunpack.c.h.b16 %v1551
    %v2843 = vunpack.c.l.b16 %v1552
    %v2844 = vunpack.c.h.b16 %v1552
    %v2845 = vunpack.c.l.b16 %v1553
    %v2846 = vunpack.c.h.b16 %v1553
    %v2847 = vunpack.c.l.b16 %v1554
    %v2848 = vunpack.c.h.b16 %v1554
    %v2849 = vunpack.c.l.b16 %v1555
    %v2850 = vunpack.c.h.b16 %v1555
    %v2851 = vunpack.c.l.b16 %v1556
    %v2852 = vunpack.c.h.b16 %v1556
    %v2853 = vunpack.c.l.b16 %v1557
    %v2854 = vunpack.c.h.b16 %v1557
    %v2855 = vunpack.c.l.b16 %v1558
    %v2856 = vunpack.c.h.b16 %v1558
    %v2857 = vunpack.c.l.b16 %v1559
    %v2858 = vunpack.c.h.b16 %v1559
    %v2859 = vunpack.c.l.b16 %v1560
    %v2860 = vunpack.c.h.b16 %v1560
    %v2861 = vunpack.c.l.b16 %v1561
    %v2862 = vunpack.c.h.b16 %v1561
    %v2863 = vunpack.c.l.b16 %v1562
    %v2864 = vunpack.c.h.b16 %v1562
    %v2865 = vunpack.c.l.b16 %v1563
    %v2866 = vunpack.c.h.b16 %v1563
    %v2867 = vunpack.c.l.b16 %v1564
    %v2868 = vunpack.c.h.b16 %v1564
    %v2869 = vunpack.c.l.b16 %v1565
    %v2870 = vunpack.c.h.b16 %v1565
    %v2871 = vunpack.c.l.b16 %v1566
    %v2872 = vunpack.c.h.b16 %v1566
    %v2873 = vunpack.c.l.b16 %v1567
    %v2874 = vunpack.c.h.b16 %v1567
    %v2875 = vunpack.c.l.b16 %v1568
    %v2876 = vunpack.c.h.b16 %v1568
    %v2877 = vunpack.c.l.b16 %v1569
    %v2878 = vunpack.c.h.b16 %v1569
    %v2879 = vunpack.c.l.b16 %v1570
    %v2880 = vunpack.c.h.b16 %v1570
    %v2881 = vunpack.c.l.b16 %v1571
    %v2882 = vunpack.c.h.b16 %v1571
    %v2883 = vunpack.c.l.b16 %v1572
    %v2884 = vunpack.c.h.b16 %v1572
    %v2885 = vunpack.c.l.b16 %v1573
    %v2886 = vunpack.c.h.b16 %v1573
    %v2887 = vunpack.c.l.b16 %v1574
    %v2888 = vunpack.c.h.b16 %v1574
    %v2889 = vunpack.c.l.b16 %v1575
    %v2890 = vunpack.c.h.b16 %v1575
    %v2891 = vunpack.c.l.b16 %v1576
    %v2892 = vunpack.c.h.b16 %v1576
    %v2893 = vunpack.c.l.b16 %v1577
    %v2894 = vunpack.c.h.b16 %v1577
    %v2895 = vunpack.c.l.b16 %v1578
    %v2896 = vunpack.c.h.b16 %v1578
    %v2897 = vunpack.c.l.b16 %v1579
    %v2898 = vunpack.c.h.b16 %v1579
    %v2899 = vunpack.c.l.b16 %v1580
    %v2900 = vunpack.c.h.b16 %v1580
    %v2901 = vpack.c.b16 %v2649, %v2645
    %v2902 = vpack.c.b16 %v2650, %v2646
    %v2903 = vpack.c.b16 %v2651, %v2647
    %v2904 = vpack.c.b16 %v2652, %v2648
    %v2905 = vpack.c.b16 %v2657, %v2653
    %v2906 = vpack.c.b16 %v2658, %v2654
    %v2907 = vpack.c.b16 %v2659, %v2655
    %v2908 = vpack.c.b16 %v2660, %v2656
    %v2909 = vpack.c.b16 %v2665, %v2661
    %v2910 = vpack.c.b16 %v2666, %v2662
    %v2911 = vpack.c.b16 %v2667, %v2663
    %v2912 = vpack.c.b16 %v2668, %v2664
    %v2913 = vpack.c.b16 %v2673, %v2669
    %v2914 = vpack.c.b16 %v2674, %v2670
    %v2915 = vpack.c.b16 %v2675, %v2671
    %v2916 = vpack.c.b16 %v2676, %v2672
    %v2917 = vpack.c.b16 %v2681, %v2677
    %v2918 = vpack.c.b16 %v2682, %v2678
    %v2919 = vpack.c.b16 %v2683, %v2679
    %v2920 = vpack.c.b16 %v2684, %v2680
    %v2921 = vpack.c.b16 %v2689, %v2685
    %v2922 = vpack.c.b16 %v2690, %v2686
    %v2923 = vpack.c.b16 %v2691, %v2687
    %v2924 = vpack.c.b16 %v2692, %v2688
    %v2925 = vpack.c.b16 %v2697, %v2693
    %v2926 = vpack.c.b16 %v2698, %v2694
    %v2927 = vpack.c.b16 %v2699, %v2695
    %v2928 = vpack.c.b16 %v2700, %v2696
    %v2929 = vpack.c.b16 %v2705, %v2701
    %v2930 = vpack.c.b16 %v2706, %v2702
    %v2931 = vpack.c.b16 %v2707, %v2703
    %v2932 = vpack.c.b16 %v2708, %v2704
    %v2933 = vpack.c.b16 %v2713, %v2709
    %v2934 = vpack.c.b16 %v2714, %v2710
    %v2935 = vpack.c.b16 %v2715, %v2711
    %v2936 = vpack.c.b16 %v2716, %v2712
    %v2937 = vpack.c.b16 %v2721, %v2717
    %v2938 = vpack.c.b16 %v2722, %v2718
    %v2939 = vpack.c.b16 %v2723, %v2719
    %v2940 = vpack.c.b16 %v2724, %v2720
    %v2941 = vpack.c.b16 %v2729, %v2725
    %v2942 = vpack.c.b16 %v2730, %v2726
    %v2943 = vpack.c.b16 %v2731, %v2727
    %v2944 = vpack.c.b16 %v2732, %v2728
    %v2945 = vpack.c.b16 %v2737, %v2733
    %v2946 = vpack.c.b16 %v2738, %v2734
    %v2947 = vpack.c.b16 %v2739, %v2735
    %v2948 = vpack.c.b16 %v2740, %v2736
    %v2949 = vpack.c.b16 %v2745, %v2741
    %v2950 = vpack.c.b16 %v2746, %v2742
    %v2951 = vpack.c.b16 %v2747, %v2743
    %v2952 = vpack.c.b16 %v2748, %v2744
    %v2953 = vpack.c.b16 %v2753, %v2749
    %v2954 = vpack.c.b16 %v2754, %v2750
    %v2955 = vpack.c.b16 %v2755, %v2751
    %v2956 = vpack.c.b16 %v2756, %v2752
    %v2957 = vpack.c.b16 %v2761, %v2757
    %v2958 = vpack.c.b16 %v2762, %v2758
    %v2959 = vpack.c.b16 %v2763, %v2759
    %v2960 = vpack.c.b16 %v2764, %v2760
    %v2961 = vpack.c.b16 %v2769, %v2765
    %v2962 = vpack.c.b16 %v2770, %v2766
    %v2963 = vpack.c.b16 %v2771, %v2767
    %v2964 = vpack.c.b16 %v2772, %v2768
    %v2965 = vpack.c.b16 %v2777, %v2773
    %v2966 = vpack.c.b16 %v2778, %v2774
    %v2967 = vpack.c.b16 %v2779, %v2775
    %v2968 = vpack.c.b16 %v2780, %v2776
    %v2969 = vpack.c.b16 %v2785, %v2781
    %v2970 = vpack.c.b16 %v2786, %v2782
    %v2971 = vpack.c.b16 %v2787, %v2783
    %v2972 = vpack.c.b16 %v2788, %v2784
    %v2973 = vpack.c.b16 %v2793, %v2789
    %v2974 = vpack.c.b16 %v2794, %v2790
    %v2975 = vpack.c.b16 %v2795, %v2791
    %v2976 = vpack.c.b16 %v2796, %v2792
    %v2977 = vpack.c.b16 %v2801, %v2797
    %v2978 = vpack.c.b16 %v2802, %v2798
    %v2979 = vpack.c.b16 %v2803, %v2799
    %v2980 = vpack.c.b16 %v2804, %v2800
    %v2981 = vpack.c.b16 %v2809, %v2805
    %v2982 = vpack.c.b16 %v2810, %v2806
    %v2983 = vpack.c.b16 %v2811, %v2807
    %v2984 = vpack.c.b16 %v2812, %v2808
    %v2985 = vpack.c.b16 %v2817, %v2813
    %v2986 = vpack.c.b16 %v2818, %v2814
    %v2987 = vpack.c.b16 %v2819, %v2815
    %v2988 = vpack.c.b16 %v2820, %v2816
    %v2989 = vpack.c.b16 %v2825, %v2821
    %v2990 = vpack.c.b16 %v2826, %v2822
    %v2991 = vpack.c.b16 %v2827, %v2823
    %v2992 = vpack.c.b16 %v2828, %v2824
    %v2993 = vpack.c.b16 %v2833, %v2829
    %v2994 = vpack.c.b16 %v2834, %v2830
    %v2995 = vpack.c.b16 %v2835, %v2831
    %v2996 = vpack.c.b16 %v2836, %v2832
    %v2997 = vpack.c.b16 %v2841, %v2837
    %v2998 = vpack.c.b16 %v2842, %v2838
    %v2999 = vpack.c.b16 %v2843, %v2839
    %v3000 = vpack.c.b16 %v2844, %v2840
    %v3001 = vpack.c.b16 %v2849, %v2845
    %v3002 = vpack.c.b16 %v2850, %v2846
    %v3003 = vpack.c.b16 %v2851, %v2847
    %v3004 = vpack.c.b16 %v2852, %v2848
    %v3005 = vpack.c.b16 %v2857, %v2853
    %v3006 = vpack.c.b16 %v2858, %v2854
    %v3007 = vpack.c.b16 %v2859, %v2855
    %v3008 = vpack.c.b16 %v2860, %v2856
    %v3009 = vpack.c.b16 %v2865, %v2861
    %v3010 = vpack.c.b16 %v2866, %v2862
    %v3011 = vpack.c.b16 %v2867, %v2863
    %v3012 = vpack.c.b16 %v2868, %v2864
    %v3013 = vpack.c.b16 %v2873, %v2869
    %v3014 = vpack.c.b16 %v2874, %v2870
    %v3015 = vpack.c.b16 %v2875, %v2871
    %v3016 = vpack.c.b16 %v2876, %v2872
    %v3017 = vpack.c.b16 %v2881, %v2877
    %v3018 = vpack.c.b16 %v2882, %v2878
    %v3019 = vpack.c.b16 %v2883, %v2879
    %v3020 = vpack.c.b16 %v2884, %v2880
    %v3021 = vpack.c.b16 %v2889, %v2885
    %v3022 = vpack.c.b16 %v2890, %v2886
    %v3023 = vpack.c.b16 %v2891, %v2887
    %v3024 = vpack.c.b16 %v2892, %v2888
    %v3025 = vpack.c.b16 %v2897, %v2893
    %v3026 = vpack.c.b16 %v2898, %v2894
    %v3027 = vpack.c.b16 %v2899, %v2895
    %v3028 = vpack.c.b16 %v2900, %v2896
    %3157 = vmatprep.subr.bf16.mxu0 %v2902
    %3158 = vmatpush1.bf16.msra.mxu0 %v2901
    %3159 = vmatprep.subr.bf16.mxu0 %v2906
    %3160 = vmatpush1.bf16.msra.mxu0 %v2905
    %3161 = vmatprep.subr.bf16.mxu0 %v2910
    %3162 = vmatpush1.bf16.msra.mxu0 %v2909
    %3163 = vmatprep.subr.bf16.mxu0 %v2914
    %3164 = vmatpush1.bf16.msra.mxu0 %v2913
    %3165 = vmatprep.subr.bf16.mxu0 %v2918
    %3166 = vmatpush1.bf16.msra.mxu0 %v2917
    %3167 = vmatprep.subr.bf16.mxu0 %v2922
    %3168 = vmatpush1.bf16.msra.mxu0 %v2921
    %3169 = vmatprep.subr.bf16.mxu0 %v2926
    %3170 = vmatpush1.bf16.msra.mxu0 %v2925
    %3171 = vmatprep.subr.bf16.mxu0 %v2930
    %3172 = vmatpush1.bf16.msra.mxu0 %v2929
    %3173 = vmatprep.subr.bf16.mxu0 %v2934
    %3174 = vmatpush1.bf16.msra.mxu0 %v2933
    %3175 = vmatprep.subr.bf16.mxu0 %v2938
    %3176 = vmatpush1.bf16.msra.mxu0 %v2937
    %3177 = vmatprep.subr.bf16.mxu0 %v2942
    %3178 = vmatpush1.bf16.msra.mxu0 %v2941
    %3179 = vmatprep.subr.bf16.mxu0 %v2946
    %3180 = vmatpush1.bf16.msra.mxu0 %v2945
    %3181 = vmatprep.subr.bf16.mxu0 %v2950
    %3182 = vmatpush1.bf16.msra.mxu0 %v2949
    %3183 = vmatprep.subr.bf16.mxu0 %v2954
    %3184 = vmatpush1.bf16.msra.mxu0 %v2953
    %3185 = vmatprep.subr.bf16.mxu0 %v2958
    %3186 = vmatpush1.bf16.msra.mxu0 %v2957
    %3187 = vmatprep.subr.bf16.mxu0 %v2962
    %3188 = vmatpush1.bf16.msra.mxu0 %v2961
    %3189 = vmatprep.mubr.bf16.mxu0 %v1450
    %3190 = vmatmul.mubr.bf16.gmra.mrb[0].mxu0 %v1449
    %v3191 = vpop.f32.mrb[0].mxu0
    %v3192 = vadd.f32 %v2429, %v3191
    %v3193 = vpop.f32.mrb[0].mxu0
    %v3194 = vadd.f32 %v2431, %v3193
    %v3195 = vpop.f32.mrb[0].mxu0
    %v3196 = vpop.f32.mrb[0].mxu0
    %3197 = vdwg.mxu0
    %3198 = vmatprep.subr.bf16.mxu0 %v2966
    %3199 = vmatpush1.bf16.msra.mxu0 %v2965
    %3200 = vmatprep.subr.bf16.mxu0 %v2970
    %3201 = vmatpush1.bf16.msra.mxu0 %v2969
    %3202 = vmatprep.subr.bf16.mxu0 %v2974
    %3203 = vmatpush1.bf16.msra.mxu0 %v2973
    %3204 = vmatprep.subr.bf16.mxu0 %v2978
    %3205 = vmatpush1.bf16.msra.mxu0 %v2977
    %3206 = vmatprep.subr.bf16.mxu0 %v2982
    %3207 = vmatpush1.bf16.msra.mxu0 %v2981
    %3208 = vmatprep.subr.bf16.mxu0 %v2986
    %3209 = vmatpush1.bf16.msra.mxu0 %v2985
    %3210 = vmatprep.subr.bf16.mxu0 %v2990
    %3211 = vmatpush1.bf16.msra.mxu0 %v2989
    %3212 = vmatprep.subr.bf16.mxu0 %v2994
    %3213 = vmatpush1.bf16.msra.mxu0 %v2993
    %3214 = vmatprep.subr.bf16.mxu0 %v2998
    %3215 = vmatpush1.bf16.msra.mxu0 %v2997
    %3216 = vmatprep.subr.bf16.mxu0 %v3002
    %3217 = vmatpush1.bf16.msra.mxu0 %v3001
    %3218 = vmatprep.subr.bf16.mxu0 %v3006
    %3219 = vmatpush1.bf16.msra.mxu0 %v3005
    %3220 = vmatprep.subr.bf16.mxu0 %v3010
    %3221 = vmatpush1.bf16.msra.mxu0 %v3009
    %3222 = vmatprep.subr.bf16.mxu0 %v3014
    %3223 = vmatpush1.bf16.msra.mxu0 %v3013
    %3224 = vmatprep.subr.bf16.mxu0 %v3018
    %3225 = vmatpush1.bf16.msra.mxu0 %v3017
    %3226 = vmatprep.subr.bf16.mxu0 %v3022
    %3227 = vmatpush1.bf16.msra.mxu0 %v3021
    %3228 = vmatprep.subr.bf16.mxu0 %v3026
    %3229 = vmatpush1.bf16.msra.mxu0 %v3025
    %3230 = vmatprep.mubr.bf16.mxu0 %v1452
    %3231 = vmatmul.mubr.bf16.gmra.mrb[0].mxu0 %v1451
    %v3232 = vpop.f32.mrb[0].mxu0
    %v3233 = vadd.f32 %v3192, %v3232
    %v3234 = vpop.f32.mrb[0].mxu0
    %v3235 = vadd.f32 %v3194, %v3234
    %v3236 = vpop.f32.mrb[0].mxu0
    %v3237 = vpop.f32.mrb[0].mxu0
    %3238 = vdwg.mxu0
    %3239 = vmatprep.subr.bf16.mxu0 %v2904
    %3240 = vmatpush1.bf16.msra.mxu0 %v2903
    %3241 = vmatprep.subr.bf16.mxu0 %v2908
    %3242 = vmatpush1.bf16.msra.mxu0 %v2907
    %3243 = vmatprep.subr.bf16.mxu0 %v2912
    %3244 = vmatpush1.bf16.msra.mxu0 %v2911
    %3245 = vmatprep.subr.bf16.mxu0 %v2916
    %3246 = vmatpush1.bf16.msra.mxu0 %v2915
    %3247 = vmatprep.subr.bf16.mxu0 %v2920
    %3248 = vmatpush1.bf16.msra.mxu0 %v2919
    %3249 = vmatprep.subr.bf16.mxu0 %v2924
    %3250 = vmatpush1.bf16.msra.mxu0 %v2923
    %3251 = vmatprep.subr.bf16.mxu0 %v2928
    %3252 = vmatpush1.bf16.msra.mxu0 %v2927
    %3253 = vmatprep.subr.bf16.mxu0 %v2932
    %3254 = vmatpush1.bf16.msra.mxu0 %v2931
    %3255 = vmatprep.subr.bf16.mxu0 %v2936
    %3256 = vmatpush1.bf16.msra.mxu0 %v2935
    %3257 = vmatprep.subr.bf16.mxu0 %v2940
    %3258 = vmatpush1.bf16.msra.mxu0 %v2939
    %3259 = vmatprep.subr.bf16.mxu0 %v2944
    %3260 = vmatpush1.bf16.msra.mxu0 %v2943
    %3261 = vmatprep.subr.bf16.mxu0 %v2948
    %3262 = vmatpush1.bf16.msra.mxu0 %v2947
    %3263 = vmatprep.subr.bf16.mxu0 %v2952
    %3264 = vmatpush1.bf16.msra.mxu0 %v2951
    %3265 = vmatprep.subr.bf16.mxu0 %v2956
    %3266 = vmatpush1.bf16.msra.mxu0 %v2955
    %3267 = vmatprep.subr.bf16.mxu0 %v2960
    %3268 = vmatpush1.bf16.msra.mxu0 %v2959
    %3269 = vmatprep.subr.bf16.mxu0 %v2964
    %3270 = vmatpush1.bf16.msra.mxu0 %v2963
    %3271 = vmatprep.mubr.bf16.mxu0 %v1450
    %3272 = vmatmul.mubr.bf16.gmra.mrb[0].mxu0 %v1449
    %v3273 = vpop.f32.mrb[0].mxu0
    %v3274 = vadd.f32 %v2511, %v3273
    %v3275 = vpop.f32.mrb[0].mxu0
    %v3276 = vadd.f32 %v2513, %v3275
    %v3277 = vpop.f32.mrb[0].mxu0
    %v3278 = vpop.f32.mrb[0].mxu0
    %3279 = vdwg.mxu0
    %3280 = vmatprep.subr.bf16.mxu0 %v2968
    %3281 = vmatpush1.bf16.msra.mxu0 %v2967
    %3282 = vmatprep.subr.bf16.mxu0 %v2972
    %3283 = vmatpush1.bf16.msra.mxu0 %v2971
    %3284 = vmatprep.subr.bf16.mxu0 %v2976
    %3285 = vmatpush1.bf16.msra.mxu0 %v2975
    %3286 = vmatprep.subr.bf16.mxu0 %v2980
    %3287 = vmatpush1.bf16.msra.mxu0 %v2979
    %3288 = vmatprep.subr.bf16.mxu0 %v2984
    %3289 = vmatpush1.bf16.msra.mxu0 %v2983
    %3290 = vmatprep.subr.bf16.mxu0 %v2988
    %3291 = vmatpush1.bf16.msra.mxu0 %v2987
    %3292 = vmatprep.subr.bf16.mxu0 %v2992
    %3293 = vmatpush1.bf16.msra.mxu0 %v2991
    %3294 = vmatprep.subr.bf16.mxu0 %v2996
    %3295 = vmatpush1.bf16.msra.mxu0 %v2995
    %3296 = vmatprep.subr.bf16.mxu0 %v3000
    %3297 = vmatpush1.bf16.msra.mxu0 %v2999
    %3298 = vmatprep.subr.bf16.mxu0 %v3004
    %3299 = vmatpush1.bf16.msra.mxu0 %v3003
    %3300 = vmatprep.subr.bf16.mxu0 %v3008
    %3301 = vmatpush1.bf16.msra.mxu0 %v3007
    %3302 = vmatprep.subr.bf16.mxu0 %v3012
    %3303 = vmatpush1.bf16.msra.mxu0 %v3011
    %3304 = vmatprep.subr.bf16.mxu0 %v3016
    %3305 = vmatpush1.bf16.msra.mxu0 %v3015
    %3306 = vmatprep.subr.bf16.mxu0 %v3020
    %3307 = vmatpush1.bf16.msra.mxu0 %v3019
    %3308 = vmatprep.subr.bf16.mxu0 %v3024
    %3309 = vmatpush1.bf16.msra.mxu0 %v3023
    %3310 = vmatprep.subr.bf16.mxu0 %v3028
    %3311 = vmatpush1.bf16.msra.mxu0 %v3027
    %3312 = vmatprep.mubr.bf16.mxu0 %v1452
    %3313 = vmatmul.mubr.bf16.gmra.mrb[0].mxu0 %v1451
    %v3314 = vpop.f32.mrb[0].mxu0
    %v3315 = vadd.f32 %v3274, %v3314
    %v3316 = vpop.f32.mrb[0].mxu0
    %v3317 = vadd.f32 %v3276, %v3316
    %v3318 = vpop.f32.mrb[0].mxu0
    %v3319 = vpop.f32.mrb[0].mxu0
    %3320 = vdwg.mxu0
    %v3321 = vld [vmem:[%s10] sm:$0xf]
    %v3323 = vlaneseq
    %v3324 = vshrl.u32 %v3323, 7
    %v3325 = vsub.s32 0, %v3324
    %v3326 = vrot.slane %v3321, %v3325
    %v3327 = vlaneseq
    %v3328 = vshrl.u32 %v3327, 7
    %v3329 = vsub.s32 1, %v3328
    %v3330 = vrot.slane %v3321, %v3329
    %v3331 = vlaneseq
    %v3332 = vshrl.u32 %v3331, 7
    %v3333 = vsub.s32 2, %v3332
    %v3334 = vrot.slane %v3321, %v3333
    %v3335 = vlaneseq
    %v3336 = vshrl.u32 %v3335, 7
    %v3337 = vsub.s32 3, %v3336
    %v3338 = vrot.slane %v3321, %v3337
    %v3343 = vadd.f32 %v3233, %v3326
    %v3344 = vadd.f32 %v3235, %v3330
    %v3345 = vadd.f32 %v3315, %v3334
    %v3346 = vadd.f32 %v3317, %v3338
    %v3347 = vsub.f32 0.0, %v3343
    %v3348 = vsub.f32 0.0, %v3344
    %v3349 = vsub.f32 0.0, %v3345
    %v3350 = vsub.f32 0.0, %v3346
    %v3351 = vmul.f32 %v3347, 1.442695
    %v3352 = vpow.pop %v3351
    %v3353 = vmul.f32 %v3348, 1.442695
    %v3354 = vpow.pop %v3353
    %v3355 = vmul.f32 %v3349, 1.442695
    %v3356 = vpow.pop %v3355
    %v3357 = vmul.f32 %v3350, 1.442695
    %v3358 = vpow.pop %v3357
    %v3359 = vadd.f32 %v3352, 1.0
    %v3360 = vadd.f32 %v3354, 1.0
    %v3361 = vadd.f32 %v3356, 1.0
    %v3362 = vadd.f32 %v3358, 1.0
    %v3363 = vrcp.pop %v3359
    %v3364 = vrcp.pop %v3360
    %v3365 = vrcp.pop %v3361
    %v3366 = vrcp.pop %v3362
    %v3367 = vmul.f32 %v3343, %v3363
    %v3368 = vmul.f32 %v3344, %v3364
    %v3369 = vmul.f32 %v3345, %v3365
    %v3370 = vmul.f32 %v3346, %v3366
    %v3371 = vld [vmem:[%s11] sm:$0xf]
    %v3373 = vlaneseq
    %v3374 = vshrl.u32 %v3373, 7
    %v3375 = vsub.s32 0, %v3374
    %v3376 = vrot.slane %v3371, %v3375
    %v3377 = vlaneseq
    %v3378 = vshrl.u32 %v3377, 7
    %v3379 = vsub.s32 1, %v3378
    %v3380 = vrot.slane %v3371, %v3379
    %v3381 = vlaneseq
    %v3382 = vshrl.u32 %v3381, 7
    %v3383 = vsub.s32 2, %v3382
    %v3384 = vrot.slane %v3371, %v3383
    %v3385 = vlaneseq
    %v3386 = vshrl.u32 %v3385, 7
    %v3387 = vsub.s32 3, %v3386
    %v3388 = vrot.slane %v3371, %v3387
    %v3393 = vmul.f32 %v3367, %v3376
    %v3394 = vmul.f32 %v3368, %v3380
    %v3395 = vmul.f32 %v3369, %v3384
    %v3396 = vmul.f32 %v3370, %v3388
    %v3397 = vadd.f32 %v3393, %v3394
    %v3398 = vadd.f32 %v3397, %v3395
    %v3399 = vadd.f32 %v3398, %v3396
    %3400 = vadd.xlane.f32.xlu0 %v3399
    %v3401 = vpop.xlane.xlu0 %3400
    %v3402 = vld [vmem:[#allocation2] sm:$0x1]
    %v3404 = vlaneseq
    %v3405 = vshrl.u32 %v3404, 7
    %v3406 = vsub.s32 0, %v3405
    %v3407 = vrot.slane %v3402, %v3406
    %v3409 = vadd.f32 %v3401, %v3407
    %vm3410 = vcmask 7168
    %3411 = vst.msk [vmem:[%s13] sm:$0xff] %vm3410, %v3409
    // Predicated region
    $region78: #{tpu_custom_call.1} parent=1 // pred_check
      _
    $region79: #{tpu_custom_call.1} parent=1 // pred_check_branch
      %3413 = sbr.rel (0) target = $region81
    $region80: #{tpu_custom_call.1} parent=1 // pred_region
      _
    $region81: #{tpu_custom_call.1} parent=1 // pred_fallthru
      _
    // Predicated region
    $region82: #{tpu_custom_call.1} parent=1 // pred_check
      _
    $region83: #{tpu_custom_call.1} parent=1 // pred_check_branch
      %3415 = sbr.rel (0) target = $region85
    $region84: #{tpu_custom_call.1} parent=1 // pred_region
      _
    $region85: #{tpu_custom_call.1} parent=1 // pred_fallthru
      _
    %3416 = vsyncpa [#allocation4], 1
    %3417 = vsyncpa [#allocation6], 1
    %3418 = vsyncpa [#allocation9], 1
    %3419 = vsyncpa [#allocation12], 1

// kernel: tpu_custom_call.1
$region0: #{tpu_custom_call.1}
  #allocation0 [shape = 'u32[]', space=smem, size = 0x4, offset = 0x4, fixed_abs, tag = 'smem constant byte address 0x4 - core index']
  #allocation1 [shape = 'u32[144,128]{1,0:T(1,128)}', space=vmem, size = 0x12000, scoped, tag = 'internal scratch']
  #allocation2 [shape = 'f32[1,1]{1,0:T(1,128)S(1)}', space=vmem, size = 0x200, scoped, tag = 'scoped memory for tpu_custom_call.1']
  %s0 = inlined_call_operand.hbm [shape: f32[8,24], index: 0, kind: input, shape index: {}]
  %s1 = inlined_call_operand.hbm [shape: f32[8,6], index: 1, kind: input, shape index: {}]
  %s2 = inlined_call_operand.hbm [shape: bf16[24,512], index: 2, kind: input, shape index: {}]
  %s3 = inlined_call_operand.vmem [shape: f32[1,512], index: 3, kind: input, shape index: {}]
  %s4 = inlined_call_operand.hbm [shape: bf16[512,512], index: 4, kind: input, shape index: {}]
  %s5 = inlined_call_operand.vmem [shape: f32[1,512], index: 5, kind: input, shape index: {}]
  %s6 = inlined_call_operand.vmem [shape: bf16[6,512], index: 6, kind: input, shape index: {}]
  %s7 = inlined_call_operand.vmem [shape: f32[1,512], index: 7, kind: input, shape index: {}]
  %s8 = inlined_call_operand.hbm [shape: bf16[512,512], index: 8, kind: input, shape index: {}]
  %s9 = inlined_call_operand.hbm [shape: bf16[512,512], index: 9, kind: input, shape index: {}]
  %s10 = inlined_call_operand.vmem [shape: f32[1,512], index: 10, kind: input, shape index: {}]
  %s11 = inlined_call_operand.vmem [shape: f32[1,512], index: 11, kind: input, shape index: {}]
  %s12 = inlined_call_operand.<no memory space> [shape: f32[1,1], index: 12, kind: input, shape index: {}]
  %s13 = inlined_call_operand.vmem [shape: f32[8,1], index: 13, kind: output, shape index: {}]
  %s14 = sld [smem:[#allocation0]]
  $region86: #{tpu_custom_call.1} parent=0
    _
  %s16 = ssub.s32 1, %s14
  %s17 = scalar_select 0, %s16, %s14
  %v18 = vstv %s12
  %19 = vst [vmem:[#allocation2] sm:$0x1] %v18
  $region1: #{tpu_custom_call.1} parent=0
    #allocation3 [shape = 'u8[4096]{0}', space=vmem, size = 0x1000, scoped, tag = 'input window, operand 0, single buffered']
    #allocation4 [shape = 's32[1]{0}', space=sflag, size = 0x4, scoped, tag = 'scoped memory for tpu_custom_call.1']
    #allocation5 [shape = 'u8[4096]{0}', space=vmem, size = 0x1000, scoped, tag = 'input window, operand 1, single buffered']
    #allocation6 [shape = 's32[1]{0}', space=sflag, size = 0x4, scoped, tag = 'scoped memory for tpu_custom_call.1']
    #allocation7 [shape = 'u8[24576]{0}', space=vmem, size = 0x6000, scoped, tag = 'input window, operand 2, single buffered']
    #allocation8 [shape = 'u8[524288]{0}', space=vmem, size = 0x80000, scoped, tag = 'input window, operand 4, single buffered']
    #allocation9 [shape = 's32[1]{0}', space=sflag, size = 0x4, scoped, tag = 'scoped memory for tpu_custom_call.1']
    #allocation10 [shape = 'u8[524288]{0}', space=vmem, size = 0x80000, scoped, tag = 'input window, operand 8, single buffered']
    #allocation11 [shape = 'u8[524288]{0}', space=vmem, size = 0x80000, scoped, tag = 'input window, operand 9, single buffered']
    #allocation12 [shape = 's32[1]{0}', space=sflag, size = 0x4, scoped, tag = 'scoped memory for tpu_custom_call.1']
    %20 = vsyncpa [#allocation4], 0
    %21 = vsyncpa [#allocation6], 0
    %22 = vsyncpa [#allocation9], 0
    %23 = vsyncpa [#allocation12], 0
    // Predicated region
    $region2: #{tpu_custom_call.1} parent=1 // pred_check
      _
    $region3: #{tpu_custom_call.1} parent=1 // pred_check_branch
      %25 = sbr.rel (0) target = $region5
    $region4: #{tpu_custom_call.1} parent=1 // pred_region
      %s27 = ssub.s32 128, 128
      %28 = vsyncadd [#allocation4], %s27
      %s30 = sshll.u32 [#allocation3], 4
      %s31 = int_to_ptr.vmem [resolvable:$true] %s30
      %33 = dma.hbm_to_vmem [thread:$0]  %s0, 128, %s31, [#allocation4]
    $region5: #{tpu_custom_call.1} parent=1 // pred_fallthru
      _
    // Predicated region
    $region6: #{tpu_custom_call.1} parent=1 // pred_check
      _
    $region7: #{tpu_custom_call.1} parent=1 // pred_check_branch
      %35 = sbr.rel (0) target = $region9
    $region8: #{tpu_custom_call.1} parent=1 // pred_region
      %s37 = ssub.s32 128, 128
      %38 = vsyncadd [#allocation6], %s37
      %s40 = sshll.u32 [#allocation5], 4
      %s41 = int_to_ptr.vmem [resolvable:$true] %s40
      %43 = dma.hbm_to_vmem [thread:$0]  %s1, 128, %s41, [#allocation6]
    $region9: #{tpu_custom_call.1} parent=1 // pred_fallthru
      _
    // Predicated region
    $region10: #{tpu_custom_call.1} parent=1 // pred_check
      _
    $region11: #{tpu_custom_call.1} parent=1 // pred_check_branch
      %45 = sbr.rel (0) target = $region13
    $region12: #{tpu_custom_call.1} parent=1 // pred_region
      %s47 = ssub.s32 768, 768
      %48 = vsyncadd [#allocation6], %s47
      %s49 = sshll.u32 [#allocation7], 4
      %s50 = int_to_ptr.vmem [resolvable:$true] %s49
      %55 = dma.hbm_to_vmem [thread:$0]  %s2, 768, %s50, [#allocation6], 256, 256, 16
    $region13: #{tpu_custom_call.1} parent=1 // pred_fallthru
      _
    // Predicated region
    $region14: #{tpu_custom_call.1} parent=1 // pred_check
      _
    $region15: #{tpu_custom_call.1} parent=1 // pred_check_branch
      %57 = sbr.rel (0) target = $region17
    $region16: #{tpu_custom_call.1} parent=1 // pred_region
      _
    $region17: #{tpu_custom_call.1} parent=1 // pred_fallthru
      _
    // Predicated region
    $region18: #{tpu_custom_call.1} parent=1 // pred_check
      _
    $region19: #{tpu_custom_call.1} parent=1 // pred_check_branch
      %59 = sbr.rel (0) target = $region21
    $region20: #{tpu_custom_call.1} parent=1 // pred_region
      %s61 = ssub.s32 16384, 16384
      %62 = vsyncadd [#allocation9], %s61
      %s63 = sshll.u32 [#allocation8], 4
      %s64 = int_to_ptr.vmem [resolvable:$true] %s63
      %69 = dma.hbm_to_vmem [thread:$0]  %s4, 16384, %s64, [#allocation9], 256, 256, 16
    $region21: #{tpu_custom_call.1} parent=1 // pred_fallthru
      _
    // Predicated region
    $region22: #{tpu_custom_call.1} parent=1 // pred_check
      _
    $region23: #{tpu_custom_call.1} parent=1 // pred_check_branch
      %71 = sbr.rel (0) target = $region25
    $region24: #{tpu_custom_call.1} parent=1 // pred_region
      _
    $region25: #{tpu_custom_call.1} parent=1 // pred_fallthru
      _
    // Predicated region
    $region26: #{tpu_custom_call.1} parent=1 // pred_check
      _
    $region27: #{tpu_custom_call.1} parent=1 // pred_check_branch
      %73 = sbr.rel (0) target = $region29
    $region28: #{tpu_custom_call.1} parent=1 // pred_region
      _
    $region29: #{tpu_custom_call.1} parent=1 // pred_fallthru
      _
    // Predicated region
    $region30: #{tpu_custom_call.1} parent=1 // pred_check
      _
    $region31: #{tpu_custom_call.1} parent=1 // pred_check_branch
      %75 = sbr.rel (0) target = $region33
    $region32: #{tpu_custom_call.1} parent=1 // pred_region
      _
    $region33: #{tpu_custom_call.1} parent=1 // pred_fallthru
      _
    // Predicated region
    $region34: #{tpu_custom_call.1} parent=1 // pred_check
      _
    $region35: #{tpu_custom_call.1} parent=1 // pred_check_branch
      %77 = sbr.rel (0) target = $region37
    $region36: #{tpu_custom_call.1} parent=1 // pred_region
      %s79 = ssub.s32 16384, 16384
      %80 = vsyncadd [#allocation9], %s79
      %s81 = sshll.u32 [#allocation10], 4
      %s82 = int_to_ptr.vmem [resolvable:$true] %s81
      %87 = dma.hbm_to_vmem [thread:$0]  %s8, 16384, %s82, [#allocation9], 256, 256, 16
    $region37: #{tpu_custom_call.1} parent=1 // pred_fallthru
      _
    // Predicated region
    $region38: #{tpu_custom_call.1} parent=1 // pred_check
      _
    $region39: #{tpu_custom_call.1} parent=1 // pred_check_branch
      %89 = sbr.rel (0) target = $region41
    $region40: #{tpu_custom_call.1} parent=1 // pred_region
      %s91 = ssub.s32 16384, 16384
      %92 = vsyncadd [#allocation12], %s91
      %s93 = sshll.u32 [#allocation11], 4
      %s94 = int_to_ptr.vmem [resolvable:$true] %s93
      %99 = dma.hbm_to_vmem [thread:$0]  %s9, 16384, %s94, [#allocation12], 256, 256, 16
    $region41: #{tpu_custom_call.1} parent=1 // pred_fallthru
      _
    // Predicated region
    $region42: #{tpu_custom_call.1} parent=1 // pred_check
      _
    $region43: #{tpu_custom_call.1} parent=1 // pred_check_branch
      %101 = sbr.rel (0) target = $region45
    $region44: #{tpu_custom_call.1} parent=1 // pred_region
      _
    $region45: #{tpu_custom_call.1} parent=1 // pred_fallthru
      _
    // Predicated region
    $region46: #{tpu_custom_call.1} parent=1 // pred_check
      _
    $region47: #{tpu_custom_call.1} parent=1 // pred_check_branch
      %103 = sbr.rel (0) target = $region49
    $region48: #{tpu_custom_call.1} parent=1 // pred_region
      _
    $region49: #{tpu_custom_call.1} parent=1 // pred_fallthru
      _
    // Predicated region
    $region50: #{tpu_custom_call.1} parent=1 // pred_check
      _
    $region51: #{tpu_custom_call.1} parent=1 // pred_check_branch
      %105 = sbr.rel (0) target = $region53
    $region52: #{tpu_custom_call.1} parent=1 // pred_region
      _
    $region53: #{tpu_custom_call.1} parent=1 // pred_fallthru
      _
    // Predicated region
    $region54: #{tpu_custom_call.1} parent=1 // pred_check
      _
    $region55: #{tpu_custom_call.1} parent=1 // pred_check_branch
      %107 = sbr.rel (0) target = $region57
    $region56: #{tpu_custom_call.1} parent=1 // pred_region
      %108 = dma.done [#allocation4], 128
    $region57: #{tpu_custom_call.1} parent=1 // pred_fallthru
      _
    // Predicated region
    $region58: #{tpu_custom_call.1} parent=1 // pred_check
      _
    $region59: #{tpu_custom_call.1} parent=1 // pred_check_branch
      %110 = sbr.rel (0) target = $region61
    $region60: #{tpu_custom_call.1} parent=1 // pred_region
      %111 = dma.done [#allocation6], 128
    $region61: #{tpu_custom_call.1} parent=1 // pred_fallthru
      _
    // Predicated region
    $region62: #{tpu_custom_call.1} parent=1 // pred_check
      _
    $region63: #{tpu_custom_call.1} parent=1 // pred_check_branch
      %113 = sbr.rel (0) target = $region65
    $region64: #{tpu_custom_call.1} parent=1 // pred_region
      %114 = dma.done [#allocation6], 768
    $region65: #{tpu_custom_call.1} parent=1 // pred_fallthru
      _
    // Predicated region
    $region66: #{tpu_custom_call.1} parent=1 // pred_check
      _
    $region67: #{tpu_custom_call.1} parent=1 // pred_check_branch
      %116 = sbr.rel (0) target = $region69
    $region68: #{tpu_custom_call.1} parent=1 // pred_region
      %117 = dma.done [#allocation9], 16384
    $region69: #{tpu_custom_call.1} parent=1 // pred_fallthru
      _
    // Predicated region
    $region70: #{tpu_custom_call.1} parent=1 // pred_check
      _
    $region71: #{tpu_custom_call.1} parent=1 // pred_check_branch
      %119 = sbr.rel (0) target = $region73
    $region72: #{tpu_custom_call.1} parent=1 // pred_region
      %120 = dma.done [#allocation9], 16384
    $region73: #{tpu_custom_call.1} parent=1 // pred_fallthru
      _
    // Predicated region
    $region74: #{tpu_custom_call.1} parent=1 // pred_check
      _
    $region75: #{tpu_custom_call.1} parent=1 // pred_check_branch
      %122 = sbr.rel (0) target = $region77
    $region76: #{tpu_custom_call.1} parent=1 // pred_region
      %123 = dma.done [#allocation12], 16384
    $region77: #{tpu_custom_call.1} parent=1 // pred_fallthru
      _
    %v125 = vld [vmem:[#allocation3] sm:$0xff]
    %v126 = vpack.c.bf16 %v125, %v125
    %v127 = vld [vmem:[#allocation5] sm:$0xff]
    %v128 = vpack.c.bf16 %v127, %v127
    %v129 = vld [vmem:[#allocation7] sm:$0xff]
    %v130 = vld [vmem:[#allocation7 + $0x8] sm:$0xff]
    %v131 = vld [vmem:[#allocation7 + $0x10] sm:$0xff]
    %v132 = vld [vmem:[#allocation7 + $0x18] sm:$0xff]
    %v133 = vld [vmem:[#allocation7 + $0x20] sm:$0xff]
    %v134 = vld [vmem:[#allocation7 + $0x28] sm:$0xff]
    %v135 = vld [vmem:[%s3] sm:$0xf]
    %v137 = vlaneseq
    %v138 = vshrl.u32 %v137, 7
    %v139 = vsub.s32 0, %v138
    %v140 = vrot.slane %v135, %v139
    %v141 = vlaneseq
    %v142 = vshrl.u32 %v141, 7
    %v143 = vsub.s32 1, %v142
    %v144 = vrot.slane %v135, %v143
    %v145 = vlaneseq
    %v146 = vshrl.u32 %v145, 7
    %v147 = vsub.s32 2, %v146
    %v148 = vrot.slane %v135, %v147
    %v149 = vlaneseq
    %v150 = vshrl.u32 %v149, 7
    %v151 = vsub.s32 3, %v150
    %v152 = vrot.slane %v135, %v151
    %v163 = vunpack.c.l.b16 %v129
    %v164 = vunpack.c.h.b16 %v129
    %v165 = vunpack.c.l.b16 %v130
    %v166 = vunpack.c.h.b16 %v130
    %v167 = vunpack.c.l.b16 %v131
    %v168 = vunpack.c.h.b16 %v131
    %v169 = vunpack.c.l.b16 %v132
    %v170 = vunpack.c.h.b16 %v132
    %v171 = vunpack.c.l.b16 %v133
    %v172 = vunpack.c.h.b16 %v133
    %v173 = vunpack.c.l.b16 %v134
    %v174 = vunpack.c.h.b16 %v134
    %v175 = vpack.c.b16 %v167, %v163
    %v176 = vpack.c.b16 %v168, %v164
    %v177 = vpack.c.b16 %v169, %v165
    %v178 = vpack.c.b16 %v170, %v166
    %v179 = vpack.c.b16 %v171, %v171
    %v180 = vpack.c.b16 %v172, %v172
    %v181 = vpack.c.b16 %v173, %v173
    %v182 = vpack.c.b16 %v174, %v174
    %vm187 = vcmask 195584
    %v189 = vsel %vm187, %v126, 0
    %vm191 = vcmask 1043456
    %v193 = vsel %vm191, %v179, 0
    %v196 = vsel %vm191, %v180, 0
    %v199 = vsel %vm191, %v181, 0
    %v202 = vsel %vm191, %v182, 0
    %204 = vmatprep.subr.bf16.mxu0 %v176
    %205 = vmatpush1.bf16.msra.mxu0 %v175
    %206 = vmatprep.subr.bf16.mxu0 %v196
    %207 = vmatpush1.bf16.msra.mxu0 %v193
    %208 = vmatprep.subr.bf16.mxu0 0
    %209 = vmatpush1.bf16.msra.mxu0 0
    %210 = vmatprep.subr.bf16.mxu0 0
    %211 = vmatpush1.bf16.msra.mxu0 0
    %212 = vmatprep.subr.bf16.mxu0 0
    %213 = vmatpush1.bf16.msra.mxu0 0
    %214 = vmatprep.subr.bf16.mxu0 0
    %215 = vmatpush1.bf16.msra.mxu0 0
    %216 = vmatprep.subr.bf16.mxu0 0
    %217 = vmatpush1.bf16.msra.mxu0 0
    %218 = vmatprep.subr.bf16.mxu0 0
    %219 = vmatpush1.bf16.msra.mxu0 0
    %220 = vmatprep.subr.bf16.mxu0 0
    %221 = vmatpush1.bf16.msra.mxu0 0
    %222 = vmatprep.subr.bf16.mxu0 0
    %223 = vmatpush1.bf16.msra.mxu0 0
    %224 = vmatprep.subr.bf16.mxu0 0
    %225 = vmatpush1.bf16.msra.mxu0 0
    %226 = vmatprep.subr.bf16.mxu0 0
    %227 = vmatpush1.bf16.msra.mxu0 0
    %228 = vmatprep.subr.bf16.mxu0 0
    %229 = vmatpush1.bf16.msra.mxu0 0
    %230 = vmatprep.subr.bf16.mxu0 0
    %231 = vmatpush1.bf16.msra.mxu0 0
    %232 = vmatprep.subr.bf16.mxu0 0
    %233 = vmatpush1.bf16.msra.mxu0 0
    %234 = vmatprep.subr.bf16.mxu0 0
    %235 = vmatpush1.bf16.msra.mxu0 0
    %236 = vmatprep.mubr.bf16.mxu0 0
    %237 = vmatmul.mubr.bf16.gmra.mrb[0].mxu0 %v189
    %v238 = vpop.f32.mrb[0].mxu0
    %v239 = vadd.f32 %v140, %v238
    %v240 = vpop.f32.mrb[0].mxu0
    %v241 = vadd.f32 %v144, %v240
    %v242 = vpop.f32.mrb[0].mxu0
    %v243 = vpop.f32.mrb[0].mxu0
    %244 = vdwg.mxu0
    %245 = vmatprep.subr.bf16.mxu0 %v178
    %246 = vmatpush1.bf16.msra.mxu0 %v177
    %247 = vmatprep.subr.bf16.mxu0 %v202
    %248 = vmatpush1.bf16.msra.mxu0 %v199
    %249 = vmatprep.subr.bf16.mxu0 0
    %250 = vmatpush1.bf16.msra.mxu0 0
    %251 = vmatprep.subr.bf16.mxu0 0
    %252 = vmatpush1.bf16.msra.mxu0 0
    %253 = vmatprep.subr.bf16.mxu0 0
    %254 = vmatpush1.bf16.msra.mxu0 0
    %255 = vmatprep.subr.bf16.mxu0 0
    %256 = vmatpush1.bf16.msra.mxu0 0
    %257 = vmatprep.subr.bf16.mxu0 0
    %258 = vmatpush1.bf16.msra.mxu0 0
    %259 = vmatprep.subr.bf16.mxu0 0
    %260 = vmatpush1.bf16.msra.mxu0 0
    %261 = vmatprep.subr.bf16.mxu0 0
    %262 = vmatpush1.bf16.msra.mxu0 0
    %263 = vmatprep.subr.bf16.mxu0 0
    %264 = vmatpush1.bf16.msra.mxu0 0
    %265 = vmatprep.subr.bf16.mxu0 0
    %266 = vmatpush1.bf16.msra.mxu0 0
    %267 = vmatprep.subr.bf16.mxu0 0
    %268 = vmatpush1.bf16.msra.mxu0 0
    %269 = vmatprep.subr.bf16.mxu0 0
    %270 = vmatpush1.bf16.msra.mxu0 0
    %271 = vmatprep.subr.bf16.mxu0 0
    %272 = vmatpush1.bf16.msra.mxu0 0
    %273 = vmatprep.subr.bf16.mxu0 0
    %274 = vmatpush1.bf16.msra.mxu0 0
    %275 = vmatprep.subr.bf16.mxu0 0
    %276 = vmatpush1.bf16.msra.mxu0 0
    %277 = vmatprep.mubr.bf16.mxu0 0
    %278 = vmatmul.mubr.bf16.gmra.mrb[0].mxu0 %v189
    %v279 = vpop.f32.mrb[0].mxu0
    %v280 = vadd.f32 %v148, %v279
    %v281 = vpop.f32.mrb[0].mxu0
    %v282 = vadd.f32 %v152, %v281
    %v283 = vpop.f32.mrb[0].mxu0
    %v284 = vpop.f32.mrb[0].mxu0
    %285 = vdwg.mxu0
    %v286 = vsub.f32 0.0, %v239
    %v287 = vsub.f32 0.0, %v241
    %v288 = vsub.f32 0.0, %v280
    %v289 = vsub.f32 0.0, %v282
    %v290 = vmul.f32 %v286, 1.442695
    %v291 = vpow.pop %v290
    %v292 = vmul.f32 %v287, 1.442695
    %v293 = vpow.pop %v292
    %v294 = vmul.f32 %v288, 1.442695
    %v295 = vpow.pop %v294
    %v296 = vmul.f32 %v289, 1.442695
    %v297 = vpow.pop %v296
    %v298 = vadd.f32 %v291, 1.0
    %v299 = vadd.f32 %v293, 1.0
    %v300 = vadd.f32 %v295, 1.0
    %v301 = vadd.f32 %v297, 1.0
    %v302 = vrcp.pop %v298
    %v303 = vrcp.pop %v299
    %v304 = vrcp.pop %v300
    %v305 = vrcp.pop %v301
    %v306 = vmul.f32 %v239, %v302
    %v307 = vmul.f32 %v241, %v303
    %v308 = vmul.f32 %v280, %v304
    %v309 = vmul.f32 %v282, %v305
    %v310 = vpack.c.bf16 %v306, %v306
    %v311 = vpack.c.bf16 %v307, %v307
    %v312 = vpack.c.bf16 %v308, %v308
    %v313 = vpack.c.bf16 %v309, %v309
    %v314 = vld [vmem:[#allocation8] sm:$0xff]
    %v315 = vld [vmem:[#allocation8 + $0x8] sm:$0xff]
    %v316 = vld [vmem:[#allocation8 + $0x10] sm:$0xff]
    %v317 = vld [vmem:[#allocation8 + $0x18] sm:$0xff]
    %v318 = vld [vmem:[#allocation8 + $0x20] sm:$0xff]
    %v319 = vld [vmem:[#allocation8 + $0x28] sm:$0xff]
    %v320 = vld [vmem:[#allocation8 + $0x30] sm:$0xff]
    %v321 = vld [vmem:[#allocation8 + $0x38] sm:$0xff]
    %v322 = vld [vmem:[#allocation8 + $0x40] sm:$0xff]
    %v323 = vld [vmem:[#allocation8 + $0x48] sm:$0xff]
    %v324 = vld [vmem:[#allocation8 + $0x50] sm:$0xff]
    %v325 = vld [vmem:[#allocation8 + $0x58] sm:$0xff]
    %v326 = vld [vmem:[#allocation8 + $0x60] sm:$0xff]
    %v327 = vld [vmem:[#allocation8 + $0x68] sm:$0xff]
    %v328 = vld [vmem:[#allocation8 + $0x70] sm:$0xff]
    %v329 = vld [vmem:[#allocation8 + $0x78] sm:$0xff]
    %v330 = vld [vmem:[#allocation8 + $0x80] sm:$0xff]
    %v331 = vld [vmem:[#allocation8 + $0x88] sm:$0xff]
    %v332 = vld [vmem:[#allocation8 + $0x90] sm:$0xff]
    %v333 = vld [vmem:[#allocation8 + $0x98] sm:$0xff]
    %v334 = vld [vmem:[#allocation8 + $0xa0] sm:$0xff]
    %v335 = vld [vmem:[#allocation8 + $0xa8] sm:$0xff]
    %v336 = vld [vmem:[#allocation8 + $0xb0] sm:$0xff]
    %v337 = vld [vmem:[#allocation8 + $0xb8] sm:$0xff]
    %v338 = vld [vmem:[#allocation8 + $0xc0] sm:$0xff]
    %v339 = vld [vmem:[#allocation8 + $0xc8] sm:$0xff]
    %v340 = vld [vmem:[#allocation8 + $0xd0] sm:$0xff]
    %v341 = vld [vmem:[#allocation8 + $0xd8] sm:$0xff]
    %v342 = vld [vmem:[#allocation8 + $0xe0] sm:$0xff]
    %v343 = vld [vmem:[#allocation8 + $0xe8] sm:$0xff]
    %v344 = vld [vmem:[#allocation8 + $0xf0] sm:$0xff]
    %v345 = vld [vmem:[#allocation8 + $0xf8] sm:$0xff]
    %v346 = vld [vmem:[#allocation8 + $0x100] sm:$0xff]
    %v347 = vld [vmem:[#allocation8 + $0x108] sm:$0xff]
    %v348 = vld [vmem:[#allocation8 + $0x110] sm:$0xff]
    %v349 = vld [vmem:[#allocation8 + $0x118] sm:$0xff]
    %v350 = vld [vmem:[#allocation8 + $0x120] sm:$0xff]
    %v351 = vld [vmem:[#allocation8 + $0x128] sm:$0xff]
    %v352 = vld [vmem:[#allocation8 + $0x130] sm:$0xff]
    %v353 = vld [vmem:[#allocation8 + $0x138] sm:$0xff]
    %v354 = vld [vmem:[#allocation8 + $0x140] sm:$0xff]
    %v355 = vld [vmem:[#allocation8 + $0x148] sm:$0xff]
    %v356 = vld [vmem:[#allocation8 + $0x150] sm:$0xff]
    %v357 = vld [vmem:[#allocation8 + $0x158] sm:$0xff]
    %v358 = vld [vmem:[#allocation8 + $0x160] sm:$0xff]
    %v359 = vld [vmem:[#allocation8 + $0x168] sm:$0xff]
    %v360 = vld [vmem:[#allocation8 + $0x170] sm:$0xff]
    %v361 = vld [vmem:[#allocation8 + $0x178] sm:$0xff]
    %v362 = vld [vmem:[#allocation8 + $0x180] sm:$0xff]
    %v363 = vld [vmem:[#allocation8 + $0x188] sm:$0xff]
    %v364 = vld [vmem:[#allocation8 + $0x190] sm:$0xff]
    %v365 = vld [vmem:[#allocation8 + $0x198] sm:$0xff]
    %v366 = vld [vmem:[#allocation8 + $0x1a0] sm:$0xff]
    %v367 = vld [vmem:[#allocation8 + $0x1a8] sm:$0xff]
    %v368 = vld [vmem:[#allocation8 + $0x1b0] sm:$0xff]
    %v369 = vld [vmem:[#allocation8 + $0x1b8] sm:$0xff]
    %v370 = vld [vmem:[#allocation8 + $0x1c0] sm:$0xff]
    %v371 = vld [vmem:[#allocation8 + $0x1c8] sm:$0xff]
    %v372 = vld [vmem:[#allocation8 + $0x1d0] sm:$0xff]
    %v373 = vld [vmem:[#allocation8 + $0x1d8] sm:$0xff]
    %v374 = vld [vmem:[#allocation8 + $0x1e0] sm:$0xff]
    %v375 = vld [vmem:[#allocation8 + $0x1e8] sm:$0xff]
    %v376 = vld [vmem:[#allocation8 + $0x1f0] sm:$0xff]
    %v377 = vld [vmem:[#allocation8 + $0x1f8] sm:$0xff]
    %v378 = vld [vmem:[#allocation8 + $0x200] sm:$0xff]
    %v379 = vld [vmem:[#allocation8 + $0x208] sm:$0xff]
    %v380 = vld [vmem:[#allocation8 + $0x210] sm:$0xff]
    %v381 = vld [vmem:[#allocation8 + $0x218] sm:$0xff]
    %v382 = vld [vmem:[#allocation8 + $0x220] sm:$0xff]
    %v383 = vld [vmem:[#allocation8 + $0x228] sm:$0xff]
    %v384 = vld [vmem:[#allocation8 + $0x230] sm:$0xff]
    %v385 = vld [vmem:[#allocation8 + $0x238] sm:$0xff]
    %v386 = vld [vmem:[#allocation8 + $0x240] sm:$0xff]
    %v387 = vld [vmem:[#allocation8 + $0x248] sm:$0xff]
    %v388 = vld [vmem:[#allocation8 + $0x250] sm:$0xff]
    %v389 = vld [vmem:[#allocation8 + $0x258] sm:$0xff]
    %v390 = vld [vmem:[#allocation8 + $0x260] sm:$0xff]
    %v391 = vld [vmem:[#allocation8 + $0x268] sm:$0xff]
    %v392 = vld [vmem:[#allocation8 + $0x270] sm:$0xff]
    %v393 = vld [vmem:[#allocation8 + $0x278] sm:$0xff]
    %v394 = vld [vmem:[#allocation8 + $0x280] sm:$0xff]
    %v395 = vld [vmem:[#allocation8 + $0x288] sm:$0xff]
    %v396 = vld [vmem:[#allocation8 + $0x290] sm:$0xff]
    %v397 = vld [vmem:[#allocation8 + $0x298] sm:$0xff]
    %v398 = vld [vmem:[#allocation8 + $0x2a0] sm:$0xff]
    %v399 = vld [vmem:[#allocation8 + $0x2a8] sm:$0xff]
    %v400 = vld [vmem:[#allocation8 + $0x2b0] sm:$0xff]
    %v401 = vld [vmem:[#allocation8 + $0x2b8] sm:$0xff]
    %v402 = vld [vmem:[#allocation8 + $0x2c0] sm:$0xff]
    %v403 = vld [vmem:[#allocation8 + $0x2c8] sm:$0xff]
    %v404 = vld [vmem:[#allocation8 + $0x2d0] sm:$0xff]
    %v405 = vld [vmem:[#allocation8 + $0x2d8] sm:$0xff]
    %v406 = vld [vmem:[#allocation8 + $0x2e0] sm:$0xff]
    %v407 = vld [vmem:[#allocation8 + $0x2e8] sm:$0xff]
    %v408 = vld [vmem:[#allocation8 + $0x2f0] sm:$0xff]
    %v409 = vld [vmem:[#allocation8 + $0x2f8] sm:$0xff]
    %v410 = vld [vmem:[#allocation8 + $0x300] sm:$0xff]
    %v411 = vld [vmem:[#allocation8 + $0x308] sm:$0xff]
    %v412 = vld [vmem:[#allocation8 + $0x310] sm:$0xff]
    %v413 = vld [vmem:[#allocation8 + $0x318] sm:$0xff]
    %v414 = vld [vmem:[#allocation8 + $0x320] sm:$0xff]
    %v415 = vld [vmem:[#allocation8 + $0x328] sm:$0xff]
    %v416 = vld [vmem:[#allocation8 + $0x330] sm:$0xff]
    %v417 = vld [vmem:[#allocation8 + $0x338] sm:$0xff]
    %v418 = vld [vmem:[#allocation8 + $0x340] sm:$0xff]
    %v419 = vld [vmem:[#allocation8 + $0x348] sm:$0xff]
    %v420 = vld [vmem:[#allocation8 + $0x350] sm:$0xff]
    %v421 = vld [vmem:[#allocation8 + $0x358] sm:$0xff]
    %v422 = vld [vmem:[#allocation8 + $0x360] sm:$0xff]
    %v423 = vld [vmem:[#allocation8 + $0x368] sm:$0xff]
    %v424 = vld [vmem:[#allocation8 + $0x370] sm:$0xff]
    %v425 = vld [vmem:[#allocation8 + $0x378] sm:$0xff]
    %v426 = vld [vmem:[#allocation8 + $0x380] sm:$0xff]
    %v427 = vld [vmem:[#allocation8 + $0x388] sm:$0xff]
    %v428 = vld [vmem:[#allocation8 + $0x390] sm:$0xff]
    %v429 = vld [vmem:[#allocation8 + $0x398] sm:$0xff]
    %v430 = vld [vmem:[#allocation8 + $0x3a0] sm:$0xff]
    %v431 = vld [vmem:[#allocation8 + $0x3a8] sm:$0xff]
    %v432 = vld [vmem:[#allocation8 + $0x3b0] sm:$0xff]
    %v433 = vld [vmem:[#allocation8 + $0x3b8] sm:$0xff]
    %v434 = vld [vmem:[#allocation8 + $0x3c0] sm:$0xff]
    %v435 = vld [vmem:[#allocation8 + $0x3c8] sm:$0xff]
    %v436 = vld [vmem:[#allocation8 + $0x3d0] sm:$0xff]
    %v437 = vld [vmem:[#allocation8 + $0x3d8] sm:$0xff]
    %v438 = vld [vmem:[#allocation8 + $0x3e0] sm:$0xff]
    %v439 = vld [vmem:[#allocation8 + $0x3e8] sm:$0xff]
    %v440 = vld [vmem:[#allocation8 + $0x3f0] sm:$0xff]
    %v441 = vld [vmem:[#allocation8 + $0x3f8] sm:$0xff]
    %v442 = vld [vmem:[%s5] sm:$0xf]
    %v444 = vlaneseq
    %v445 = vshrl.u32 %v444, 7
    %v446 = vsub.s32 0, %v445
    %v447 = vrot.slane %v442, %v446
    %v448 = vlaneseq
    %v449 = vshrl.u32 %v448, 7
    %v450 = vsub.s32 1, %v449
    %v451 = vrot.slane %v442, %v450
    %v452 = vlaneseq
    %v453 = vshrl.u32 %v452, 7
    %v454 = vsub.s32 2, %v453
    %v455 = vrot.slane %v442, %v454
    %v456 = vlaneseq
    %v457 = vshrl.u32 %v456, 7
    %v458 = vsub.s32 3, %v457
    %v459 = vrot.slane %v442, %v458
    %v592 = vunpack.c.l.b16 %v314
    %v593 = vunpack.c.h.b16 %v314
    %v594 = vunpack.c.l.b16 %v315
    %v595 = vunpack.c.h.b16 %v315
    %v596 = vunpack.c.l.b16 %v316
    %v597 = vunpack.c.h.b16 %v316
    %v598 = vunpack.c.l.b16 %v317
    %v599 = vunpack.c.h.b16 %v317
    %v600 = vunpack.c.l.b16 %v318
    %v601 = vunpack.c.h.b16 %v318
    %v602 = vunpack.c.l.b16 %v319
    %v603 = vunpack.c.h.b16 %v319
    %v604 = vunpack.c.l.b16 %v320
    %v605 = vunpack.c.h.b16 %v320
    %v606 = vunpack.c.l.b16 %v321
    %v607 = vunpack.c.h.b16 %v321
    %v608 = vunpack.c.l.b16 %v322
    %v609 = vunpack.c.h.b16 %v322
    %v610 = vunpack.c.l.b16 %v323
    %v611 = vunpack.c.h.b16 %v323
    %v612 = vunpack.c.l.b16 %v324
    %v613 = vunpack.c.h.b16 %v324
    %v614 = vunpack.c.l.b16 %v325
    %v615 = vunpack.c.h.b16 %v325
    %v616 = vunpack.c.l.b16 %v326
    %v617 = vunpack.c.h.b16 %v326
    %v618 = vunpack.c.l.b16 %v327
    %v619 = vunpack.c.h.b16 %v327
    %v620 = vunpack.c.l.b16 %v328
    %v621 = vunpack.c.h.b16 %v328
    %v622 = vunpack.c.l.b16 %v329
    %v623 = vunpack.c.h.b16 %v329
    %v624 = vunpack.c.l.b16 %v330
    %v625 = vunpack.c.h.b16 %v330
    %v626 = vunpack.c.l.b16 %v331
    %v627 = vunpack.c.h.b16 %v331
    %v628 = vunpack.c.l.b16 %v332
    %v629 = vunpack.c.h.b16 %v332
    %v630 = vunpack.c.l.b16 %v333
    %v631 = vunpack.c.h.b16 %v333
    %v632 = vunpack.c.l.b16 %v334
    %v633 = vunpack.c.h.b16 %v334
    %v634 = vunpack.c.l.b16 %v335
    %v635 = vunpack.c.h.b16 %v335
    %v636 = vunpack.c.l.b16 %v336
    %v637 = vunpack.c.h.b16 %v336
    %v638 = vunpack.c.l.b16 %v337
    %v639 = vunpack.c.h.b16 %v337
    %v640 = vunpack.c.l.b16 %v338
    %v641 = vunpack.c.h.b16 %v338
    %v642 = vunpack.c.l.b16 %v339
    %v643 = vunpack.c.h.b16 %v339
    %v644 = vunpack.c.l.b16 %v340
    %v645 = vunpack.c.h.b16 %v340
    %v646 = vunpack.c.l.b16 %v341
    %v647 = vunpack.c.h.b16 %v341
    %v648 = vunpack.c.l.b16 %v342
    %v649 = vunpack.c.h.b16 %v342
    %v650 = vunpack.c.l.b16 %v343
    %v651 = vunpack.c.h.b16 %v343
    %v652 = vunpack.c.l.b16 %v344
    %v653 = vunpack.c.h.b16 %v344
    %v654 = vunpack.c.l.b16 %v345
    %v655 = vunpack.c.h.b16 %v345
    %v656 = vunpack.c.l.b16 %v346
    %v657 = vunpack.c.h.b16 %v346
    %v658 = vunpack.c.l.b16 %v347
    %v659 = vunpack.c.h.b16 %v347
    %v660 = vunpack.c.l.b16 %v348
    %v661 = vunpack.c.h.b16 %v348
    %v662 = vunpack.c.l.b16 %v349
    %v663 = vunpack.c.h.b16 %v349
    %v664 = vunpack.c.l.b16 %v350
    %v665 = vunpack.c.h.b16 %v350
    %v666 = vunpack.c.l.b16 %v351
    %v667 = vunpack.c.h.b16 %v351
    %v668 = vunpack.c.l.b16 %v352
    %v669 = vunpack.c.h.b16 %v352
    %v670 = vunpack.c.l.b16 %v353
    %v671 = vunpack.c.h.b16 %v353
    %v672 = vunpack.c.l.b16 %v354
    %v673 = vunpack.c.h.b16 %v354
    %v674 = vunpack.c.l.b16 %v355
    %v675 = vunpack.c.h.b16 %v355
    %v676 = vunpack.c.l.b16 %v356
    %v677 = vunpack.c.h.b16 %v356
    %v678 = vunpack.c.l.b16 %v357
    %v679 = vunpack.c.h.b16 %v357
    %v680 = vunpack.c.l.b16 %v358
    %v681 = vunpack.c.h.b16 %v358
    %v682 = vunpack.c.l.b16 %v359
    %v683 = vunpack.c.h.b16 %v359
    %v684 = vunpack.c.l.b16 %v360
    %v685 = vunpack.c.h.b16 %v360
    %v686 = vunpack.c.l.b16 %v361
    %v687 = vunpack.c.h.b16 %v361
    %v688 = vunpack.c.l.b16 %v362
    %v689 = vunpack.c.h.b16 %v362
    %v690 = vunpack.c.l.b16 %v363
    %v691 = vunpack.c.h.b16 %v363
    %v692 = vunpack.c.l.b16 %v364
    %v693 = vunpack.c.h.b16 %v364
    %v694 = vunpack.c.l.b16 %v365
    %v695 = vunpack.c.h.b16 %v365
    %v696 = vunpack.c.l.b16 %v366
    %v697 = vunpack.c.h.b16 %v366
    %v698 = vunpack.c.l.b16 %v367
    %v699 = vunpack.c.h.b16 %v367
    %v700 = vunpack.c.l.b16 %v368
    %v701 = vunpack.c.h.b16 %v368
    %v702 = vunpack.c.l.b16 %v369
    %v703 = vunpack.c.h.b16 %v369
    %v704 = vunpack.c.l.b16 %v370
    %v705 = vunpack.c.h.b16 %v370
    %v706 = vunpack.c.l.b16 %v371
    %v707 = vunpack.c.h.b16 %v371
    %v708 = vunpack.c.l.b16 %v372
    %v709 = vunpack.c.h.b16 %v372
    %v710 = vunpack.c.l.b16 %v373
    %v711 = vunpack.c.h.b16 %v373
    %v712 = vunpack.c.l.b16 %v374
    %v713 = vunpack.c.h.b16 %v374
    %v714 = vunpack.c.l.b16 %v375
    %v715 = vunpack.c.h.b16 %v375
    %v716 = vunpack.c.l.b16 %v376
    %v717 = vunpack.c.h.b16 %v376
    %v718 = vunpack.c.l.b16 %v377
    %v719 = vunpack.c.h.b16 %v377
    %v720 = vunpack.c.l.b16 %v378
    %v721 = vunpack.c.h.b16 %v378
    %v722 = vunpack.c.l.b16 %v379
    %v723 = vunpack.c.h.b16 %v379
    %v724 = vunpack.c.l.b16 %v380
    %v725 = vunpack.c.h.b16 %v380
    %v726 = vunpack.c.l.b16 %v381
    %v727 = vunpack.c.h.b16 %v381
    %v728 = vunpack.c.l.b16 %v382
    %v729 = vunpack.c.h.b16 %v382
    %v730 = vunpack.c.l.b16 %v383
    %v731 = vunpack.c.h.b16 %v383
    %v732 = vunpack.c.l.b16 %v384
    %v733 = vunpack.c.h.b16 %v384
    %v734 = vunpack.c.l.b16 %v385
    %v735 = vunpack.c.h.b16 %v385
    %v736 = vunpack.c.l.b16 %v386
    %v737 = vunpack.c.h.b16 %v386
    %v738 = vunpack.c.l.b16 %v387
    %v739 = vunpack.c.h.b16 %v387
    %v740 = vunpack.c.l.b16 %v388
    %v741 = vunpack.c.h.b16 %v388
    %v742 = vunpack.c.l.b16 %v389
    %v743 = vunpack.c.h.b16 %v389
    %v744 = vunpack.c.l.b16 %v390
    %v745 = vunpack.c.h.b16 %v390
    %v746 = vunpack.c.l.b16 %v391
    %v747 = vunpack.c.h.b16 %v391
    %v748 = vunpack.c.l.b16 %v392
    %v749 = vunpack.c.h.b16 %v392
    %v750 = vunpack.c.l.b16 %v393
    %v751 = vunpack.c.h.b16 %v393
    %v752 = vunpack.c.l.b16 %v394
    %v753 = vunpack.c.h.b16 %v394
    %v754 = vunpack.c.l.b16 %v395
    %v755 = vunpack.c.h.b16 %v395
    %v756 = vunpack.c.l.b16 %v396
    %v757 = vunpack.c.h.b16 %v396
    %v758 = vunpack.c.l.b16 %v397
    %v759 = vunpack.c.h.b16 %v397
    %v760 = vunpack.c.l.b16 %v398
    %v761 = vunpack.c.h.b16 %v398
    %v762 = vunpack.c.l.b16 %v399
    %v763 = vunpack.c.h.b16 %v399
    %v764 = vunpack.c.l.b16 %v400
    %v765 = vunpack.c.h.b16 %v400
    %v766 = vunpack.c.l.b16 %v401
    %v767 = vunpack.c.h.b16 %v401
    %v768 = vunpack.c.l.b16 %v402
    %v769 = vunpack.c.h.b16 %v402
    %v770 = vunpack.c.l.b16 %v403
    %v771 = vunpack.c.h.b16 %v403
    %v772 = vunpack.c.l.b16 %v404
    %v773 = vunpack.c.h.b16 %v404
    %v774 = vunpack.c.l.b16 %v405
    %v775 = vunpack.c.h.b16 %v405
    %v776 = vunpack.c.l.b16 %v406
    %v777 = vunpack.c.h.b16 %v406
    %v778 = vunpack.c.l.b16 %v407
    %v779 = vunpack.c.h.b16 %v407
    %v780 = vunpack.c.l.b16 %v408
    %v781 = vunpack.c.h.b16 %v408
    %v782 = vunpack.c.l.b16 %v409
    %v783 = vunpack.c.h.b16 %v409
    %v784 = vunpack.c.l.b16 %v410
    %v785 = vunpack.c.h.b16 %v410
    %v786 = vunpack.c.l.b16 %v411
    %v787 = vunpack.c.h.b16 %v411
    %v788 = vunpack.c.l.b16 %v412
    %v789 = vunpack.c.h.b16 %v412
    %v790 = vunpack.c.l.b16 %v413
    %v791 = vunpack.c.h.b16 %v413
    %v792 = vunpack.c.l.b16 %v414
    %v793 = vunpack.c.h.b16 %v414
    %v794 = vunpack.c.l.b16 %v415
    %v795 = vunpack.c.h.b16 %v415
    %v796 = vunpack.c.l.b16 %v416
    %v797 = vunpack.c.h.b16 %v416
    %v798 = vunpack.c.l.b16 %v417
    %v799 = vunpack.c.h.b16 %v417
    %v800 = vunpack.c.l.b16 %v418
    %v801 = vunpack.c.h.b16 %v418
    %v802 = vunpack.c.l.b16 %v419
    %v803 = vunpack.c.h.b16 %v419
    %v804 = vunpack.c.l.b16 %v420
    %v805 = vunpack.c.h.b16 %v420
    %v806 = vunpack.c.l.b16 %v421
    %v807 = vunpack.c.h.b16 %v421
    %v808 = vunpack.c.l.b16 %v422
    %v809 = vunpack.c.h.b16 %v422
    %v810 = vunpack.c.l.b16 %v423
    %v811 = vunpack.c.h.b16 %v423
    %v812 = vunpack.c.l.b16 %v424
    %v813 = vunpack.c.h.b16 %v424
    %v814 = vunpack.c.l.b16 %v425
    %v815 = vunpack.c.h.b16 %v425
    %v816 = vunpack.c.l.b16 %v426
    %v817 = vunpack.c.h.b16 %v426
    %v818 = vunpack.c.l.b16 %v427
    %v819 = vunpack.c.h.b16 %v427
    %v820 = vunpack.c.l.b16 %v428
    %v821 = vunpack.c.h.b16 %v428
    %v822 = vunpack.c.l.b16 %v429
    %v823 = vunpack.c.h.b16 %v429
    %v824 = vunpack.c.l.b16 %v430
    %v825 = vunpack.c.h.b16 %v430
    %v826 = vunpack.c.l.b16 %v431
    %v827 = vunpack.c.h.b16 %v431
    %v828 = vunpack.c.l.b16 %v432
    %v829 = vunpack.c.h.b16 %v432
    %v830 = vunpack.c.l.b16 %v433
    %v831 = vunpack.c.h.b16 %v433
    %v832 = vunpack.c.l.b16 %v434
    %v833 = vunpack.c.h.b16 %v434
    %v834 = vunpack.c.l.b16 %v435
    %v835 = vunpack.c.h.b16 %v435
    %v836 = vunpack.c.l.b16 %v436
    %v837 = vunpack.c.h.b16 %v436
    %v838 = vunpack.c.l.b16 %v437
    %v839 = vunpack.c.h.b16 %v437
    %v840 = vunpack.c.l.b16 %v438
    %v841 = vunpack.c.h.b16 %v438
    %v842 = vunpack.c.l.b16 %v439
    %v843 = vunpack.c.h.b16 %v439
    %v844 = vunpack.c.l.b16 %v440
    %v845 = vunpack.c.h.b16 %v440
    %v846 = vunpack.c.l.b16 %v441
    %v847 = vunpack.c.h.b16 %v441
    %v848 = vpack.c.b16 %v596, %v592
    %v849 = vpack.c.b16 %v597, %v593
    %v850 = vpack.c.b16 %v598, %v594
    %v851 = vpack.c.b16 %v599, %v595
    %v852 = vpack.c.b16 %v604, %v600
    %v853 = vpack.c.b16 %v605, %v601
    %v854 = vpack.c.b16 %v606, %v602
    %v855 = vpack.c.b16 %v607, %v603
    %v856 = vpack.c.b16 %v612, %v608
    %v857 = vpack.c.b16 %v613, %v609
    %v858 = vpack.c.b16 %v614, %v610
    %v859 = vpack.c.b16 %v615, %v611
    %v860 = vpack.c.b16 %v620, %v616
    %v861 = vpack.c.b16 %v621, %v617
    %v862 = vpack.c.b16 %v622, %v618
    %v863 = vpack.c.b16 %v623, %v619
    %v864 = vpack.c.b16 %v628, %v624
    %v865 = vpack.c.b16 %v629, %v625
    %v866 = vpack.c.b16 %v630, %v626
    %v867 = vpack.c.b16 %v631, %v627
    %v868 = vpack.c.b16 %v636, %v632
    %v869 = vpack.c.b16 %v637, %v633
    %v870 = vpack.c.b16 %v638, %v634
    %v871 = vpack.c.b16 %v639, %v635
    %v872 = vpack.c.b16 %v644, %v640
    %v873 = vpack.c.b16 %v645, %v641
    %v874 = vpack.c.b16 %v646, %v642
    %v875 = vpack.c.b16 %v647, %v643
    %v876 = vpack.c.b16 %v652, %v648
    %v877 = vpack.c.b16 %v653, %v649
    %v878 = vpack.c.b16 %v654, %v650
    %v879 = vpack.c.b16 %v655, %v651
    %v880 = vpack.c.b16 %v660, %v656
    %v881 = vpack.c.b16 %v661, %v657
    %v882 = vpack.c.b16 %v662, %v658
    %v883 = vpack.c.b16 %v663, %v659
    %v884 = vpack.c.b16 %v668, %v664
    %v885 = vpack.c.b16 %v669, %v665
    %v886 = vpack.c.b16 %v670, %v666
    %v887 = vpack.c.b16 %v671, %v667
    %v888 = vpack.c.b16 %v676, %v672
    %v889 = vpack.c.b16 %v677, %v673
    %v890 = vpack.c.b16 %v678, %v674
    %v891 = vpack.c.b16 %v679, %v675
    %v892 = vpack.c.b16 %v684, %v680
    %v893 = vpack.c.b16 %v685, %v681
    %v894 = vpack.c.b16 %v686, %v682
    %v895 = vpack.c.b16 %v687, %v683
    %v896 = vpack.c.b16 %v692, %v688
    %v897 = vpack.c.b16 %v693, %v689
    %v898 = vpack.c.b16 %v694, %v690
    %v899 = vpack.c.b16 %v695, %v691
    %v900 = vpack.c.b16 %v700, %v696
    %v901 = vpack.c.b16 %v701, %v697
    %v902 = vpack.c.b16 %v702, %v698
    %v903 = vpack.c.b16 %v703, %v699
    %v904 = vpack.c.b16 %v708, %v704
    %v905 = vpack.c.b16 %v709, %v705
    %v906 = vpack.c.b16 %v710, %v706
    %v907 = vpack.c.b16 %v711, %v707
    %v908 = vpack.c.b16 %v716, %v712
    %v909 = vpack.c.b16 %v717, %v713
    %v910 = vpack.c.b16 %v718, %v714
    %v911 = vpack.c.b16 %v719, %v715
    %v912 = vpack.c.b16 %v724, %v720
    %v913 = vpack.c.b16 %v725, %v721
    %v914 = vpack.c.b16 %v726, %v722
    %v915 = vpack.c.b16 %v727, %v723
    %v916 = vpack.c.b16 %v732, %v728
    %v917 = vpack.c.b16 %v733, %v729
    %v918 = vpack.c.b16 %v734, %v730
    %v919 = vpack.c.b16 %v735, %v731
    %v920 = vpack.c.b16 %v740, %v736
    %v921 = vpack.c.b16 %v741, %v737
    %v922 = vpack.c.b16 %v742, %v738
    %v923 = vpack.c.b16 %v743, %v739
    %v924 = vpack.c.b16 %v748, %v744
    %v925 = vpack.c.b16 %v749, %v745
    %v926 = vpack.c.b16 %v750, %v746
    %v927 = vpack.c.b16 %v751, %v747
    %v928 = vpack.c.b16 %v756, %v752
    %v929 = vpack.c.b16 %v757, %v753
    %v930 = vpack.c.b16 %v758, %v754
    %v931 = vpack.c.b16 %v759, %v755
    %v932 = vpack.c.b16 %v764, %v760
    %v933 = vpack.c.b16 %v765, %v761
    %v934 = vpack.c.b16 %v766, %v762
    %v935 = vpack.c.b16 %v767, %v763
    %v936 = vpack.c.b16 %v772, %v768
    %v937 = vpack.c.b16 %v773, %v769
    %v938 = vpack.c.b16 %v774, %v770
    %v939 = vpack.c.b16 %v775, %v771
    %v940 = vpack.c.b16 %v780, %v776
    %v941 = vpack.c.b16 %v781, %v777
    %v942 = vpack.c.b16 %v782, %v778
    %v943 = vpack.c.b16 %v783, %v779
    %v944 = vpack.c.b16 %v788, %v784
    %v945 = vpack.c.b16 %v789, %v785
    %v946 = vpack.c.b16 %v790, %v786
    %v947 = vpack.c.b16 %v791, %v787
    %v948 = vpack.c.b16 %v796, %v792
    %v949 = vpack.c.b16 %v797, %v793
    %v950 = vpack.c.b16 %v798, %v794
    %v951 = vpack.c.b16 %v799, %v795
    %v952 = vpack.c.b16 %v804, %v800
    %v953 = vpack.c.b16 %v805, %v801
    %v954 = vpack.c.b16 %v806, %v802
    %v955 = vpack.c.b16 %v807, %v803
    %v956 = vpack.c.b16 %v812, %v808
    %v957 = vpack.c.b16 %v813, %v809
    %v958 = vpack.c.b16 %v814, %v810
    %v959 = vpack.c.b16 %v815, %v811
    %v960 = vpack.c.b16 %v820, %v816
    %v961 = vpack.c.b16 %v821, %v817
    %v962 = vpack.c.b16 %v822, %v818
    %v963 = vpack.c.b16 %v823, %v819
    %v964 = vpack.c.b16 %v828, %v824
    %v965 = vpack.c.b16 %v829, %v825
    %v966 = vpack.c.b16 %v830, %v826
    %v967 = vpack.c.b16 %v831, %v827
    %v968 = vpack.c.b16 %v836, %v832
    %v969 = vpack.c.b16 %v837, %v833
    %v970 = vpack.c.b16 %v838, %v834
    %v971 = vpack.c.b16 %v839, %v835
    %v972 = vpack.c.b16 %v844, %v840
    %v973 = vpack.c.b16 %v845, %v841
    %v974 = vpack.c.b16 %v846, %v842
    %v975 = vpack.c.b16 %v847, %v843
    %1104 = vmatprep.subr.bf16.mxu0 %v849
    %1105 = vmatpush1.bf16.msra.mxu0 %v848
    %1106 = vmatprep.subr.bf16.mxu0 %v853
    %1107 = vmatpush1.bf16.msra.mxu0 %v852
    %1108 = vmatprep.subr.bf16.mxu0 %v857
    %1109 = vmatpush1.bf16.msra.mxu0 %v856
    %1110 = vmatprep.subr.bf16.mxu0 %v861
    %1111 = vmatpush1.bf16.msra.mxu0 %v860
    %1112 = vmatprep.subr.bf16.mxu0 %v865
    %1113 = vmatpush1.bf16.msra.mxu0 %v864
    %1114 = vmatprep.subr.bf16.mxu0 %v869
    %1115 = vmatpush1.bf16.msra.mxu0 %v868
    %1116 = vmatprep.subr.bf16.mxu0 %v873
    %1117 = vmatpush1.bf16.msra.mxu0 %v872
    %1118 = vmatprep.subr.bf16.mxu0 %v877
    %1119 = vmatpush1.bf16.msra.mxu0 %v876
    %1120 = vmatprep.subr.bf16.mxu0 %v881
    %1121 = vmatpush1.bf16.msra.mxu0 %v880
    %1122 = vmatprep.subr.bf16.mxu0 %v885
    %1123 = vmatpush1.bf16.msra.mxu0 %v884
    %1124 = vmatprep.subr.bf16.mxu0 %v889
    %1125 = vmatpush1.bf16.msra.mxu0 %v888
    %1126 = vmatprep.subr.bf16.mxu0 %v893
    %1127 = vmatpush1.bf16.msra.mxu0 %v892
    %1128 = vmatprep.subr.bf16.mxu0 %v897
    %1129 = vmatpush1.bf16.msra.mxu0 %v896
    %1130 = vmatprep.subr.bf16.mxu0 %v901
    %1131 = vmatpush1.bf16.msra.mxu0 %v900
    %1132 = vmatprep.subr.bf16.mxu0 %v905
    %1133 = vmatpush1.bf16.msra.mxu0 %v904
    %1134 = vmatprep.subr.bf16.mxu0 %v909
    %1135 = vmatpush1.bf16.msra.mxu0 %v908
    %1136 = vmatprep.mubr.bf16.mxu0 %v311
    %1137 = vmatmul.mubr.bf16.gmra.mrb[0].mxu0 %v310
    %v1138 = vpop.f32.mrb[0].mxu0
    %v1139 = vadd.f32 %v447, %v1138
    %v1140 = vpop.f32.mrb[0].mxu0
    %v1141 = vadd.f32 %v451, %v1140
    %v1142 = vpop.f32.mrb[0].mxu0
    %v1143 = vpop.f32.mrb[0].mxu0
    %1144 = vdwg.mxu0
    %1145 = vmatprep.subr.bf16.mxu0 %v913
    %1146 = vmatpush1.bf16.msra.mxu0 %v912
    %1147 = vmatprep.subr.bf16.mxu0 %v917
    %1148 = vmatpush1.bf16.msra.mxu0 %v916
    %1149 = vmatprep.subr.bf16.mxu0 %v921
    %1150 = vmatpush1.bf16.msra.mxu0 %v920
    %1151 = vmatprep.subr.bf16.mxu0 %v925
    %1152 = vmatpush1.bf16.msra.mxu0 %v924
    %1153 = vmatprep.subr.bf16.mxu0 %v929
    %1154 = vmatpush1.bf16.msra.mxu0 %v928
    %1155 = vmatprep.subr.bf16.mxu0 %v933
    %1156 = vmatpush1.bf16.msra.mxu0 %v932
    %1157 = vmatprep.subr.bf16.mxu0 %v937
    %1158 = vmatpush1.bf16.msra.mxu0 %v936
    %1159 = vmatprep.subr.bf16.mxu0 %v941
    %1160 = vmatpush1.bf16.msra.mxu0 %v940
    %1161 = vmatprep.subr.bf16.mxu0 %v945
    %1162 = vmatpush1.bf16.msra.mxu0 %v944
    %1163 = vmatprep.subr.bf16.mxu0 %v949
    %1164 = vmatpush1.bf16.msra.mxu0 %v948
    %1165 = vmatprep.subr.bf16.mxu0 %v953
    %1166 = vmatpush1.bf16.msra.mxu0 %v952
    %1167 = vmatprep.subr.bf16.mxu0 %v957
    %1168 = vmatpush1.bf16.msra.mxu0 %v956
    %1169 = vmatprep.subr.bf16.mxu0 %v961
    %1170 = vmatpush1.bf16.msra.mxu0 %v960
    %1171 = vmatprep.subr.bf16.mxu0 %v965
    %1172 = vmatpush1.bf16.msra.mxu0 %v964
    %1173 = vmatprep.subr.bf16.mxu0 %v969
    %1174 = vmatpush1.bf16.msra.mxu0 %v968
    %1175 = vmatprep.subr.bf16.mxu0 %v973
    %1176 = vmatpush1.bf16.msra.mxu0 %v972
    %1177 = vmatprep.mubr.bf16.mxu0 %v313
    %1178 = vmatmul.mubr.bf16.gmra.mrb[0].mxu0 %v312
    %v1179 = vpop.f32.mrb[0].mxu0
    %v1180 = vadd.f32 %v1139, %v1179
    %v1181 = vpop.f32.mrb[0].mxu0
    %v1182 = vadd.f32 %v1141, %v1181
    %v1183 = vpop.f32.mrb[0].mxu0
    %v1184 = vpop.f32.mrb[0].mxu0
    %1185 = vdwg.mxu0
    %1186 = vmatprep.subr.bf16.mxu0 %v851
    %1187 = vmatpush1.bf16.msra.mxu0 %v850
    %1188 = vmatprep.subr.bf16.mxu0 %v855
    %1189 = vmatpush1.bf16.msra.mxu0 %v854
    %1190 = vmatprep.subr.bf16.mxu0 %v859
    %1191 = vmatpush1.bf16.msra.mxu0 %v858
    %1192 = vmatprep.subr.bf16.mxu0 %v863
    %1193 = vmatpush1.bf16.msra.mxu0 %v862
    %1194 = vmatprep.subr.bf16.mxu0 %v867
    %1195 = vmatpush1.bf16.msra.mxu0 %v866
    %1196 = vmatprep.subr.bf16.mxu0 %v871
    %1197 = vmatpush1.bf16.msra.mxu0 %v870
    %1198 = vmatprep.subr.bf16.mxu0 %v875
    %1199 = vmatpush1.bf16.msra.mxu0 %v874
    %1200 = vmatprep.subr.bf16.mxu0 %v879
    %1201 = vmatpush1.bf16.msra.mxu0 %v878
    %1202 = vmatprep.subr.bf16.mxu0 %v883
    %1203 = vmatpush1.bf16.msra.mxu0 %v882
    %1204 = vmatprep.subr.bf16.mxu0 %v887
    %1205 = vmatpush1.bf16.msra.mxu0 %v886
    %1206 = vmatprep.subr.bf16.mxu0 %v891
    %1207 = vmatpush1.bf16.msra.mxu0 %v890
    %1208 = vmatprep.subr.bf16.mxu0 %v895
    %1209 = vmatpush1.bf16.msra.mxu0 %v894
    %1210 = vmatprep.subr.bf16.mxu0 %v899
    %1211 = vmatpush1.bf16.msra.mxu0 %v898
    %1212 = vmatprep.subr.bf16.mxu0 %v903
    %1213 = vmatpush1.bf16.msra.mxu0 %v902
    %1214 = vmatprep.subr.bf16.mxu0 %v907
    %1215 = vmatpush1.bf16.msra.mxu0 %v906
    %1216 = vmatprep.subr.bf16.mxu0 %v911
    %1217 = vmatpush1.bf16.msra.mxu0 %v910
    %1218 = vmatprep.mubr.bf16.mxu0 %v311
    %1219 = vmatmul.mubr.bf16.gmra.mrb[0].mxu0 %v310
    %v1220 = vpop.f32.mrb[0].mxu0
    %v1221 = vadd.f32 %v455, %v1220
    %v1222 = vpop.f32.mrb[0].mxu0
    %v1223 = vadd.f32 %v459, %v1222
    %v1224 = vpop.f32.mrb[0].mxu0
    %v1225 = vpop.f32.mrb[0].mxu0
    %1226 = vdwg.mxu0
    %1227 = vmatprep.subr.bf16.mxu0 %v915
    %1228 = vmatpush1.bf16.msra.mxu0 %v914
    %1229 = vmatprep.subr.bf16.mxu0 %v919
    %1230 = vmatpush1.bf16.msra.mxu0 %v918
    %1231 = vmatprep.subr.bf16.mxu0 %v923
    %1232 = vmatpush1.bf16.msra.mxu0 %v922
    %1233 = vmatprep.subr.bf16.mxu0 %v927
    %1234 = vmatpush1.bf16.msra.mxu0 %v926
    %1235 = vmatprep.subr.bf16.mxu0 %v931
    %1236 = vmatpush1.bf16.msra.mxu0 %v930
    %1237 = vmatprep.subr.bf16.mxu0 %v935
    %1238 = vmatpush1.bf16.msra.mxu0 %v934
    %1239 = vmatprep.subr.bf16.mxu0 %v939
    %1240 = vmatpush1.bf16.msra.mxu0 %v938
    %1241 = vmatprep.subr.bf16.mxu0 %v943
    %1242 = vmatpush1.bf16.msra.mxu0 %v942
    %1243 = vmatprep.subr.bf16.mxu0 %v947
    %1244 = vmatpush1.bf16.msra.mxu0 %v946
    %1245 = vmatprep.subr.bf16.mxu0 %v951
    %1246 = vmatpush1.bf16.msra.mxu0 %v950
    %1247 = vmatprep.subr.bf16.mxu0 %v955
    %1248 = vmatpush1.bf16.msra.mxu0 %v954
    %1249 = vmatprep.subr.bf16.mxu0 %v959
    %1250 = vmatpush1.bf16.msra.mxu0 %v958
    %1251 = vmatprep.subr.bf16.mxu0 %v963
    %1252 = vmatpush1.bf16.msra.mxu0 %v962
    %1253 = vmatprep.subr.bf16.mxu0 %v967
    %1254 = vmatpush1.bf16.msra.mxu0 %v966
    %1255 = vmatprep.subr.bf16.mxu0 %v971
    %1256 = vmatpush1.bf16.msra.mxu0 %v970
    %1257 = vmatprep.subr.bf16.mxu0 %v975
    %1258 = vmatpush1.bf16.msra.mxu0 %v974
    %1259 = vmatprep.mubr.bf16.mxu0 %v313
    %1260 = vmatmul.mubr.bf16.gmra.mrb[0].mxu0 %v312
    %v1261 = vpop.f32.mrb[0].mxu0
    %v1262 = vadd.f32 %v1221, %v1261
    %v1263 = vpop.f32.mrb[0].mxu0
    %v1264 = vadd.f32 %v1223, %v1263
    %v1265 = vpop.f32.mrb[0].mxu0
    %v1266 = vpop.f32.mrb[0].mxu0
    %1267 = vdwg.mxu0
    %v1268 = vsub.f32 0.0, %v1180
    %v1269 = vsub.f32 0.0, %v1182
    %v1270 = vsub.f32 0.0, %v1262
    %v1271 = vsub.f32 0.0, %v1264
    %v1272 = vmul.f32 %v1268, 1.442695
    %v1273 = vpow.pop %v1272
    %v1274 = vmul.f32 %v1269, 1.442695
    %v1275 = vpow.pop %v1274
    %v1276 = vmul.f32 %v1270, 1.442695
    %v1277 = vpow.pop %v1276
    %v1278 = vmul.f32 %v1271, 1.442695
    %v1279 = vpow.pop %v1278
    %v1280 = vadd.f32 %v1273, 1.0
    %v1281 = vadd.f32 %v1275, 1.0
    %v1282 = vadd.f32 %v1277, 1.0
    %v1283 = vadd.f32 %v1279, 1.0
    %v1284 = vrcp.pop %v1280
    %v1285 = vrcp.pop %v1281
    %v1286 = vrcp.pop %v1282
    %v1287 = vrcp.pop %v1283
    %v1288 = vmul.f32 %v1180, %v1284
    %v1289 = vmul.f32 %v1182, %v1285
    %v1290 = vmul.f32 %v1262, %v1286
    %v1291 = vmul.f32 %v1264, %v1287
    %v1292 = vld [vmem:[%s6] sm:$0x77]
    %v1293 = vld [vmem:[%s6 + $0x8] sm:$0x77]
    %v1294 = vld [vmem:[%s7] sm:$0xf]
    %v1296 = vlaneseq
    %v1297 = vshrl.u32 %v1296, 7
    %v1298 = vsub.s32 0, %v1297
    %v1299 = vrot.slane %v1294, %v1298
    %v1300 = vlaneseq
    %v1301 = vshrl.u32 %v1300, 7
    %v1302 = vsub.s32 1, %v1301
    %v1303 = vrot.slane %v1294, %v1302
    %v1304 = vlaneseq
    %v1305 = vshrl.u32 %v1304, 7
    %v1306 = vsub.s32 2, %v1305
    %v1307 = vrot.slane %v1294, %v1306
    %v1308 = vlaneseq
    %v1309 = vshrl.u32 %v1308, 7
    %v1310 = vsub.s32 3, %v1309
    %v1311 = vrot.slane %v1294, %v1310
    %v1318 = vunpack.c.l.b16 %v1292
    %v1319 = vunpack.c.h.b16 %v1292
    %v1320 = vunpack.c.l.b16 %v1293
    %v1321 = vunpack.c.h.b16 %v1293
    %v1322 = vpack.c.b16 %v1318, %v1318
    %v1323 = vpack.c.b16 %v1319, %v1319
    %v1324 = vpack.c.b16 %v1320, %v1320
    %v1325 = vpack.c.b16 %v1321, %v1321
    %vm1326 = vcmask 48128
    %v1328 = vsel %vm1326, %v128, 0
    %vm1330 = vcmask 1042432
    %v1332 = vsel %vm1330, %v1322, 0
    %v1335 = vsel %vm1330, %v1323, 0
    %v1338 = vsel %vm1330, %v1324, 0
    %v1341 = vsel %vm1330, %v1325, 0
    %1343 = vmatprep.subr.bf16.mxu0 %v1335
    %1344 = vmatpush1.bf16.msra.mxu0 %v1332
    %1345 = vmatprep.subr.bf16.mxu0 0
    %1346 = vmatpush1.bf16.msra.mxu0 0
    %1347 = vmatprep.subr.bf16.mxu0 0
    %1348 = vmatpush1.bf16.msra.mxu0 0
    %1349 = vmatprep.subr.bf16.mxu0 0
    %1350 = vmatpush1.bf16.msra.mxu0 0
    %1351 = vmatprep.subr.bf16.mxu0 0
    %1352 = vmatpush1.bf16.msra.mxu0 0
    %1353 = vmatprep.subr.bf16.mxu0 0
    %1354 = vmatpush1.bf16.msra.mxu0 0
    %1355 = vmatprep.subr.bf16.mxu0 0
    %1356 = vmatpush1.bf16.msra.mxu0 0
    %1357 = vmatprep.subr.bf16.mxu0 0
    %1358 = vmatpush1.bf16.msra.mxu0 0
    %1359 = vmatprep.subr.bf16.mxu0 0
    %1360 = vmatpush1.bf16.msra.mxu0 0
    %1361 = vmatprep.subr.bf16.mxu0 0
    %1362 = vmatpush1.bf16.msra.mxu0 0
    %1363 = vmatprep.subr.bf16.mxu0 0
    %1364 = vmatpush1.bf16.msra.mxu0 0
    %1365 = vmatprep.subr.bf16.mxu0 0
    %1366 = vmatpush1.bf16.msra.mxu0 0
    %1367 = vmatprep.subr.bf16.mxu0 0
    %1368 = vmatpush1.bf16.msra.mxu0 0
    %1369 = vmatprep.subr.bf16.mxu0 0
    %1370 = vmatpush1.bf16.msra.mxu0 0
    %1371 = vmatprep.subr.bf16.mxu0 0
    %1372 = vmatpush1.bf16.msra.mxu0 0
    %1373 = vmatprep.subr.bf16.mxu0 0
    %1374 = vmatpush1.bf16.msra.mxu0 0
    %1375 = vmatprep.mubr.bf16.mxu0 0
    %1376 = vmatmul.mubr.bf16.gmra.mrb[0].mxu0 %v1328
    %v1377 = vpop.f32.mrb[0].mxu0
    %v1378 = vadd.f32 %v1299, %v1377
    %v1379 = vpop.f32.mrb[0].mxu0
    %v1380 = vadd.f32 %v1303, %v1379
    %v1381 = vpop.f32.mrb[0].mxu0
    %v1382 = vpop.f32.mrb[0].mxu0
    %1383 = vdwg.mxu0
    %1384 = vmatprep.subr.bf16.mxu0 %v1341
    %1385 = vmatpush1.bf16.msra.mxu0 %v1338
    %1386 = vmatprep.subr.bf16.mxu0 0
    %1387 = vmatpush1.bf16.msra.mxu0 0
    %1388 = vmatprep.subr.bf16.mxu0 0
    %1389 = vmatpush1.bf16.msra.mxu0 0
    %1390 = vmatprep.subr.bf16.mxu0 0
    %1391 = vmatpush1.bf16.msra.mxu0 0
    %1392 = vmatprep.subr.bf16.mxu0 0
    %1393 = vmatpush1.bf16.msra.mxu0 0
    %1394 = vmatprep.subr.bf16.mxu0 0
    %1395 = vmatpush1.bf16.msra.mxu0 0
    %1396 = vmatprep.subr.bf16.mxu0 0
    %1397 = vmatpush1.bf16.msra.mxu0 0
    %1398 = vmatprep.subr.bf16.mxu0 0
    %1399 = vmatpush1.bf16.msra.mxu0 0
    %1400 = vmatprep.subr.bf16.mxu0 0
    %1401 = vmatpush1.bf16.msra.mxu0 0
    %1402 = vmatprep.subr.bf16.mxu0 0
    %1403 = vmatpush1.bf16.msra.mxu0 0
    %1404 = vmatprep.subr.bf16.mxu0 0
    %1405 = vmatpush1.bf16.msra.mxu0 0
    %1406 = vmatprep.subr.bf16.mxu0 0
    %1407 = vmatpush1.bf16.msra.mxu0 0
    %1408 = vmatprep.subr.bf16.mxu0 0
    %1409 = vmatpush1.bf16.msra.mxu0 0
    %1410 = vmatprep.subr.bf16.mxu0 0
    %1411 = vmatpush1.bf16.msra.mxu0 0
    %1412 = vmatprep.subr.bf16.mxu0 0
    %1413 = vmatpush1.bf16.msra.mxu0 0
    %1414 = vmatprep.subr.bf16.mxu0 0
    %1415 = vmatpush1.bf16.msra.mxu0 0
    %1416 = vmatprep.mubr.bf16.mxu0 0
    %1417 = vmatmul.mubr.bf16.gmra.mrb[0].mxu0 %v1328
    %v1418 = vpop.f32.mrb[0].mxu0
    %v1419 = vadd.f32 %v1307, %v1418
    %v1420 = vpop.f32.mrb[0].mxu0
    %v1421 = vadd.f32 %v1311, %v1420
    %v1422 = vpop.f32.mrb[0].mxu0
    %v1423 = vpop.f32.mrb[0].mxu0
    %1424 = vdwg.mxu0
    %v1425 = vsub.f32 0.0, %v1378
    %v1426 = vsub.f32 0.0, %v1380
    %v1427 = vsub.f32 0.0, %v1419
    %v1428 = vsub.f32 0.0, %v1421
    %v1429 = vmul.f32 %v1425, 1.442695
    %v1430 = vpow.pop %v1429
    %v1431 = vmul.f32 %v1426, 1.442695
    %v1432 = vpow.pop %v1431
    %v1433 = vmul.f32 %v1427, 1.442695
    %v1434 = vpow.pop %v1433
    %v1435 = vmul.f32 %v1428, 1.442695
    %v1436 = vpow.pop %v1435
    %v1437 = vadd.f32 %v1430, 1.0
    %v1438 = vadd.f32 %v1432, 1.0
    %v1439 = vadd.f32 %v1434, 1.0
    %v1440 = vadd.f32 %v1436, 1.0
    %v1441 = vrcp.pop %v1437
    %v1442 = vrcp.pop %v1438
    %v1443 = vrcp.pop %v1439
    %v1444 = vrcp.pop %v1440
    %v1445 = vmul.f32 %v1378, %v1441
    %v1446 = vmul.f32 %v1380, %v1442
    %v1447 = vmul.f32 %v1419, %v1443
    %v1448 = vmul.f32 %v1421, %v1444
    %v1449 = vpack.c.bf16 %v1445, %v1445
    %v1450 = vpack.c.bf16 %v1446, %v1446
    %v1451 = vpack.c.bf16 %v1447, %v1447
    %v1452 = vpack.c.bf16 %v1448, %v1448
    %v1453 = vld [vmem:[#allocation10] sm:$0xff]
    %v1454 = vld [vmem:[#allocation10 + $0x8] sm:$0xff]
    %v1455 = vld [vmem:[#allocation10 + $0x10] sm:$0xff]
    %v1456 = vld [vmem:[#allocation10 + $0x18] sm:$0xff]
    %v1457 = vld [vmem:[#allocation10 + $0x20] sm:$0xff]
    %v1458 = vld [vmem:[#allocation10 + $0x28] sm:$0xff]
    %v1459 = vld [vmem:[#allocation10 + $0x30] sm:$0xff]
    %v1460 = vld [vmem:[#allocation10 + $0x38] sm:$0xff]
    %v1461 = vld [vmem:[#allocation10 + $0x40] sm:$0xff]
    %v1462 = vld [vmem:[#allocation10 + $0x48] sm:$0xff]
    %v1463 = vld [vmem:[#allocation10 + $0x50] sm:$0xff]
    %v1464 = vld [vmem:[#allocation10 + $0x58] sm:$0xff]
    %v1465 = vld [vmem:[#allocation10 + $0x60] sm:$0xff]
    %v1466 = vld [vmem:[#allocation10 + $0x68] sm:$0xff]
    %v1467 = vld [vmem:[#allocation10 + $0x70] sm:$0xff]
    %v1468 = vld [vmem:[#allocation10 + $0x78] sm:$0xff]
    %v1469 = vld [vmem:[#allocation10 + $0x80] sm:$0xff]
    %v1470 = vld [vmem:[#allocation10 + $0x88] sm:$0xff]
    %v1471 = vld [vmem:[#allocation10 + $0x90] sm:$0xff]
    %v1472 = vld [vmem:[#allocation10 + $0x98] sm:$0xff]
    %v1473 = vld [vmem:[#allocation10 + $0xa0] sm:$0xff]
    %v1474 = vld [vmem:[#allocation10 + $0xa8] sm:$0xff]
    %v1475 = vld [vmem:[#allocation10 + $0xb0] sm:$0xff]
    %v1476 = vld [vmem:[#allocation10 + $0xb8] sm:$0xff]
    %v1477 = vld [vmem:[#allocation10 + $0xc0] sm:$0xff]
    %v1478 = vld [vmem:[#allocation10 + $0xc8] sm:$0xff]
    %v1479 = vld [vmem:[#allocation10 + $0xd0] sm:$0xff]
    %v1480 = vld [vmem:[#allocation10 + $0xd8] sm:$0xff]
    %v1481 = vld [vmem:[#allocation10 + $0xe0] sm:$0xff]
    %v1482 = vld [vmem:[#allocation10 + $0xe8] sm:$0xff]
    %v1483 = vld [vmem:[#allocation10 + $0xf0] sm:$0xff]
    %v1484 = vld [vmem:[#allocation10 + $0xf8] sm:$0xff]
    %v1485 = vld [vmem:[#allocation10 + $0x100] sm:$0xff]
    %v1486 = vld [vmem:[#allocation10 + $0x108] sm:$0xff]
    %v1487 = vld [vmem:[#allocation10 + $0x110] sm:$0xff]
    %v1488 = vld [vmem:[#allocation10 + $0x118] sm:$0xff]
    %v1489 = vld [vmem:[#allocation10 + $0x120] sm:$0xff]
    %v1490 = vld [vmem:[#allocation10 + $0x128] sm:$0xff]
    %v1491 = vld [vmem:[#allocation10 + $0x130] sm:$0xff]
    %v1492 = vld [vmem:[#allocation10 + $0x138] sm:$0xff]
    %v1493 = vld [vmem:[#allocation10 + $0x140] sm:$0xff]
    %v1494 = vld [vmem:[#allocation10 + $0x148] sm:$0xff]
    %v1495 = vld [vmem:[#allocation10 + $0x150] sm:$0xff]
    %v1496 = vld [vmem:[#allocation10 + $0x158] sm:$0xff]
    %v1497 = vld [vmem:[#allocation10 + $0x160] sm:$0xff]
    %v1498 = vld [vmem:[#allocation10 + $0x168] sm:$0xff]
    %v1499 = vld [vmem:[#allocation10 + $0x170] sm:$0xff]
    %v1500 = vld [vmem:[#allocation10 + $0x178] sm:$0xff]
    %v1501 = vld [vmem:[#allocation10 + $0x180] sm:$0xff]
    %v1502 = vld [vmem:[#allocation10 + $0x188] sm:$0xff]
    %v1503 = vld [vmem:[#allocation10 + $0x190] sm:$0xff]
    %v1504 = vld [vmem:[#allocation10 + $0x198] sm:$0xff]
    %v1505 = vld [vmem:[#allocation10 + $0x1a0] sm:$0xff]
    %v1506 = vld [vmem:[#allocation10 + $0x1a8] sm:$0xff]
    %v1507 = vld [vmem:[#allocation10 + $0x1b0] sm:$0xff]
    %v1508 = vld [vmem:[#allocation10 + $0x1b8] sm:$0xff]
    %v1509 = vld [vmem:[#allocation10 + $0x1c0] sm:$0xff]
    %v1510 = vld [vmem:[#allocation10 + $0x1c8] sm:$0xff]
    %v1511 = vld [vmem:[#allocation10 + $0x1d0] sm:$0xff]
    %v1512 = vld [vmem:[#allocation10 + $0x1d8] sm:$0xff]
    %v1513 = vld [vmem:[#allocation10 + $0x1e0] sm:$0xff]
    %v1514 = vld [vmem:[#allocation10 + $0x1e8] sm:$0xff]
    %v1515 = vld [vmem:[#allocation10 + $0x1f0] sm:$0xff]
    %v1516 = vld [vmem:[#allocation10 + $0x1f8] sm:$0xff]
    %v1517 = vld [vmem:[#allocation10 + $0x200] sm:$0xff]
    %v1518 = vld [vmem:[#allocation10 + $0x208] sm:$0xff]
    %v1519 = vld [vmem:[#allocation10 + $0x210] sm:$0xff]
    %v1520 = vld [vmem:[#allocation10 + $0x218] sm:$0xff]
    %v1521 = vld [vmem:[#allocation10 + $0x220] sm:$0xff]
    %v1522 = vld [vmem:[#allocation10 + $0x228] sm:$0xff]
    %v1523 = vld [vmem:[#allocation10 + $0x230] sm:$0xff]
    %v1524 = vld [vmem:[#allocation10 + $0x238] sm:$0xff]
    %v1525 = vld [vmem:[#allocation10 + $0x240] sm:$0xff]
    %v1526 = vld [vmem:[#allocation10 + $0x248] sm:$0xff]
    %v1527 = vld [vmem:[#allocation10 + $0x250] sm:$0xff]
    %v1528 = vld [vmem:[#allocation10 + $0x258] sm:$0xff]
    %v1529 = vld [vmem:[#allocation10 + $0x260] sm:$0xff]
    %v1530 = vld [vmem:[#allocation10 + $0x268] sm:$0xff]
    %v1531 = vld [vmem:[#allocation10 + $0x270] sm:$0xff]
    %v1532 = vld [vmem:[#allocation10 + $0x278] sm:$0xff]
    %v1533 = vld [vmem:[#allocation10 + $0x280] sm:$0xff]
    %v1534 = vld [vmem:[#allocation10 + $0x288] sm:$0xff]
    %v1535 = vld [vmem:[#allocation10 + $0x290] sm:$0xff]
    %v1536 = vld [vmem:[#allocation10 + $0x298] sm:$0xff]
    %v1537 = vld [vmem:[#allocation10 + $0x2a0] sm:$0xff]
    %v1538 = vld [vmem:[#allocation10 + $0x2a8] sm:$0xff]
    %v1539 = vld [vmem:[#allocation10 + $0x2b0] sm:$0xff]
    %v1540 = vld [vmem:[#allocation10 + $0x2b8] sm:$0xff]
    %v1541 = vld [vmem:[#allocation10 + $0x2c0] sm:$0xff]
    %v1542 = vld [vmem:[#allocation10 + $0x2c8] sm:$0xff]
    %v1543 = vld [vmem:[#allocation10 + $0x2d0] sm:$0xff]
    %v1544 = vld [vmem:[#allocation10 + $0x2d8] sm:$0xff]
    %v1545 = vld [vmem:[#allocation10 + $0x2e0] sm:$0xff]
    %v1546 = vld [vmem:[#allocation10 + $0x2e8] sm:$0xff]
    %v1547 = vld [vmem:[#allocation10 + $0x2f0] sm:$0xff]
    %v1548 = vld [vmem:[#allocation10 + $0x2f8] sm:$0xff]
    %v1549 = vld [vmem:[#allocation10 + $0x300] sm:$0xff]
    %v1550 = vld [vmem:[#allocation10 + $0x308] sm:$0xff]
    %v1551 = vld [vmem:[#allocation10 + $0x310] sm:$0xff]
    %v1552 = vld [vmem:[#allocation10 + $0x318] sm:$0xff]
    %v1553 = vld [vmem:[#allocation10 + $0x320] sm:$0xff]
    %v1554 = vld [vmem:[#allocation10 + $0x328] sm:$0xff]
    %v1555 = vld [vmem:[#allocation10 + $0x330] sm:$0xff]
    %v1556 = vld [vmem:[#allocation10 + $0x338] sm:$0xff]
    %v1557 = vld [vmem:[#allocation10 + $0x340] sm:$0xff]
    %v1558 = vld [vmem:[#allocation10 + $0x348] sm:$0xff]
    %v1559 = vld [vmem:[#allocation10 + $0x350] sm:$0xff]
    %v1560 = vld [vmem:[#allocation10 + $0x358] sm:$0xff]
    %v1561 = vld [vmem:[#allocation10 + $0x360] sm:$0xff]
    %v1562 = vld [vmem:[#allocation10 + $0x368] sm:$0xff]
    %v1563 = vld [vmem:[#allocation10 + $0x370] sm:$0xff]
    %v1564 = vld [vmem:[#allocation10 + $0x378] sm:$0xff]
    %v1565 = vld [vmem:[#allocation10 + $0x380] sm:$0xff]
    %v1566 = vld [vmem:[#allocation10 + $0x388] sm:$0xff]
    %v1567 = vld [vmem:[#allocation10 + $0x390] sm:$0xff]
    %v1568 = vld [vmem:[#allocation10 + $0x398] sm:$0xff]
    %v1569 = vld [vmem:[#allocation10 + $0x3a0] sm:$0xff]
    %v1570 = vld [vmem:[#allocation10 + $0x3a8] sm:$0xff]
    %v1571 = vld [vmem:[#allocation10 + $0x3b0] sm:$0xff]
    %v1572 = vld [vmem:[#allocation10 + $0x3b8] sm:$0xff]
    %v1573 = vld [vmem:[#allocation10 + $0x3c0] sm:$0xff]
    %v1574 = vld [vmem:[#allocation10 + $0x3c8] sm:$0xff]
    %v1575 = vld [vmem:[#allocation10 + $0x3d0] sm:$0xff]
    %v1576 = vld [vmem:[#allocation10 + $0x3d8] sm:$0xff]
    %v1577 = vld [vmem:[#allocation10 + $0x3e0] sm:$0xff]
    %v1578 = vld [vmem:[#allocation10 + $0x3e8] sm:$0xff]
    %v1579 = vld [vmem:[#allocation10 + $0x3f0] sm:$0xff]
    %v1580 = vld [vmem:[#allocation10 + $0x3f8] sm:$0xff]
    %v1581 = vpack.c.bf16 %v1288, %v1288
    %v1582 = vpack.c.bf16 %v1289, %v1289
    %v1583 = vpack.c.bf16 %v1290, %v1290
    %v1584 = vpack.c.bf16 %v1291, %v1291
    %v1585 = vld [vmem:[#allocation11] sm:$0xff]
    %v1586 = vld [vmem:[#allocation11 + $0x8] sm:$0xff]
    %v1587 = vld [vmem:[#allocation11 + $0x10] sm:$0xff]
    %v1588 = vld [vmem:[#allocation11 + $0x18] sm:$0xff]
    %v1589 = vld [vmem:[#allocation11 + $0x20] sm:$0xff]
    %v1590 = vld [vmem:[#allocation11 + $0x28] sm:$0xff]
    %v1591 = vld [vmem:[#allocation11 + $0x30] sm:$0xff]
    %v1592 = vld [vmem:[#allocation11 + $0x38] sm:$0xff]
    %v1593 = vld [vmem:[#allocation11 + $0x40] sm:$0xff]
    %v1594 = vld [vmem:[#allocation11 + $0x48] sm:$0xff]
    %v1595 = vld [vmem:[#allocation11 + $0x50] sm:$0xff]
    %v1596 = vld [vmem:[#allocation11 + $0x58] sm:$0xff]
    %v1597 = vld [vmem:[#allocation11 + $0x60] sm:$0xff]
    %v1598 = vld [vmem:[#allocation11 + $0x68] sm:$0xff]
    %v1599 = vld [vmem:[#allocation11 + $0x70] sm:$0xff]
    %v1600 = vld [vmem:[#allocation11 + $0x78] sm:$0xff]
    %v1601 = vld [vmem:[#allocation11 + $0x80] sm:$0xff]
    %v1602 = vld [vmem:[#allocation11 + $0x88] sm:$0xff]
    %v1603 = vld [vmem:[#allocation11 + $0x90] sm:$0xff]
    %v1604 = vld [vmem:[#allocation11 + $0x98] sm:$0xff]
    %v1605 = vld [vmem:[#allocation11 + $0xa0] sm:$0xff]
    %v1606 = vld [vmem:[#allocation11 + $0xa8] sm:$0xff]
    %v1607 = vld [vmem:[#allocation11 + $0xb0] sm:$0xff]
    %v1608 = vld [vmem:[#allocation11 + $0xb8] sm:$0xff]
    %v1609 = vld [vmem:[#allocation11 + $0xc0] sm:$0xff]
    %v1610 = vld [vmem:[#allocation11 + $0xc8] sm:$0xff]
    %v1611 = vld [vmem:[#allocation11 + $0xd0] sm:$0xff]
    %v1612 = vld [vmem:[#allocation11 + $0xd8] sm:$0xff]
    %v1613 = vld [vmem:[#allocation11 + $0xe0] sm:$0xff]
    %v1614 = vld [vmem:[#allocation11 + $0xe8] sm:$0xff]
    %v1615 = vld [vmem:[#allocation11 + $0xf0] sm:$0xff]
    %v1616 = vld [vmem:[#allocation11 + $0xf8] sm:$0xff]
    %v1617 = vld [vmem:[#allocation11 + $0x100] sm:$0xff]
    %v1618 = vld [vmem:[#allocation11 + $0x108] sm:$0xff]
    %v1619 = vld [vmem:[#allocation11 + $0x110] sm:$0xff]
    %v1620 = vld [vmem:[#allocation11 + $0x118] sm:$0xff]
    %v1621 = vld [vmem:[#allocation11 + $0x120] sm:$0xff]
    %v1622 = vld [vmem:[#allocation11 + $0x128] sm:$0xff]
    %v1623 = vld [vmem:[#allocation11 + $0x130] sm:$0xff]
    %v1624 = vld [vmem:[#allocation11 + $0x138] sm:$0xff]
    %v1625 = vld [vmem:[#allocation11 + $0x140] sm:$0xff]
    %v1626 = vld [vmem:[#allocation11 + $0x148] sm:$0xff]
    %v1627 = vld [vmem:[#allocation11 + $0x150] sm:$0xff]
    %v1628 = vld [vmem:[#allocation11 + $0x158] sm:$0xff]
    %v1629 = vld [vmem:[#allocation11 + $0x160] sm:$0xff]
    %v1630 = vld [vmem:[#allocation11 + $0x168] sm:$0xff]
    %v1631 = vld [vmem:[#allocation11 + $0x170] sm:$0xff]
    %v1632 = vld [vmem:[#allocation11 + $0x178] sm:$0xff]
    %v1633 = vld [vmem:[#allocation11 + $0x180] sm:$0xff]
    %v1634 = vld [vmem:[#allocation11 + $0x188] sm:$0xff]
    %v1635 = vld [vmem:[#allocation11 + $0x190] sm:$0xff]
    %v1636 = vld [vmem:[#allocation11 + $0x198] sm:$0xff]
    %v1637 = vld [vmem:[#allocation11 + $0x1a0] sm:$0xff]
    %v1638 = vld [vmem:[#allocation11 + $0x1a8] sm:$0xff]
    %v1639 = vld [vmem:[#allocation11 + $0x1b0] sm:$0xff]
    %v1640 = vld [vmem:[#allocation11 + $0x1b8] sm:$0xff]
    %v1641 = vld [vmem:[#allocation11 + $0x1c0] sm:$0xff]
    %v1642 = vld [vmem:[#allocation11 + $0x1c8] sm:$0xff]
    %v1643 = vld [vmem:[#allocation11 + $0x1d0] sm:$0xff]
    %v1644 = vld [vmem:[#allocation11 + $0x1d8] sm:$0xff]
    %v1645 = vld [vmem:[#allocation11 + $0x1e0] sm:$0xff]
    %v1646 = vld [vmem:[#allocation11 + $0x1e8] sm:$0xff]
    %v1647 = vld [vmem:[#allocation11 + $0x1f0] sm:$0xff]
    %v1648 = vld [vmem:[#allocation11 + $0x1f8] sm:$0xff]
    %v1649 = vld [vmem:[#allocation11 + $0x200] sm:$0xff]
    %v1650 = vld [vmem:[#allocation11 + $0x208] sm:$0xff]
    %v1651 = vld [vmem:[#allocation11 + $0x210] sm:$0xff]
    %v1652 = vld [vmem:[#allocation11 + $0x218] sm:$0xff]
    %v1653 = vld [vmem:[#allocation11 + $0x220] sm:$0xff]
    %v1654 = vld [vmem:[#allocation11 + $0x228] sm:$0xff]
    %v1655 = vld [vmem:[#allocation11 + $0x230] sm:$0xff]
    %v1656 = vld [vmem:[#allocation11 + $0x238] sm:$0xff]
    %v1657 = vld [vmem:[#allocation11 + $0x240] sm:$0xff]
    %v1658 = vld [vmem:[#allocation11 + $0x248] sm:$0xff]
    %v1659 = vld [vmem:[#allocation11 + $0x250] sm:$0xff]
    %v1660 = vld [vmem:[#allocation11 + $0x258] sm:$0xff]
    %v1661 = vld [vmem:[#allocation11 + $0x260] sm:$0xff]
    %v1662 = vld [vmem:[#allocation11 + $0x268] sm:$0xff]
    %v1663 = vld [vmem:[#allocation11 + $0x270] sm:$0xff]
    %v1664 = vld [vmem:[#allocation11 + $0x278] sm:$0xff]
    %v1665 = vld [vmem:[#allocation11 + $0x280] sm:$0xff]
    %v1666 = vld [vmem:[#allocation11 + $0x288] sm:$0xff]
    %v1667 = vld [vmem:[#allocation11 + $0x290] sm:$0xff]
    %v1668 = vld [vmem:[#allocation11 + $0x298] sm:$0xff]
    %v1669 = vld [vmem:[#allocation11 + $0x2a0] sm:$0xff]
    %v1670 = vld [vmem:[#allocation11 + $0x2a8] sm:$0xff]
    %v1671 = vld [vmem:[#allocation11 + $0x2b0] sm:$0xff]
    %v1672 = vld [vmem:[#allocation11 + $0x2b8] sm:$0xff]
    %v1673 = vld [vmem:[#allocation11 + $0x2c0] sm:$0xff]
    %v1674 = vld [vmem:[#allocation11 + $0x2c8] sm:$0xff]
    %v1675 = vld [vmem:[#allocation11 + $0x2d0] sm:$0xff]
    %v1676 = vld [vmem:[#allocation11 + $0x2d8] sm:$0xff]
    %v1677 = vld [vmem:[#allocation11 + $0x2e0] sm:$0xff]
    %v1678 = vld [vmem:[#allocation11 + $0x2e8] sm:$0xff]
    %v1679 = vld [vmem:[#allocation11 + $0x2f0] sm:$0xff]
    %v1680 = vld [vmem:[#allocation11 + $0x2f8] sm:$0xff]
    %v1681 = vld [vmem:[#allocation11 + $0x300] sm:$0xff]
    %v1682 = vld [vmem:[#allocation11 + $0x308] sm:$0xff]
    %v1683 = vld [vmem:[#allocation11 + $0x310] sm:$0xff]
    %v1684 = vld [vmem:[#allocation11 + $0x318] sm:$0xff]
    %v1685 = vld [vmem:[#allocation11 + $0x320] sm:$0xff]
    %v1686 = vld [vmem:[#allocation11 + $0x328] sm:$0xff]
    %v1687 = vld [vmem:[#allocation11 + $0x330] sm:$0xff]
    %v1688 = vld [vmem:[#allocation11 + $0x338] sm:$0xff]
    %v1689 = vld [vmem:[#allocation11 + $0x340] sm:$0xff]
    %v1690 = vld [vmem:[#allocation11 + $0x348] sm:$0xff]
    %v1691 = vld [vmem:[#allocation11 + $0x350] sm:$0xff]
    %v1692 = vld [vmem:[#allocation11 + $0x358] sm:$0xff]
    %v1693 = vld [vmem:[#allocation11 + $0x360] sm:$0xff]
    %v1694 = vld [vmem:[#allocation11 + $0x368] sm:$0xff]
    %v1695 = vld [vmem:[#allocation11 + $0x370] sm:$0xff]
    %v1696 = vld [vmem:[#allocation11 + $0x378] sm:$0xff]
    %v1697 = vld [vmem:[#allocation11 + $0x380] sm:$0xff]
    %v1698 = vld [vmem:[#allocation11 + $0x388] sm:$0xff]
    %v1699 = vld [vmem:[#allocation11 + $0x390] sm:$0xff]
    %v1700 = vld [vmem:[#allocation11 + $0x398] sm:$0xff]
    %v1701 = vld [vmem:[#allocation11 + $0x3a0] sm:$0xff]
    %v1702 = vld [vmem:[#allocation11 + $0x3a8] sm:$0xff]
    %v1703 = vld [vmem:[#allocation11 + $0x3b0] sm:$0xff]
    %v1704 = vld [vmem:[#allocation11 + $0x3b8] sm:$0xff]
    %v1705 = vld [vmem:[#allocation11 + $0x3c0] sm:$0xff]
    %v1706 = vld [vmem:[#allocation11 + $0x3c8] sm:$0xff]
    %v1707 = vld [vmem:[#allocation11 + $0x3d0] sm:$0xff]
    %v1708 = vld [vmem:[#allocation11 + $0x3d8] sm:$0xff]
    %v1709 = vld [vmem:[#allocation11 + $0x3e0] sm:$0xff]
    %v1710 = vld [vmem:[#allocation11 + $0x3e8] sm:$0xff]
    %v1711 = vld [vmem:[#allocation11 + $0x3f0] sm:$0xff]
    %v1712 = vld [vmem:[#allocation11 + $0x3f8] sm:$0xff]
    %v1841 = vunpack.c.l.b16 %v1585
    %v1842 = vunpack.c.h.b16 %v1585
    %v1843 = vunpack.c.l.b16 %v1586
    %v1844 = vunpack.c.h.b16 %v1586
    %v1845 = vunpack.c.l.b16 %v1587
    %v1846 = vunpack.c.h.b16 %v1587
    %v1847 = vunpack.c.l.b16 %v1588
    %v1848 = vunpack.c.h.b16 %v1588
    %v1849 = vunpack.c.l.b16 %v1589
    %v1850 = vunpack.c.h.b16 %v1589
    %v1851 = vunpack.c.l.b16 %v1590
    %v1852 = vunpack.c.h.b16 %v1590
    %v1853 = vunpack.c.l.b16 %v1591
    %v1854 = vunpack.c.h.b16 %v1591
    %v1855 = vunpack.c.l.b16 %v1592
    %v1856 = vunpack.c.h.b16 %v1592
    %v1857 = vunpack.c.l.b16 %v1593
    %v1858 = vunpack.c.h.b16 %v1593
    %v1859 = vunpack.c.l.b16 %v1594
    %v1860 = vunpack.c.h.b16 %v1594
    %v1861 = vunpack.c.l.b16 %v1595
    %v1862 = vunpack.c.h.b16 %v1595
    %v1863 = vunpack.c.l.b16 %v1596
    %v1864 = vunpack.c.h.b16 %v1596
    %v1865 = vunpack.c.l.b16 %v1597
    %v1866 = vunpack.c.h.b16 %v1597
    %v1867 = vunpack.c.l.b16 %v1598
    %v1868 = vunpack.c.h.b16 %v1598
    %v1869 = vunpack.c.l.b16 %v1599
    %v1870 = vunpack.c.h.b16 %v1599
    %v1871 = vunpack.c.l.b16 %v1600
    %v1872 = vunpack.c.h.b16 %v1600
    %v1873 = vunpack.c.l.b16 %v1601
    %v1874 = vunpack.c.h.b16 %v1601
    %v1875 = vunpack.c.l.b16 %v1602
    %v1876 = vunpack.c.h.b16 %v1602
    %v1877 = vunpack.c.l.b16 %v1603
    %v1878 = vunpack.c.h.b16 %v1603
    %v1879 = vunpack.c.l.b16 %v1604
    %v1880 = vunpack.c.h.b16 %v1604
    %v1881 = vunpack.c.l.b16 %v1605
    %v1882 = vunpack.c.h.b16 %v1605
    %v1883 = vunpack.c.l.b16 %v1606
    %v1884 = vunpack.c.h.b16 %v1606
    %v1885 = vunpack.c.l.b16 %v1607
    %v1886 = vunpack.c.h.b16 %v1607
    %v1887 = vunpack.c.l.b16 %v1608
    %v1888 = vunpack.c.h.b16 %v1608
    %v1889 = vunpack.c.l.b16 %v1609
    %v1890 = vunpack.c.h.b16 %v1609
    %v1891 = vunpack.c.l.b16 %v1610
    %v1892 = vunpack.c.h.b16 %v1610
    %v1893 = vunpack.c.l.b16 %v1611
    %v1894 = vunpack.c.h.b16 %v1611
    %v1895 = vunpack.c.l.b16 %v1612
    %v1896 = vunpack.c.h.b16 %v1612
    %v1897 = vunpack.c.l.b16 %v1613
    %v1898 = vunpack.c.h.b16 %v1613
    %v1899 = vunpack.c.l.b16 %v1614
    %v1900 = vunpack.c.h.b16 %v1614
    %v1901 = vunpack.c.l.b16 %v1615
    %v1902 = vunpack.c.h.b16 %v1615
    %v1903 = vunpack.c.l.b16 %v1616
    %v1904 = vunpack.c.h.b16 %v1616
    %v1905 = vunpack.c.l.b16 %v1617
    %v1906 = vunpack.c.h.b16 %v1617
    %v1907 = vunpack.c.l.b16 %v1618
    %v1908 = vunpack.c.h.b16 %v1618
    %v1909 = vunpack.c.l.b16 %v1619
    %v1910 = vunpack.c.h.b16 %v1619
    %v1911 = vunpack.c.l.b16 %v1620
    %v1912 = vunpack.c.h.b16 %v1620
    %v1913 = vunpack.c.l.b16 %v1621
    %v1914 = vunpack.c.h.b16 %v1621
    %v1915 = vunpack.c.l.b16 %v1622
    %v1916 = vunpack.c.h.b16 %v1622
    %v1917 = vunpack.c.l.b16 %v1623
    %v1918 = vunpack.c.h.b16 %v1623
    %v1919 = vunpack.c.l.b16 %v1624
    %v1920 = vunpack.c.h.b16 %v1624
    %v1921 = vunpack.c.l.b16 %v1625
    %v1922 = vunpack.c.h.b16 %v1625
    %v1923 = vunpack.c.l.b16 %v1626
    %v1924 = vunpack.c.h.b16 %v1626
    %v1925 = vunpack.c.l.b16 %v1627
    %v1926 = vunpack.c.h.b16 %v1627
    %v1927 = vunpack.c.l.b16 %v1628
    %v1928 = vunpack.c.h.b16 %v1628
    %v1929 = vunpack.c.l.b16 %v1629
    %v1930 = vunpack.c.h.b16 %v1629
    %v1931 = vunpack.c.l.b16 %v1630
    %v1932 = vunpack.c.h.b16 %v1630
    %v1933 = vunpack.c.l.b16 %v1631
    %v1934 = vunpack.c.h.b16 %v1631
    %v1935 = vunpack.c.l.b16 %v1632
    %v1936 = vunpack.c.h.b16 %v1632
    %v1937 = vunpack.c.l.b16 %v1633
    %v1938 = vunpack.c.h.b16 %v1633
    %v1939 = vunpack.c.l.b16 %v1634
    %v1940 = vunpack.c.h.b16 %v1634
    %v1941 = vunpack.c.l.b16 %v1635
    %v1942 = vunpack.c.h.b16 %v1635
    %v1943 = vunpack.c.l.b16 %v1636
    %v1944 = vunpack.c.h.b16 %v1636
    %v1945 = vunpack.c.l.b16 %v1637
    %v1946 = vunpack.c.h.b16 %v1637
    %v1947 = vunpack.c.l.b16 %v1638
    %v1948 = vunpack.c.h.b16 %v1638
    %v1949 = vunpack.c.l.b16 %v1639
    %v1950 = vunpack.c.h.b16 %v1639
    %v1951 = vunpack.c.l.b16 %v1640
    %v1952 = vunpack.c.h.b16 %v1640
    %v1953 = vunpack.c.l.b16 %v1641
    %v1954 = vunpack.c.h.b16 %v1641
    %v1955 = vunpack.c.l.b16 %v1642
    %v1956 = vunpack.c.h.b16 %v1642
    %v1957 = vunpack.c.l.b16 %v1643
    %v1958 = vunpack.c.h.b16 %v1643
    %v1959 = vunpack.c.l.b16 %v1644
    %v1960 = vunpack.c.h.b16 %v1644
    %v1961 = vunpack.c.l.b16 %v1645
    %v1962 = vunpack.c.h.b16 %v1645
    %v1963 = vunpack.c.l.b16 %v1646
    %v1964 = vunpack.c.h.b16 %v1646
    %v1965 = vunpack.c.l.b16 %v1647
    %v1966 = vunpack.c.h.b16 %v1647
    %v1967 = vunpack.c.l.b16 %v1648
    %v1968 = vunpack.c.h.b16 %v1648
    %v1969 = vunpack.c.l.b16 %v1649
    %v1970 = vunpack.c.h.b16 %v1649
    %v1971 = vunpack.c.l.b16 %v1650
    %v1972 = vunpack.c.h.b16 %v1650
    %v1973 = vunpack.c.l.b16 %v1651
    %v1974 = vunpack.c.h.b16 %v1651
    %v1975 = vunpack.c.l.b16 %v1652
    %v1976 = vunpack.c.h.b16 %v1652
    %v1977 = vunpack.c.l.b16 %v1653
    %v1978 = vunpack.c.h.b16 %v1653
    %v1979 = vunpack.c.l.b16 %v1654
    %v1980 = vunpack.c.h.b16 %v1654
    %v1981 = vunpack.c.l.b16 %v1655
    %v1982 = vunpack.c.h.b16 %v1655
    %v1983 = vunpack.c.l.b16 %v1656
    %v1984 = vunpack.c.h.b16 %v1656
    %v1985 = vunpack.c.l.b16 %v1657
    %v1986 = vunpack.c.h.b16 %v1657
    %v1987 = vunpack.c.l.b16 %v1658
    %v1988 = vunpack.c.h.b16 %v1658
    %v1989 = vunpack.c.l.b16 %v1659
    %v1990 = vunpack.c.h.b16 %v1659
    %v1991 = vunpack.c.l.b16 %v1660
    %v1992 = vunpack.c.h.b16 %v1660
    %v1993 = vunpack.c.l.b16 %v1661
    %v1994 = vunpack.c.h.b16 %v1661
    %v1995 = vunpack.c.l.b16 %v1662
    %v1996 = vunpack.c.h.b16 %v1662
    %v1997 = vunpack.c.l.b16 %v1663
    %v1998 = vunpack.c.h.b16 %v1663
    %v1999 = vunpack.c.l.b16 %v1664
    %v2000 = vunpack.c.h.b16 %v1664
    %v2001 = vunpack.c.l.b16 %v1665
    %v2002 = vunpack.c.h.b16 %v1665
    %v2003 = vunpack.c.l.b16 %v1666
    %v2004 = vunpack.c.h.b16 %v1666
    %v2005 = vunpack.c.l.b16 %v1667
    %v2006 = vunpack.c.h.b16 %v1667
    %v2007 = vunpack.c.l.b16 %v1668
    %v2008 = vunpack.c.h.b16 %v1668
    %v2009 = vunpack.c.l.b16 %v1669
    %v2010 = vunpack.c.h.b16 %v1669
    %v2011 = vunpack.c.l.b16 %v1670
    %v2012 = vunpack.c.h.b16 %v1670
    %v2013 = vunpack.c.l.b16 %v1671
    %v2014 = vunpack.c.h.b16 %v1671
    %v2015 = vunpack.c.l.b16 %v1672
    %v2016 = vunpack.c.h.b16 %v1672
    %v2017 = vunpack.c.l.b16 %v1673
    %v2018 = vunpack.c.h.b16 %v1673
    %v2019 = vunpack.c.l.b16 %v1674
    %v2020 = vunpack.c.h.b16 %v1674
    %v2021 = vunpack.c.l.b16 %v1675
    %v2022 = vunpack.c.h.b16 %v1675
    %v2023 = vunpack.c.l.b16 %v1676
    %v2024 = vunpack.c.h.b16 %v1676
    %v2025 = vunpack.c.l.b16 %v1677
    %v2026 = vunpack.c.h.b16 %v1677
    %v2027 = vunpack.c.l.b16 %v1678
    %v2028 = vunpack.c.h.b16 %v1678
    %v2029 = vunpack.c.l.b16 %v1679
    %v2030 = vunpack.c.h.b16 %v1679
    %v2031 = vunpack.c.l.b16 %v1680
    %v2032 = vunpack.c.h.b16 %v1680
    %v2033 = vunpack.c.l.b16 %v1681
    %v2034 = vunpack.c.h.b16 %v1681
    %v2035 = vunpack.c.l.b16 %v1682
    %v2036 = vunpack.c.h.b16 %v1682
    %v2037 = vunpack.c.l.b16 %v1683
    %v2038 = vunpack.c.h.b16 %v1683
    %v2039 = vunpack.c.l.b16 %v1684
    %v2040 = vunpack.c.h.b16 %v1684
    %v2041 = vunpack.c.l.b16 %v1685
    %v2042 = vunpack.c.h.b16 %v1685
    %v2043 = vunpack.c.l.b16 %v1686
    %v2044 = vunpack.c.h.b16 %v1686
    %v2045 = vunpack.c.l.b16 %v1687
    %v2046 = vunpack.c.h.b16 %v1687
    %v2047 = vunpack.c.l.b16 %v1688
    %v2048 = vunpack.c.h.b16 %v1688
    %v2049 = vunpack.c.l.b16 %v1689
    %v2050 = vunpack.c.h.b16 %v1689
    %v2051 = vunpack.c.l.b16 %v1690
    %v2052 = vunpack.c.h.b16 %v1690
    %v2053 = vunpack.c.l.b16 %v1691
    %v2054 = vunpack.c.h.b16 %v1691
    %v2055 = vunpack.c.l.b16 %v1692
    %v2056 = vunpack.c.h.b16 %v1692
    %v2057 = vunpack.c.l.b16 %v1693
    %v2058 = vunpack.c.h.b16 %v1693
    %v2059 = vunpack.c.l.b16 %v1694
    %v2060 = vunpack.c.h.b16 %v1694
    %v2061 = vunpack.c.l.b16 %v1695
    %v2062 = vunpack.c.h.b16 %v1695
    %v2063 = vunpack.c.l.b16 %v1696
    %v2064 = vunpack.c.h.b16 %v1696
    %v2065 = vunpack.c.l.b16 %v1697
    %v2066 = vunpack.c.h.b16 %v1697
    %v2067 = vunpack.c.l.b16 %v1698
    %v2068 = vunpack.c.h.b16 %v1698
    %v2069 = vunpack.c.l.b16 %v1699
    %v2070 = vunpack.c.h.b16 %v1699
    %v2071 = vunpack.c.l.b16 %v1700
    %v2072 = vunpack.c.h.b16 %v1700
    %v2073 = vunpack.c.l.b16 %v1701
    %v2074 = vunpack.c.h.b16 %v1701
    %v2075 = vunpack.c.l.b16 %v1702
    %v2076 = vunpack.c.h.b16 %v1702
    %v2077 = vunpack.c.l.b16 %v1703
    %v2078 = vunpack.c.h.b16 %v1703
    %v2079 = vunpack.c.l.b16 %v1704
    %v2080 = vunpack.c.h.b16 %v1704
    %v2081 = vunpack.c.l.b16 %v1705
    %v2082 = vunpack.c.h.b16 %v1705
    %v2083 = vunpack.c.l.b16 %v1706
    %v2084 = vunpack.c.h.b16 %v1706
    %v2085 = vunpack.c.l.b16 %v1707
    %v2086 = vunpack.c.h.b16 %v1707
    %v2087 = vunpack.c.l.b16 %v1708
    %v2088 = vunpack.c.h.b16 %v1708
    %v2089 = vunpack.c.l.b16 %v1709
    %v2090 = vunpack.c.h.b16 %v1709
    %v2091 = vunpack.c.l.b16 %v1710
    %v2092 = vunpack.c.h.b16 %v1710
    %v2093 = vunpack.c.l.b16 %v1711
    %v2094 = vunpack.c.h.b16 %v1711
    %v2095 = vunpack.c.l.b16 %v1712
    %v2096 = vunpack.c.h.b16 %v1712
    %v2097 = vpack.c.b16 %v1845, %v1841
    %v2098 = vpack.c.b16 %v1846, %v1842
    %v2099 = vpack.c.b16 %v1847, %v1843
    %v2100 = vpack.c.b16 %v1848, %v1844
    %v2101 = vpack.c.b16 %v1853, %v1849
    %v2102 = vpack.c.b16 %v1854, %v1850
    %v2103 = vpack.c.b16 %v1855, %v1851
    %v2104 = vpack.c.b16 %v1856, %v1852
    %v2105 = vpack.c.b16 %v1861, %v1857
    %v2106 = vpack.c.b16 %v1862, %v1858
    %v2107 = vpack.c.b16 %v1863, %v1859
    %v2108 = vpack.c.b16 %v1864, %v1860
    %v2109 = vpack.c.b16 %v1869, %v1865
    %v2110 = vpack.c.b16 %v1870, %v1866
    %v2111 = vpack.c.b16 %v1871, %v1867
    %v2112 = vpack.c.b16 %v1872, %v1868
    %v2113 = vpack.c.b16 %v1877, %v1873
    %v2114 = vpack.c.b16 %v1878, %v1874
    %v2115 = vpack.c.b16 %v1879, %v1875
    %v2116 = vpack.c.b16 %v1880, %v1876
    %v2117 = vpack.c.b16 %v1885, %v1881
    %v2118 = vpack.c.b16 %v1886, %v1882
    %v2119 = vpack.c.b16 %v1887, %v1883
    %v2120 = vpack.c.b16 %v1888, %v1884
    %v2121 = vpack.c.b16 %v1893, %v1889
    %v2122 = vpack.c.b16 %v1894, %v1890
    %v2123 = vpack.c.b16 %v1895, %v1891
    %v2124 = vpack.c.b16 %v1896, %v1892
    %v2125 = vpack.c.b16 %v1901, %v1897
    %v2126 = vpack.c.b16 %v1902, %v1898
    %v2127 = vpack.c.b16 %v1903, %v1899
    %v2128 = vpack.c.b16 %v1904, %v1900
    %v2129 = vpack.c.b16 %v1909, %v1905
    %v2130 = vpack.c.b16 %v1910, %v1906
    %v2131 = vpack.c.b16 %v1911, %v1907
    %v2132 = vpack.c.b16 %v1912, %v1908
    %v2133 = vpack.c.b16 %v1917, %v1913
    %v2134 = vpack.c.b16 %v1918, %v1914
    %v2135 = vpack.c.b16 %v1919, %v1915
    %v2136 = vpack.c.b16 %v1920, %v1916
    %v2137 = vpack.c.b16 %v1925, %v1921
    %v2138 = vpack.c.b16 %v1926, %v1922
    %v2139 = vpack.c.b16 %v1927, %v1923
    %v2140 = vpack.c.b16 %v1928, %v1924
    %v2141 = vpack.c.b16 %v1933, %v1929
    %v2142 = vpack.c.b16 %v1934, %v1930
    %v2143 = vpack.c.b16 %v1935, %v1931
    %v2144 = vpack.c.b16 %v1936, %v1932
    %v2145 = vpack.c.b16 %v1941, %v1937
    %v2146 = vpack.c.b16 %v1942, %v1938
    %v2147 = vpack.c.b16 %v1943, %v1939
    %v2148 = vpack.c.b16 %v1944, %v1940
    %v2149 = vpack.c.b16 %v1949, %v1945
    %v2150 = vpack.c.b16 %v1950, %v1946
    %v2151 = vpack.c.b16 %v1951, %v1947
    %v2152 = vpack.c.b16 %v1952, %v1948
    %v2153 = vpack.c.b16 %v1957, %v1953
    %v2154 = vpack.c.b16 %v1958, %v1954
    %v2155 = vpack.c.b16 %v1959, %v1955
    %v2156 = vpack.c.b16 %v1960, %v1956
    %v2157 = vpack.c.b16 %v1965, %v1961
    %v2158 = vpack.c.b16 %v1966, %v1962
    %v2159 = vpack.c.b16 %v1967, %v1963
    %v2160 = vpack.c.b16 %v1968, %v1964
    %v2161 = vpack.c.b16 %v1973, %v1969
    %v2162 = vpack.c.b16 %v1974, %v1970
    %v2163 = vpack.c.b16 %v1975, %v1971
    %v2164 = vpack.c.b16 %v1976, %v1972
    %v2165 = vpack.c.b16 %v1981, %v1977
    %v2166 = vpack.c.b16 %v1982, %v1978
    %v2167 = vpack.c.b16 %v1983, %v1979
    %v2168 = vpack.c.b16 %v1984, %v1980
    %v2169 = vpack.c.b16 %v1989, %v1985
    %v2170 = vpack.c.b16 %v1990, %v1986
    %v2171 = vpack.c.b16 %v1991, %v1987
    %v2172 = vpack.c.b16 %v1992, %v1988
    %v2173 = vpack.c.b16 %v1997, %v1993
    %v2174 = vpack.c.b16 %v1998, %v1994
    %v2175 = vpack.c.b16 %v1999, %v1995
    %v2176 = vpack.c.b16 %v2000, %v1996
    %v2177 = vpack.c.b16 %v2005, %v2001
    %v2178 = vpack.c.b16 %v2006, %v2002
    %v2179 = vpack.c.b16 %v2007, %v2003
    %v2180 = vpack.c.b16 %v2008, %v2004
    %v2181 = vpack.c.b16 %v2013, %v2009
    %v2182 = vpack.c.b16 %v2014, %v2010
    %v2183 = vpack.c.b16 %v2015, %v2011
    %v2184 = vpack.c.b16 %v2016, %v2012
    %v2185 = vpack.c.b16 %v2021, %v2017
    %v2186 = vpack.c.b16 %v2022, %v2018
    %v2187 = vpack.c.b16 %v2023, %v2019
    %v2188 = vpack.c.b16 %v2024, %v2020
    %v2189 = vpack.c.b16 %v2029, %v2025
    %v2190 = vpack.c.b16 %v2030, %v2026
    %v2191 = vpack.c.b16 %v2031, %v2027
    %v2192 = vpack.c.b16 %v2032, %v2028
    %v2193 = vpack.c.b16 %v2037, %v2033
    %v2194 = vpack.c.b16 %v2038, %v2034
    %v2195 = vpack.c.b16 %v2039, %v2035
    %v2196 = vpack.c.b16 %v2040, %v2036
    %v2197 = vpack.c.b16 %v2045, %v2041
    %v2198 = vpack.c.b16 %v2046, %v2042
    %v2199 = vpack.c.b16 %v2047, %v2043
    %v2200 = vpack.c.b16 %v2048, %v2044
    %v2201 = vpack.c.b16 %v2053, %v2049
    %v2202 = vpack.c.b16 %v2054, %v2050
    %v2203 = vpack.c.b16 %v2055, %v2051
    %v2204 = vpack.c.b16 %v2056, %v2052
    %v2205 = vpack.c.b16 %v2061, %v2057
    %v2206 = vpack.c.b16 %v2062, %v2058
    %v2207 = vpack.c.b16 %v2063, %v2059
    %v2208 = vpack.c.b16 %v2064, %v2060
    %v2209 = vpack.c.b16 %v2069, %v2065
    %v2210 = vpack.c.b16 %v2070, %v2066
    %v2211 = vpack.c.b16 %v2071, %v2067
    %v2212 = vpack.c.b16 %v2072, %v2068
    %v2213 = vpack.c.b16 %v2077, %v2073
    %v2214 = vpack.c.b16 %v2078, %v2074
    %v2215 = vpack.c.b16 %v2079, %v2075
    %v2216 = vpack.c.b16 %v2080, %v2076
    %v2217 = vpack.c.b16 %v2085, %v2081
    %v2218 = vpack.c.b16 %v2086, %v2082
    %v2219 = vpack.c.b16 %v2087, %v2083
    %v2220 = vpack.c.b16 %v2088, %v2084
    %v2221 = vpack.c.b16 %v2093, %v2089
    %v2222 = vpack.c.b16 %v2094, %v2090
    %v2223 = vpack.c.b16 %v2095, %v2091
    %v2224 = vpack.c.b16 %v2096, %v2092
    %2353 = vmatprep.subr.bf16.mxu0 %v2098
    %2354 = vmatpush1.bf16.msra.mxu0 %v2097
    %2355 = vmatprep.subr.bf16.mxu0 %v2102
    %2356 = vmatpush1.bf16.msra.mxu0 %v2101
    %2357 = vmatprep.subr.bf16.mxu0 %v2106
    %2358 = vmatpush1.bf16.msra.mxu0 %v2105
    %2359 = vmatprep.subr.bf16.mxu0 %v2110
    %2360 = vmatpush1.bf16.msra.mxu0 %v2109
    %2361 = vmatprep.subr.bf16.mxu0 %v2114
    %2362 = vmatpush1.bf16.msra.mxu0 %v2113
    %2363 = vmatprep.subr.bf16.mxu0 %v2118
    %2364 = vmatpush1.bf16.msra.mxu0 %v2117
    %2365 = vmatprep.subr.bf16.mxu0 %v2122
    %2366 = vmatpush1.bf16.msra.mxu0 %v2121
    %2367 = vmatprep.subr.bf16.mxu0 %v2126
    %2368 = vmatpush1.bf16.msra.mxu0 %v2125
    %2369 = vmatprep.subr.bf16.mxu0 %v2130
    %2370 = vmatpush1.bf16.msra.mxu0 %v2129
    %2371 = vmatprep.subr.bf16.mxu0 %v2134
    %2372 = vmatpush1.bf16.msra.mxu0 %v2133
    %2373 = vmatprep.subr.bf16.mxu0 %v2138
    %2374 = vmatpush1.bf16.msra.mxu0 %v2137
    %2375 = vmatprep.subr.bf16.mxu0 %v2142
    %2376 = vmatpush1.bf16.msra.mxu0 %v2141
    %2377 = vmatprep.subr.bf16.mxu0 %v2146
    %2378 = vmatpush1.bf16.msra.mxu0 %v2145
    %2379 = vmatprep.subr.bf16.mxu0 %v2150
    %2380 = vmatpush1.bf16.msra.mxu0 %v2149
    %2381 = vmatprep.subr.bf16.mxu0 %v2154
    %2382 = vmatpush1.bf16.msra.mxu0 %v2153
    %2383 = vmatprep.subr.bf16.mxu0 %v2158
    %2384 = vmatpush1.bf16.msra.mxu0 %v2157
    %2385 = vmatprep.mubr.bf16.mxu0 %v1582
    %2386 = vmatmul.mubr.bf16.gmra.mrb[0].mxu0 %v1581
    %v2387 = vpop.f32.mrb[0].mxu0
    %v2388 = vadd.f32 0.0, %v2387
    %v2389 = vpop.f32.mrb[0].mxu0
    %v2390 = vadd.f32 0.0, %v2389
    %v2391 = vpop.f32.mrb[0].mxu0
    %v2392 = vpop.f32.mrb[0].mxu0
    %2393 = vdwg.mxu0
    %2394 = vmatprep.subr.bf16.mxu0 %v2162
    %2395 = vmatpush1.bf16.msra.mxu0 %v2161
    %2396 = vmatprep.subr.bf16.mxu0 %v2166
    %2397 = vmatpush1.bf16.msra.mxu0 %v2165
    %2398 = vmatprep.subr.bf16.mxu0 %v2170
    %2399 = vmatpush1.bf16.msra.mxu0 %v2169
    %2400 = vmatprep.subr.bf16.mxu0 %v2174
    %2401 = vmatpush1.bf16.msra.mxu0 %v2173
    %2402 = vmatprep.subr.bf16.mxu0 %v2178
    %2403 = vmatpush1.bf16.msra.mxu0 %v2177
    %2404 = vmatprep.subr.bf16.mxu0 %v2182
    %2405 = vmatpush1.bf16.msra.mxu0 %v2181
    %2406 = vmatprep.subr.bf16.mxu0 %v2186
    %2407 = vmatpush1.bf16.msra.mxu0 %v2185
    %2408 = vmatprep.subr.bf16.mxu0 %v2190
    %2409 = vmatpush1.bf16.msra.mxu0 %v2189
    %2410 = vmatprep.subr.bf16.mxu0 %v2194
    %2411 = vmatpush1.bf16.msra.mxu0 %v2193
    %2412 = vmatprep.subr.bf16.mxu0 %v2198
    %2413 = vmatpush1.bf16.msra.mxu0 %v2197
    %2414 = vmatprep.subr.bf16.mxu0 %v2202
    %2415 = vmatpush1.bf16.msra.mxu0 %v2201
    %2416 = vmatprep.subr.bf16.mxu0 %v2206
    %2417 = vmatpush1.bf16.msra.mxu0 %v2205
    %2418 = vmatprep.subr.bf16.mxu0 %v2210
    %2419 = vmatpush1.bf16.msra.mxu0 %v2209
    %2420 = vmatprep.subr.bf16.mxu0 %v2214
    %2421 = vmatpush1.bf16.msra.mxu0 %v2213
    %2422 = vmatprep.subr.bf16.mxu0 %v2218
    %2423 = vmatpush1.bf16.msra.mxu0 %v2217
    %2424 = vmatprep.subr.bf16.mxu0 %v2222
    %2425 = vmatpush1.bf16.msra.mxu0 %v2221
    %2426 = vmatprep.mubr.bf16.mxu0 %v1584
    %2427 = vmatmul.mubr.bf16.gmra.mrb[0].mxu0 %v1583
    %v2428 = vpop.f32.mrb[0].mxu0
    %v2429 = vadd.f32 %v2388, %v2428
    %v2430 = vpop.f32.mrb[0].mxu0
    %v2431 = vadd.f32 %v2390, %v2430
    %v2432 = vpop.f32.mrb[0].mxu0
    %v2433 = vpop.f32.mrb[0].mxu0
    %2434 = vdwg.mxu0
    %2435 = vmatprep.subr.bf16.mxu0 %v2100
    %2436 = vmatpush1.bf16.msra.mxu0 %v2099
    %2437 = vmatprep.subr.bf16.mxu0 %v2104
    %2438 = vmatpush1.bf16.msra.mxu0 %v2103
    %2439 = vmatprep.subr.bf16.mxu0 %v2108
    %2440 = vmatpush1.bf16.msra.mxu0 %v2107
    %2441 = vmatprep.subr.bf16.mxu0 %v2112
    %2442 = vmatpush1.bf16.msra.mxu0 %v2111
    %2443 = vmatprep.subr.bf16.mxu0 %v2116
    %2444 = vmatpush1.bf16.msra.mxu0 %v2115
    %2445 = vmatprep.subr.bf16.mxu0 %v2120
    %2446 = vmatpush1.bf16.msra.mxu0 %v2119
    %2447 = vmatprep.subr.bf16.mxu0 %v2124
    %2448 = vmatpush1.bf16.msra.mxu0 %v2123
    %2449 = vmatprep.subr.bf16.mxu0 %v2128
    %2450 = vmatpush1.bf16.msra.mxu0 %v2127
    %2451 = vmatprep.subr.bf16.mxu0 %v2132
    %2452 = vmatpush1.bf16.msra.mxu0 %v2131
    %2453 = vmatprep.subr.bf16.mxu0 %v2136
    %2454 = vmatpush1.bf16.msra.mxu0 %v2135
    %2455 = vmatprep.subr.bf16.mxu0 %v2140
    %2456 = vmatpush1.bf16.msra.mxu0 %v2139
    %2457 = vmatprep.subr.bf16.mxu0 %v2144
    %2458 = vmatpush1.bf16.msra.mxu0 %v2143
    %2459 = vmatprep.subr.bf16.mxu0 %v2148
    %2460 = vmatpush1.bf16.msra.mxu0 %v2147
    %2461 = vmatprep.subr.bf16.mxu0 %v2152
    %2462 = vmatpush1.bf16.msra.mxu0 %v2151
    %2463 = vmatprep.subr.bf16.mxu0 %v2156
    %2464 = vmatpush1.bf16.msra.mxu0 %v2155
    %2465 = vmatprep.subr.bf16.mxu0 %v2160
    %2466 = vmatpush1.bf16.msra.mxu0 %v2159
    %2467 = vmatprep.mubr.bf16.mxu0 %v1582
    %2468 = vmatmul.mubr.bf16.gmra.mrb[0].mxu0 %v1581
    %v2469 = vpop.f32.mrb[0].mxu0
    %v2470 = vadd.f32 0.0, %v2469
    %v2471 = vpop.f32.mrb[0].mxu0
    %v2472 = vadd.f32 0.0, %v2471
    %v2473 = vpop.f32.mrb[0].mxu0
    %v2474 = vpop.f32.mrb[0].mxu0
    %2475 = vdwg.mxu0
    %2476 = vmatprep.subr.bf16.mxu0 %v2164
    %2477 = vmatpush1.bf16.msra.mxu0 %v2163
    %2478 = vmatprep.subr.bf16.mxu0 %v2168
    %2479 = vmatpush1.bf16.msra.mxu0 %v2167
    %2480 = vmatprep.subr.bf16.mxu0 %v2172
    %2481 = vmatpush1.bf16.msra.mxu0 %v2171
    %2482 = vmatprep.subr.bf16.mxu0 %v2176
    %2483 = vmatpush1.bf16.msra.mxu0 %v2175
    %2484 = vmatprep.subr.bf16.mxu0 %v2180
    %2485 = vmatpush1.bf16.msra.mxu0 %v2179
    %2486 = vmatprep.subr.bf16.mxu0 %v2184
    %2487 = vmatpush1.bf16.msra.mxu0 %v2183
    %2488 = vmatprep.subr.bf16.mxu0 %v2188
    %2489 = vmatpush1.bf16.msra.mxu0 %v2187
    %2490 = vmatprep.subr.bf16.mxu0 %v2192
    %2491 = vmatpush1.bf16.msra.mxu0 %v2191
    %2492 = vmatprep.subr.bf16.mxu0 %v2196
    %2493 = vmatpush1.bf16.msra.mxu0 %v2195
    %2494 = vmatprep.subr.bf16.mxu0 %v2200
    %2495 = vmatpush1.bf16.msra.mxu0 %v2199
    %2496 = vmatprep.subr.bf16.mxu0 %v2204
    %2497 = vmatpush1.bf16.msra.mxu0 %v2203
    %2498 = vmatprep.subr.bf16.mxu0 %v2208
    %2499 = vmatpush1.bf16.msra.mxu0 %v2207
    %2500 = vmatprep.subr.bf16.mxu0 %v2212
    %2501 = vmatpush1.bf16.msra.mxu0 %v2211
    %2502 = vmatprep.subr.bf16.mxu0 %v2216
    %2503 = vmatpush1.bf16.msra.mxu0 %v2215
    %2504 = vmatprep.subr.bf16.mxu0 %v2220
    %2505 = vmatpush1.bf16.msra.mxu0 %v2219
    %2506 = vmatprep.subr.bf16.mxu0 %v2224
    %2507 = vmatpush1.bf16.msra.mxu0 %v2223
    %2508 = vmatprep.mubr.bf16.mxu0 %v1584
    %2509 = vmatmul.mubr.bf16.gmra.mrb[0].mxu0 %v1583
    %v2510 = vpop.f32.mrb[0].mxu0
    %v2511 = vadd.f32 %v2470, %v2510
    %v2512 = vpop.f32.mrb[0].mxu0
    %v2513 = vadd.f32 %v2472, %v2512
    %v2514 = vpop.f32.mrb[0].mxu0
    %v2515 = vpop.f32.mrb[0].mxu0
    %2516 = vdwg.mxu0
    %v2645 = vunpack.c.l.b16 %v1453
    %v2646 = vunpack.c.h.b16 %v1453
    %v2647 = vunpack.c.l.b16 %v1454
    %v2648 = vunpack.c.h.b16 %v1454
    %v2649 = vunpack.c.l.b16 %v1455
    %v2650 = vunpack.c.h.b16 %v1455
    %v2651 = vunpack.c.l.b16 %v1456
    %v2652 = vunpack.c.h.b16 %v1456
    %v2653 = vunpack.c.l.b16 %v1457
    %v2654 = vunpack.c.h.b16 %v1457
    %v2655 = vunpack.c.l.b16 %v1458
    %v2656 = vunpack.c.h.b16 %v1458
    %v2657 = vunpack.c.l.b16 %v1459
    %v2658 = vunpack.c.h.b16 %v1459
    %v2659 = vunpack.c.l.b16 %v1460
    %v2660 = vunpack.c.h.b16 %v1460
    %v2661 = vunpack.c.l.b16 %v1461
    %v2662 = vunpack.c.h.b16 %v1461
    %v2663 = vunpack.c.l.b16 %v1462
    %v2664 = vunpack.c.h.b16 %v1462
    %v2665 = vunpack.c.l.b16 %v1463
    %v2666 = vunpack.c.h.b16 %v1463
    %v2667 = vunpack.c.l.b16 %v1464
    %v2668 = vunpack.c.h.b16 %v1464
    %v2669 = vunpack.c.l.b16 %v1465
    %v2670 = vunpack.c.h.b16 %v1465
    %v2671 = vunpack.c.l.b16 %v1466
    %v2672 = vunpack.c.h.b16 %v1466
    %v2673 = vunpack.c.l.b16 %v1467
    %v2674 = vunpack.c.h.b16 %v1467
    %v2675 = vunpack.c.l.b16 %v1468
    %v2676 = vunpack.c.h.b16 %v1468
    %v2677 = vunpack.c.l.b16 %v1469
    %v2678 = vunpack.c.h.b16 %v1469
    %v2679 = vunpack.c.l.b16 %v1470
    %v2680 = vunpack.c.h.b16 %v1470
    %v2681 = vunpack.c.l.b16 %v1471
    %v2682 = vunpack.c.h.b16 %v1471
    %v2683 = vunpack.c.l.b16 %v1472
    %v2684 = vunpack.c.h.b16 %v1472
    %v2685 = vunpack.c.l.b16 %v1473
    %v2686 = vunpack.c.h.b16 %v1473
    %v2687 = vunpack.c.l.b16 %v1474
    %v2688 = vunpack.c.h.b16 %v1474
    %v2689 = vunpack.c.l.b16 %v1475
    %v2690 = vunpack.c.h.b16 %v1475
    %v2691 = vunpack.c.l.b16 %v1476
    %v2692 = vunpack.c.h.b16 %v1476
    %v2693 = vunpack.c.l.b16 %v1477
    %v2694 = vunpack.c.h.b16 %v1477
    %v2695 = vunpack.c.l.b16 %v1478
    %v2696 = vunpack.c.h.b16 %v1478
    %v2697 = vunpack.c.l.b16 %v1479
    %v2698 = vunpack.c.h.b16 %v1479
    %v2699 = vunpack.c.l.b16 %v1480
    %v2700 = vunpack.c.h.b16 %v1480
    %v2701 = vunpack.c.l.b16 %v1481
    %v2702 = vunpack.c.h.b16 %v1481
    %v2703 = vunpack.c.l.b16 %v1482
    %v2704 = vunpack.c.h.b16 %v1482
    %v2705 = vunpack.c.l.b16 %v1483
    %v2706 = vunpack.c.h.b16 %v1483
    %v2707 = vunpack.c.l.b16 %v1484
    %v2708 = vunpack.c.h.b16 %v1484
    %v2709 = vunpack.c.l.b16 %v1485
    %v2710 = vunpack.c.h.b16 %v1485
    %v2711 = vunpack.c.l.b16 %v1486
    %v2712 = vunpack.c.h.b16 %v1486
    %v2713 = vunpack.c.l.b16 %v1487
    %v2714 = vunpack.c.h.b16 %v1487
    %v2715 = vunpack.c.l.b16 %v1488
    %v2716 = vunpack.c.h.b16 %v1488
    %v2717 = vunpack.c.l.b16 %v1489
    %v2718 = vunpack.c.h.b16 %v1489
    %v2719 = vunpack.c.l.b16 %v1490
    %v2720 = vunpack.c.h.b16 %v1490
    %v2721 = vunpack.c.l.b16 %v1491
    %v2722 = vunpack.c.h.b16 %v1491
    %v2723 = vunpack.c.l.b16 %v1492
    %v2724 = vunpack.c.h.b16 %v1492
    %v2725 = vunpack.c.l.b16 %v1493
    %v2726 = vunpack.c.h.b16 %v1493
    %v2727 = vunpack.c.l.b16 %v1494
    %v2728 = vunpack.c.h.b16 %v1494
    %v2729 = vunpack.c.l.b16 %v1495
    %v2730 = vunpack.c.h.b16 %v1495
    %v2731 = vunpack.c.l.b16 %v1496
    %v2732 = vunpack.c.h.b16 %v1496
    %v2733 = vunpack.c.l.b16 %v1497
    %v2734 = vunpack.c.h.b16 %v1497
    %v2735 = vunpack.c.l.b16 %v1498
    %v2736 = vunpack.c.h.b16 %v1498
    %v2737 = vunpack.c.l.b16 %v1499
    %v2738 = vunpack.c.h.b16 %v1499
    %v2739 = vunpack.c.l.b16 %v1500
    %v2740 = vunpack.c.h.b16 %v1500
    %v2741 = vunpack.c.l.b16 %v1501
    %v2742 = vunpack.c.h.b16 %v1501
    %v2743 = vunpack.c.l.b16 %v1502
    %v2744 = vunpack.c.h.b16 %v1502
    %v2745 = vunpack.c.l.b16 %v1503
    %v2746 = vunpack.c.h.b16 %v1503
    %v2747 = vunpack.c.l.b16 %v1504
    %v2748 = vunpack.c.h.b16 %v1504
    %v2749 = vunpack.c.l.b16 %v1505
    %v2750 = vunpack.c.h.b16 %v1505
    %v2751 = vunpack.c.l.b16 %v1506
    %v2752 = vunpack.c.h.b16 %v1506
    %v2753 = vunpack.c.l.b16 %v1507
    %v2754 = vunpack.c.h.b16 %v1507
    %v2755 = vunpack.c.l.b16 %v1508
    %v2756 = vunpack.c.h.b16 %v1508
    %v2757 = vunpack.c.l.b16 %v1509
    %v2758 = vunpack.c.h.b16 %v1509
    %v2759 = vunpack.c.l.b16 %v1510
    %v2760 = vunpack.c.h.b16 %v1510
    %v2761 = vunpack.c.l.b16 %v1511
    %v2762 = vunpack.c.h.b16 %v1511
    %v2763 = vunpack.c.l.b16 %v1512
    %v2764 = vunpack.c.h.b16 %v1512
    %v2765 = vunpack.c.l.b16 %v1513
    %v2766 = vunpack.c.h.b16 %v1513
    %v2767 = vunpack.c.l.b16 %v1514
    %v2768 = vunpack.c.h.b16 %v1514
    %v2769 = vunpack.c.l.b16 %v1515
    %v2770 = vunpack.c.h.b16 %v1515
    %v2771 = vunpack.c.l.b16 %v1516
    %v2772 = vunpack.c.h.b16 %v1516
    %v2773 = vunpack.c.l.b16 %v1517
    %v2774 = vunpack.c.h.b16 %v1517
    %v2775 = vunpack.c.l.b16 %v1518
    %v2776 = vunpack.c.h.b16 %v1518
    %v2777 = vunpack.c.l.b16 %v1519
    %v2778 = vunpack.c.h.b16 %v1519
    %v2779 = vunpack.c.l.b16 %v1520
    %v2780 = vunpack.c.h.b16 %v1520
    %v2781 = vunpack.c.l.b16 %v1521
    %v2782 = vunpack.c.h.b16 %v1521
    %v2783 = vunpack.c.l.b16 %v1522
    %v2784 = vunpack.c.h.b16 %v1522
    %v2785 = vunpack.c.l.b16 %v1523
    %v2786 = vunpack.c.h.b16 %v1523
    %v2787 = vunpack.c.l.b16 %v1524
    %v2788 = vunpack.c.h.b16 %v1524
    %v2789 = vunpack.c.l.b16 %v1525
    %v2790 = vunpack.c.h.b16 %v1525
    %v2791 = vunpack.c.l.b16 %v1526
    %v2792 = vunpack.c.h.b16 %v1526
    %v2793 = vunpack.c.l.b16 %v1527
    %v2794 = vunpack.c.h.b16 %v1527
    %v2795 = vunpack.c.l.b16 %v1528
    %v2796 = vunpack.c.h.b16 %v1528
    %v2797 = vunpack.c.l.b16 %v1529
    %v2798 = vunpack.c.h.b16 %v1529
    %v2799 = vunpack.c.l.b16 %v1530
    %v2800 = vunpack.c.h.b16 %v1530
    %v2801 = vunpack.c.l.b16 %v1531
    %v2802 = vunpack.c.h.b16 %v1531
    %v2803 = vunpack.c.l.b16 %v1532
    %v2804 = vunpack.c.h.b16 %v1532
    %v2805 = vunpack.c.l.b16 %v1533
    %v2806 = vunpack.c.h.b16 %v1533
    %v2807 = vunpack.c.l.b16 %v1534
    %v2808 = vunpack.c.h.b16 %v1534
    %v2809 = vunpack.c.l.b16 %v1535
    %v2810 = vunpack.c.h.b16 %v1535
    %v2811 = vunpack.c.l.b16 %v1536
    %v2812 = vunpack.c.h.b16 %v1536
    %v2813 = vunpack.c.l.b16 %v1537
    %v2814 = vunpack.c.h.b16 %v1537
    %v2815 = vunpack.c.l.b16 %v1538
    %v2816 = vunpack.c.h.b16 %v1538
    %v2817 = vunpack.c.l.b16 %v1539
    %v2818 = vunpack.c.h.b16 %v1539
    %v2819 = vunpack.c.l.b16 %v1540
    %v2820 = vunpack.c.h.b16 %v1540
    %v2821 = vunpack.c.l.b16 %v1541
    %v2822 = vunpack.c.h.b16 %v1541
    %v2823 = vunpack.c.l.b16 %v1542
    %v2824 = vunpack.c.h.b16 %v1542
    %v2825 = vunpack.c.l.b16 %v1543
    %v2826 = vunpack.c.h.b16 %v1543
    %v2827 = vunpack.c.l.b16 %v1544
    %v2828 = vunpack.c.h.b16 %v1544
    %v2829 = vunpack.c.l.b16 %v1545
    %v2830 = vunpack.c.h.b16 %v1545
    %v2831 = vunpack.c.l.b16 %v1546
    %v2832 = vunpack.c.h.b16 %v1546
    %v2833 = vunpack.c.l.b16 %v1547
    %v2834 = vunpack.c.h.b16 %v1547
    %v2835 = vunpack.c.l.b16 %v1548
    %v2836 = vunpack.c.h.b16 %v1548
    %v2837 = vunpack.c.l.b16 %v1549
    %v2838 = vunpack.c.h.b16 %v1549
    %v2839 = vunpack.c.l.b16 %v1550
    %v2840 = vunpack.c.h.b16 %v1550
    %v2841 = vunpack.c.l.b16 %v1551
    %v2842 = vunpack.c.h.b16 %v1551
    %v2843 = vunpack.c.l.b16 %v1552
    %v2844 = vunpack.c.h.b16 %v1552
    %v2845 = vunpack.c.l.b16 %v1553
    %v2846 = vunpack.c.h.b16 %v1553
    %v2847 = vunpack.c.l.b16 %v1554
    %v2848 = vunpack.c.h.b16 %v1554
    %v2849 = vunpack.c.l.b16 %v1555
    %v2850 = vunpack.c.h.b16 %v1555
    %v2851 = vunpack.c.l.b16 %v1556
    %v2852 = vunpack.c.h.b16 %v1556
    %v2853 = vunpack.c.l.b16 %v1557
    %v2854 = vunpack.c.h.b16 %v1557
    %v2855 = vunpack.c.l.b16 %v1558
    %v2856 = vunpack.c.h.b16 %v1558
    %v2857 = vunpack.c.l.b16 %v1559
    %v2858 = vunpack.c.h.b16 %v1559
    %v2859 = vunpack.c.l.b16 %v1560
    %v2860 = vunpack.c.h.b16 %v1560
    %v2861 = vunpack.c.l.b16 %v1561
    %v2862 = vunpack.c.h.b16 %v1561
    %v2863 = vunpack.c.l.b16 %v1562
    %v2864 = vunpack.c.h.b16 %v1562
    %v2865 = vunpack.c.l.b16 %v1563
    %v2866 = vunpack.c.h.b16 %v1563
    %v2867 = vunpack.c.l.b16 %v1564
    %v2868 = vunpack.c.h.b16 %v1564
    %v2869 = vunpack.c.l.b16 %v1565
    %v2870 = vunpack.c.h.b16 %v1565
    %v2871 = vunpack.c.l.b16 %v1566
    %v2872 = vunpack.c.h.b16 %v1566
    %v2873 = vunpack.c.l.b16 %v1567
    %v2874 = vunpack.c.h.b16 %v1567
    %v2875 = vunpack.c.l.b16 %v1568
    %v2876 = vunpack.c.h.b16 %v1568
    %v2877 = vunpack.c.l.b16 %v1569
    %v2878 = vunpack.c.h.b16 %v1569
    %v2879 = vunpack.c.l.b16 %v1570
    %v2880 = vunpack.c.h.b16 %v1570
    %v2881 = vunpack.c.l.b16 %v1571
    %v2882 = vunpack.c.h.b16 %v1571
    %v2883 = vunpack.c.l.b16 %v1572
    %v2884 = vunpack.c.h.b16 %v1572
    %v2885 = vunpack.c.l.b16 %v1573
    %v2886 = vunpack.c.h.b16 %v1573
    %v2887 = vunpack.c.l.b16 %v1574
    %v2888 = vunpack.c.h.b16 %v1574
    %v2889 = vunpack.c.l.b16 %v1575
    %v2890 = vunpack.c.h.b16 %v1575
    %v2891 = vunpack.c.l.b16 %v1576
    %v2892 = vunpack.c.h.b16 %v1576
    %v2893 = vunpack.c.l.b16 %v1577
    %v2894 = vunpack.c.h.b16 %v1577
    %v2895 = vunpack.c.l.b16 %v1578
    %v2896 = vunpack.c.h.b16 %v1578
    %v2897 = vunpack.c.l.b16 %v1579
    %v2898 = vunpack.c.h.b16 %v1579
    %v2899 = vunpack.c.l.b16 %v1580
    %v2900 = vunpack.c.h.b16 %v1580
    %v2901 = vpack.c.b16 %v2649, %v2645
    %v2902 = vpack.c.b16 %v2650, %v2646
    %v2903 = vpack.c.b16 %v2651, %v2647
    %v2904 = vpack.c.b16 %v2652, %v2648
    %v2905 = vpack.c.b16 %v2657, %v2653
    %v2906 = vpack.c.b16 %v2658, %v2654
    %v2907 = vpack.c.b16 %v2659, %v2655
    %v2908 = vpack.c.b16 %v2660, %v2656
    %v2909 = vpack.c.b16 %v2665, %v2661
    %v2910 = vpack.c.b16 %v2666, %v2662
    %v2911 = vpack.c.b16 %v2667, %v2663
    %v2912 = vpack.c.b16 %v2668, %v2664
    %v2913 = vpack.c.b16 %v2673, %v2669
    %v2914 = vpack.c.b16 %v2674, %v2670
    %v2915 = vpack.c.b16 %v2675, %v2671
    %v2916 = vpack.c.b16 %v2676, %v2672
    %v2917 = vpack.c.b16 %v2681, %v2677
    %v2918 = vpack.c.b16 %v2682, %v2678
    %v2919 = vpack.c.b16 %v2683, %v2679
    %v2920 = vpack.c.b16 %v2684, %v2680
    %v2921 = vpack.c.b16 %v2689, %v2685
    %v2922 = vpack.c.b16 %v2690, %v2686
    %v2923 = vpack.c.b16 %v2691, %v2687
    %v2924 = vpack.c.b16 %v2692, %v2688
    %v2925 = vpack.c.b16 %v2697, %v2693
    %v2926 = vpack.c.b16 %v2698, %v2694
    %v2927 = vpack.c.b16 %v2699, %v2695
    %v2928 = vpack.c.b16 %v2700, %v2696
    %v2929 = vpack.c.b16 %v2705, %v2701
    %v2930 = vpack.c.b16 %v2706, %v2702
    %v2931 = vpack.c.b16 %v2707, %v2703
    %v2932 = vpack.c.b16 %v2708, %v2704
    %v2933 = vpack.c.b16 %v2713, %v2709
    %v2934 = vpack.c.b16 %v2714, %v2710
    %v2935 = vpack.c.b16 %v2715, %v2711
    %v2936 = vpack.c.b16 %v2716, %v2712
    %v2937 = vpack.c.b16 %v2721, %v2717
    %v2938 = vpack.c.b16 %v2722, %v2718
    %v2939 = vpack.c.b16 %v2723, %v2719
    %v2940 = vpack.c.b16 %v2724, %v2720
    %v2941 = vpack.c.b16 %v2729, %v2725
    %v2942 = vpack.c.b16 %v2730, %v2726
    %v2943 = vpack.c.b16 %v2731, %v2727
    %v2944 = vpack.c.b16 %v2732, %v2728
    %v2945 = vpack.c.b16 %v2737, %v2733
    %v2946 = vpack.c.b16 %v2738, %v2734
    %v2947 = vpack.c.b16 %v2739, %v2735
    %v2948 = vpack.c.b16 %v2740, %v2736
    %v2949 = vpack.c.b16 %v2745, %v2741
    %v2950 = vpack.c.b16 %v2746, %v2742
    %v2951 = vpack.c.b16 %v2747, %v2743
    %v2952 = vpack.c.b16 %v2748, %v2744
    %v2953 = vpack.c.b16 %v2753, %v2749
    %v2954 = vpack.c.b16 %v2754, %v2750
    %v2955 = vpack.c.b16 %v2755, %v2751
    %v2956 = vpack.c.b16 %v2756, %v2752
    %v2957 = vpack.c.b16 %v2761, %v2757
    %v2958 = vpack.c.b16 %v2762, %v2758
    %v2959 = vpack.c.b16 %v2763, %v2759
    %v2960 = vpack.c.b16 %v2764, %v2760
    %v2961 = vpack.c.b16 %v2769, %v2765
    %v2962 = vpack.c.b16 %v2770, %v2766
    %v2963 = vpack.c.b16 %v2771, %v2767
    %v2964 = vpack.c.b16 %v2772, %v2768
    %v2965 = vpack.c.b16 %v2777, %v2773
    %v2966 = vpack.c.b16 %v2778, %v2774
    %v2967 = vpack.c.b16 %v2779, %v2775
    %v2968 = vpack.c.b16 %v2780, %v2776
    %v2969 = vpack.c.b16 %v2785, %v2781
    %v2970 = vpack.c.b16 %v2786, %v2782
    %v2971 = vpack.c.b16 %v2787, %v2783
    %v2972 = vpack.c.b16 %v2788, %v2784
    %v2973 = vpack.c.b16 %v2793, %v2789
    %v2974 = vpack.c.b16 %v2794, %v2790
    %v2975 = vpack.c.b16 %v2795, %v2791
    %v2976 = vpack.c.b16 %v2796, %v2792
    %v2977 = vpack.c.b16 %v2801, %v2797
    %v2978 = vpack.c.b16 %v2802, %v2798
    %v2979 = vpack.c.b16 %v2803, %v2799
    %v2980 = vpack.c.b16 %v2804, %v2800
    %v2981 = vpack.c.b16 %v2809, %v2805
    %v2982 = vpack.c.b16 %v2810, %v2806
    %v2983 = vpack.c.b16 %v2811, %v2807
    %v2984 = vpack.c.b16 %v2812, %v2808
    %v2985 = vpack.c.b16 %v2817, %v2813
    %v2986 = vpack.c.b16 %v2818, %v2814
    %v2987 = vpack.c.b16 %v2819, %v2815
    %v2988 = vpack.c.b16 %v2820, %v2816
    %v2989 = vpack.c.b16 %v2825, %v2821
    %v2990 = vpack.c.b16 %v2826, %v2822
    %v2991 = vpack.c.b16 %v2827, %v2823
    %v2992 = vpack.c.b16 %v2828, %v2824
    %v2993 = vpack.c.b16 %v2833, %v2829
    %v2994 = vpack.c.b16 %v2834, %v2830
    %v2995 = vpack.c.b16 %v2835, %v2831
    %v2996 = vpack.c.b16 %v2836, %v2832
    %v2997 = vpack.c.b16 %v2841, %v2837
    %v2998 = vpack.c.b16 %v2842, %v2838
    %v2999 = vpack.c.b16 %v2843, %v2839
    %v3000 = vpack.c.b16 %v2844, %v2840
    %v3001 = vpack.c.b16 %v2849, %v2845
    %v3002 = vpack.c.b16 %v2850, %v2846
    %v3003 = vpack.c.b16 %v2851, %v2847
    %v3004 = vpack.c.b16 %v2852, %v2848
    %v3005 = vpack.c.b16 %v2857, %v2853
    %v3006 = vpack.c.b16 %v2858, %v2854
    %v3007 = vpack.c.b16 %v2859, %v2855
    %v3008 = vpack.c.b16 %v2860, %v2856
    %v3009 = vpack.c.b16 %v2865, %v2861
    %v3010 = vpack.c.b16 %v2866, %v2862
    %v3011 = vpack.c.b16 %v2867, %v2863
    %v3012 = vpack.c.b16 %v2868, %v2864
    %v3013 = vpack.c.b16 %v2873, %v2869
    %v3014 = vpack.c.b16 %v2874, %v2870
    %v3015 = vpack.c.b16 %v2875, %v2871
    %v3016 = vpack.c.b16 %v2876, %v2872
    %v3017 = vpack.c.b16 %v2881, %v2877
    %v3018 = vpack.c.b16 %v2882, %v2878
    %v3019 = vpack.c.b16 %v2883, %v2879
    %v3020 = vpack.c.b16 %v2884, %v2880
    %v3021 = vpack.c.b16 %v2889, %v2885
    %v3022 = vpack.c.b16 %v2890, %v2886
    %v3023 = vpack.c.b16 %v2891, %v2887
    %v3024 = vpack.c.b16 %v2892, %v2888
    %v3025 = vpack.c.b16 %v2897, %v2893
    %v3026 = vpack.c.b16 %v2898, %v2894
    %v3027 = vpack.c.b16 %v2899, %v2895
    %v3028 = vpack.c.b16 %v2900, %v2896
    %3157 = vmatprep.subr.bf16.mxu0 %v2902
    %3158 = vmatpush1.bf16.msra.mxu0 %v2901
    %3159 = vmatprep.subr.bf16.mxu0 %v2906
    %3160 = vmatpush1.bf16.msra.mxu0 %v2905
    %3161 = vmatprep.subr.bf16.mxu0 %v2910
    %3162 = vmatpush1.bf16.msra.mxu0 %v2909
    %3163 = vmatprep.subr.bf16.mxu0 %v2914
    %3164 = vmatpush1.bf16.msra.mxu0 %v2913
    %3165 = vmatprep.subr.bf16.mxu0 %v2918
    %3166 = vmatpush1.bf16.msra.mxu0 %v2917
    %3167 = vmatprep.subr.bf16.mxu0 %v2922
    %3168 = vmatpush1.bf16.msra.mxu0 %v2921
    %3169 = vmatprep.subr.bf16.mxu0 %v2926
    %3170 = vmatpush1.bf16.msra.mxu0 %v2925
    %3171 = vmatprep.subr.bf16.mxu0 %v2930
    %3172 = vmatpush1.bf16.msra.mxu0 %v2929
    %3173 = vmatprep.subr.bf16.mxu0 %v2934
    %3174 = vmatpush1.bf16.msra.mxu0 %v2933
    %3175 = vmatprep.subr.bf16.mxu0 %v2938
    %3176 = vmatpush1.bf16.msra.mxu0 %v2937
    %3177 = vmatprep.subr.bf16.mxu0 %v2942
    %3178 = vmatpush1.bf16.msra.mxu0 %v2941
    %3179 = vmatprep.subr.bf16.mxu0 %v2946
    %3180 = vmatpush1.bf16.msra.mxu0 %v2945
    %3181 = vmatprep.subr.bf16.mxu0 %v2950
    %3182 = vmatpush1.bf16.msra.mxu0 %v2949
    %3183 = vmatprep.subr.bf16.mxu0 %v2954
    %3184 = vmatpush1.bf16.msra.mxu0 %v2953
    %3185 = vmatprep.subr.bf16.mxu0 %v2958
    %3186 = vmatpush1.bf16.msra.mxu0 %v2957
    %3187 = vmatprep.subr.bf16.mxu0 %v2962
    %3188 = vmatpush1.bf16.msra.mxu0 %v2961
    %3189 = vmatprep.mubr.bf16.mxu0 %v1450
    %3190 = vmatmul.mubr.bf16.gmra.mrb[0].mxu0 %v1449
    %v3191 = vpop.f32.mrb[0].mxu0
    %v3192 = vadd.f32 %v2429, %v3191
    %v3193 = vpop.f32.mrb[0].mxu0
    %v3194 = vadd.f32 %v2431, %v3193
    %v3195 = vpop.f32.mrb[0].mxu0
    %v3196 = vpop.f32.mrb[0].mxu0
    %3197 = vdwg.mxu0
    %3198 = vmatprep.subr.bf16.mxu0 %v2966
    %3199 = vmatpush1.bf16.msra.mxu0 %v2965
    %3200 = vmatprep.subr.bf16.mxu0 %v2970
    %3201 = vmatpush1.bf16.msra.mxu0 %v2969
    %3202 = vmatprep.subr.bf16.mxu0 %v2974
    %3203 = vmatpush1.bf16.msra.mxu0 %v2973
    %3204 = vmatprep.subr.bf16.mxu0 %v2978
    %3205 = vmatpush1.bf16.msra.mxu0 %v2977
    %3206 = vmatprep.subr.bf16.mxu0 %v2982
    %3207 = vmatpush1.bf16.msra.mxu0 %v2981
    %3208 = vmatprep.subr.bf16.mxu0 %v2986
    %3209 = vmatpush1.bf16.msra.mxu0 %v2985
    %3210 = vmatprep.subr.bf16.mxu0 %v2990
    %3211 = vmatpush1.bf16.msra.mxu0 %v2989
    %3212 = vmatprep.subr.bf16.mxu0 %v2994
    %3213 = vmatpush1.bf16.msra.mxu0 %v2993
    %3214 = vmatprep.subr.bf16.mxu0 %v2998
    %3215 = vmatpush1.bf16.msra.mxu0 %v2997
    %3216 = vmatprep.subr.bf16.mxu0 %v3002
    %3217 = vmatpush1.bf16.msra.mxu0 %v3001
    %3218 = vmatprep.subr.bf16.mxu0 %v3006
    %3219 = vmatpush1.bf16.msra.mxu0 %v3005
    %3220 = vmatprep.subr.bf16.mxu0 %v3010
    %3221 = vmatpush1.bf16.msra.mxu0 %v3009
    %3222 = vmatprep.subr.bf16.mxu0 %v3014
    %3223 = vmatpush1.bf16.msra.mxu0 %v3013
    %3224 = vmatprep.subr.bf16.mxu0 %v3018
    %3225 = vmatpush1.bf16.msra.mxu0 %v3017
    %3226 = vmatprep.subr.bf16.mxu0 %v3022
    %3227 = vmatpush1.bf16.msra.mxu0 %v3021
    %3228 = vmatprep.subr.bf16.mxu0 %v3026
    %3229 = vmatpush1.bf16.msra.mxu0 %v3025
    %3230 = vmatprep.mubr.bf16.mxu0 %v1452
    %3231 = vmatmul.mubr.bf16.gmra.mrb[0].mxu0 %v1451
    %v3232 = vpop.f32.mrb[0].mxu0
    %v3233 = vadd.f32 %v3192, %v3232
    %v3234 = vpop.f32.mrb[0].mxu0
    %v3235 = vadd.f32 %v3194, %v3234
    %v3236 = vpop.f32.mrb[0].mxu0
    %v3237 = vpop.f32.mrb[0].mxu0
    %3238 = vdwg.mxu0
    %3239 = vmatprep.subr.bf16.mxu0 %v2904
    %3240 = vmatpush1.bf16.msra.mxu0 %v2903
    %3241 = vmatprep.subr.bf16.mxu0 %v2908
    %3242 = vmatpush1.bf16.msra.mxu0 %v2907
    %3243 = vmatprep.subr.bf16.mxu0 %v2912
    %3244 = vmatpush1.bf16.msra.mxu0 %v2911
    %3245 = vmatprep.subr.bf16.mxu0 %v2916
    %3246 = vmatpush1.bf16.msra.mxu0 %v2915
    %3247 = vmatprep.subr.bf16.mxu0 %v2920
    %3248 = vmatpush1.bf16.msra.mxu0 %v2919
    %3249 = vmatprep.subr.bf16.mxu0 %v2924
    %3250 = vmatpush1.bf16.msra.mxu0 %v2923
    %3251 = vmatprep.subr.bf16.mxu0 %v2928
    %3252 = vmatpush1.bf16.msra.mxu0 %v2927
    %3253 = vmatprep.subr.bf16.mxu0 %v2932
    %3254 = vmatpush1.bf16.msra.mxu0 %v2931
    %3255 = vmatprep.subr.bf16.mxu0 %v2936
    %3256 = vmatpush1.bf16.msra.mxu0 %v2935
    %3257 = vmatprep.subr.bf16.mxu0 %v2940
    %3258 = vmatpush1.bf16.msra.mxu0 %v2939
    %3259 = vmatprep.subr.bf16.mxu0 %v2944
    %3260 = vmatpush1.bf16.msra.mxu0 %v2943
    %3261 = vmatprep.subr.bf16.mxu0 %v2948
    %3262 = vmatpush1.bf16.msra.mxu0 %v2947
    %3263 = vmatprep.subr.bf16.mxu0 %v2952
    %3264 = vmatpush1.bf16.msra.mxu0 %v2951
    %3265 = vmatprep.subr.bf16.mxu0 %v2956
    %3266 = vmatpush1.bf16.msra.mxu0 %v2955
    %3267 = vmatprep.subr.bf16.mxu0 %v2960
    %3268 = vmatpush1.bf16.msra.mxu0 %v2959
    %3269 = vmatprep.subr.bf16.mxu0 %v2964
    %3270 = vmatpush1.bf16.msra.mxu0 %v2963
    %3271 = vmatprep.mubr.bf16.mxu0 %v1450
    %3272 = vmatmul.mubr.bf16.gmra.mrb[0].mxu0 %v1449
    %v3273 = vpop.f32.mrb[0].mxu0
    %v3274 = vadd.f32 %v2511, %v3273
    %v3275 = vpop.f32.mrb[0].mxu0
    %v3276 = vadd.f32 %v2513, %v3275
    %v3277 = vpop.f32.mrb[0].mxu0
    %v3278 = vpop.f32.mrb[0].mxu0
    %3279 = vdwg.mxu0
    %3280 = vmatprep.subr.bf16.mxu0 %v2968
    %3281 = vmatpush1.bf16.msra.mxu0 %v2967
    %3282 = vmatprep.subr.bf16.mxu0 %v2972
    %3283 = vmatpush1.bf16.msra.mxu0 %v2971
    %3284 = vmatprep.subr.bf16.mxu0 %v2976
    %3285 = vmatpush1.bf16.msra.mxu0 %v2975
    %3286 = vmatprep.subr.bf16.mxu0 %v2980
    %3287 = vmatpush1.bf16.msra.mxu0 %v2979
    %3288 = vmatprep.subr.bf16.mxu0 %v2984
    %3289 = vmatpush1.bf16.msra.mxu0 %v2983
    %3290 = vmatprep.subr.bf16.mxu0 %v2988
    %3291 = vmatpush1.bf16.msra.mxu0 %v2987
    %3292 = vmatprep.subr.bf16.mxu0 %v2992
    %3293 = vmatpush1.bf16.msra.mxu0 %v2991
    %3294 = vmatprep.subr.bf16.mxu0 %v2996
    %3295 = vmatpush1.bf16.msra.mxu0 %v2995
    %3296 = vmatprep.subr.bf16.mxu0 %v3000
    %3297 = vmatpush1.bf16.msra.mxu0 %v2999
    %3298 = vmatprep.subr.bf16.mxu0 %v3004
    %3299 = vmatpush1.bf16.msra.mxu0 %v3003
    %3300 = vmatprep.subr.bf16.mxu0 %v3008
    %3301 = vmatpush1.bf16.msra.mxu0 %v3007
    %3302 = vmatprep.subr.bf16.mxu0 %v3012
    %3303 = vmatpush1.bf16.msra.mxu0 %v3011
    %3304 = vmatprep.subr.bf16.mxu0 %v3016
    %3305 = vmatpush1.bf16.msra.mxu0 %v3015
    %3306 = vmatprep.subr.bf16.mxu0 %v3020
    %3307 = vmatpush1.bf16.msra.mxu0 %v3019
    %3308 = vmatprep.subr.bf16.mxu0 %v3024
    %3309 = vmatpush1.bf16.msra.mxu0 %v3023
    %3310 = vmatprep.subr.bf16.mxu0 %v3028
    %3311 = vmatpush1.bf16.msra.mxu0 %v3027
    %3312 = vmatprep.mubr.bf16.mxu0 %v1452
    %3313 = vmatmul.mubr.bf16.gmra.mrb[0].mxu0 %v1451
    %v3314 = vpop.f32.mrb[0].mxu0
    %v3315 = vadd.f32 %v3274, %v3314
    %v3316 = vpop.f32.mrb[0].mxu0
    %v3317 = vadd.f32 %v3276, %v3316
    %v3318 = vpop.f32.mrb[0].mxu0
    %v3319 = vpop.f32.mrb[0].mxu0
    %3320 = vdwg.mxu0
    %v3321 = vld [vmem:[%s10] sm:$0xf]
    %v3323 = vlaneseq
    %v3324 = vshrl.u32 %v3323, 7
    %v3325 = vsub.s32 0, %v3324
    %v3326 = vrot.slane %v3321, %v3325
    %v3327 = vlaneseq
    %v3328 = vshrl.u32 %v3327, 7
    %v3329 = vsub.s32 1, %v3328
    %v3330 = vrot.slane %v3321, %v3329
    %v3331 = vlaneseq
    %v3332 = vshrl.u32 %v3331, 7
    %v3333 = vsub.s32 2, %v3332
    %v3334 = vrot.slane %v3321, %v3333
    %v3335 = vlaneseq
    %v3336 = vshrl.u32 %v3335, 7
    %v3337 = vsub.s32 3, %v3336
    %v3338 = vrot.slane %v3321, %v3337
    %v3343 = vadd.f32 %v3233, %v3326
    %v3344 = vadd.f32 %v3235, %v3330
    %v3345 = vadd.f32 %v3315, %v3334
    %v3346 = vadd.f32 %v3317, %v3338
    %v3347 = vsub.f32 0.0, %v3343
    %v3348 = vsub.f32 0.0, %v3344
    %v3349 = vsub.f32 0.0, %v3345
    %v3350 = vsub.f32 0.0, %v3346
    %v3351 = vmul.f32 %v3347, 1.442695
    %v3352 = vpow.pop %v3351
    %v3353 = vmul.f32 %v3348, 1.442695
    %v3354 = vpow.pop %v3353
    %v3355 = vmul.f32 %v3349, 1.442695
    %v3356 = vpow.pop %v3355
    %v3357 = vmul.f32 %v3350, 1.442695
    %v3358 = vpow.pop %v3357
    %v3359 = vadd.f32 %v3352, 1.0
    %v3360 = vadd.f32 %v3354, 1.0
    %v3361 = vadd.f32 %v3356, 1.0
    %v3362 = vadd.f32 %v3358, 1.0
    %v3363 = vrcp.pop %v3359
    %v3364 = vrcp.pop %v3360
    %v3365 = vrcp.pop %v3361
    %v3366 = vrcp.pop %v3362
    %v3367 = vmul.f32 %v3343, %v3363
    %v3368 = vmul.f32 %v3344, %v3364
    %v3369 = vmul.f32 %v3345, %v3365
    %v3370 = vmul.f32 %v3346, %v3366
    %v3371 = vld [vmem:[%s11] sm:$0xf]
    %v3373 = vlaneseq
    %v3374 = vshrl.u32 %v3373, 7
    %v3375 = vsub.s32 0, %v3374
    %v3376 = vrot.slane %v3371, %v3375
    %v3377 = vlaneseq
    %v3378 = vshrl.u32 %v3377, 7
    %v3379 = vsub.s32 1, %v3378
    %v3380 = vrot.slane %v3371, %v3379
    %v3381 = vlaneseq
    %v3382 = vshrl.u32 %v3381, 7
    %v3383 = vsub.s32 2, %v3382
    %v3384 = vrot.slane %v3371, %v3383
    %v3385 = vlaneseq
    %v3386 = vshrl.u32 %v3385, 7
    %v3387 = vsub.s32 3, %v3386
    %v3388 = vrot.slane %v3371, %v3387
    %v3393 = vmul.f32 %v3367, %v3376
    %v3394 = vmul.f32 %v3368, %v3380
    %v3395 = vmul.f32 %v3369, %v3384
    %v3396 = vmul.f32 %v3370, %v3388
    %v3397 = vadd.f32 %v3393, %v3394
    %v3398 = vadd.f32 %v3397, %v3395
    %v3399 = vadd.f32 %v3398, %v3396
    %3400 = vadd.xlane.f32.xlu0 %v3399
    %v3401 = vpop.xlane.xlu0 %3400
    %v3402 = vld [vmem:[#allocation2] sm:$0x1]
    %v3404 = vlaneseq
    %v3405 = vshrl.u32 %v3404, 7
    %v3406 = vsub.s32 0, %v3405
    %v3407 = vrot.slane %v3402, %v3406
    %v3409 = vadd.f32 %v3401, %v3407
    %vm3410 = vcmask 7168
    %3411 = vst.msk [vmem:[%s13] sm:$0xff] %vm3410, %v3409
    // Predicated region
    $region78: #{tpu_custom_call.1} parent=1 // pred_check
      _
    $region79: #{tpu_custom_call.1} parent=1 // pred_check_branch
      %3413 = sbr.rel (0) target = $region81
    $region80: #{tpu_custom_call.1} parent=1 // pred_region
      _
    $region81: #{tpu_custom_call.1} parent=1 // pred_fallthru
      _
    // Predicated region
    $region82: #{tpu_custom_call.1} parent=1 // pred_check
      _
    $region83: #{tpu_custom_call.1} parent=1 // pred_check_branch
      %3415 = sbr.rel (0) target = $region85
    $region84: #{tpu_custom_call.1} parent=1 // pred_region
      _
    $region85: #{tpu_custom_call.1} parent=1 // pred_fallthru
      _
    %3416 = vsyncpa [#allocation4], 1
    %3417 = vsyncpa [#allocation6], 1
    %3418 = vsyncpa [#allocation9], 1
    %3419 = vsyncpa [#allocation12], 1

</llo_original>
